<compile_context>
chip_gen: v7x
topology: tpu7x:2x2x1
jax: 0.10.0
libtpu: 0.0.40
codegen_flags: <defaults>
</compile_context>

<pallas_src>
import functools

import jax
import jax.numpy as jnp
from jax.experimental import pallas as pl
from jax.experimental.pallas import tpu as pltpu


# ----------------------------- in-kernel helpers ----------------------------

def _erf(x):
    # Abramowitz & Stegun 7.1.26 (max abs err ~1.5e-7 in f32).  Runs in
    # x.dtype (bf16 on v6e/v7x, f32 on v5e); the approx EUP reciprocal is
    # done in f32 and cast back.
    p = 0.3275911
    a1, a2, a3, a4, a5 = (0.254829592, -0.284496736, 1.421413741,
                          -1.453152027, 1.061405429)
    z = jnp.abs(x)
    t = pl.reciprocal((1.0 + p * z).astype(jnp.float32),
                      approx=True).astype(x.dtype)
    poly = t * (a1 + t * (a2 + t * (a3 + t * (a4 + t * a5))))
    r = 1.0 - poly * jnp.exp(-z * z)
    return jnp.where(x >= 0, r, -r)


def _gelu_exact(x):
    # PyTorch nn.GELU() default = exact erf formulation.
    return 0.5 * x * (1.0 + _erf(x * 0.7071067811865476))


# ------------------------------- the kernel --------------------------------

def _attn_mlp_kernel(x_ref, w_in_ref, b_in_ref, w_out_ref, b_out_ref,
                     w1c_ref, b1_ref, w2c_ref, b2_ref, mhc_ref, mch_ref,
                     o_ref, q_scr, k_scr, v_scr, *, num_heads, elem_dtype):
    L, C, Tn = x_ref.shape                       # (seq=B, embed, spatial tile)
    n_mlp_chunks, mlp_chunk, _ = w1c_ref.shape
    C4 = n_mlp_chunks * mlp_chunk
    hd = C // num_heads
    scale = 1.0 / float(hd) ** 0.5
    bf = jnp.bfloat16

    w_in = w_in_ref[...]                         # (3C, C)  bf16  in_proj_weight
    w_out = w_out_ref[...]                       # (C, C)   bf16  out_proj.weight
    mhc = mhc_ref[...]                           # (nh, C)  bf16  head-sum mask
    mch = mch_ref[...]                           # (C, nh)  bf16  head-broadcast

    # Bias broadcasts hoisted out of the per-`a` loops (JAX does not CSE
    # broadcast_in_dim, so inline adds would re-materialize them L times).
    b_in_b = jnp.broadcast_to(b_in_ref[...], (3 * C, Tn))     # f32
    b_out_b = jnp.broadcast_to(b_out_ref[...], (C, Tn))       # f32
    b1_b = jnp.broadcast_to(b1_ref[...], (C4, Tn))            # f32
    b2_b = jnp.broadcast_to(b2_ref[...], (C, Tn))             # f32

    # ---- QKV projection, staged into (mostly bf16) VMEM scratch ----
    # L (= volume batch B) is tiny & static -> Python unroll.
    # TODO(synk): for large L switch to lax.fori_loop + an online softmax.
    for a in range(L):
        xa = x_ref[a].astype(bf)                               # (C, Tn)
        qkv = jnp.dot(w_in, xa, preferred_element_type=jnp.float32) + b_in_b
        q_scr[a] = (qkv[0:C] * scale).astype(q_scr.dtype)      # PyTorch q-scale
        k_scr[a] = qkv[C:2 * C].astype(k_scr.dtype)
        v_scr[a] = qkv[2 * C:3 * C].astype(v_scr.dtype)

    # ---- attention over the L axis, per (spatial lane, head) ----
    for a in range(L):
        qa = q_scr[a]
        # per-head scores via masked head-sum matmul: (nh, C) @ (C, Tn)
        s = []
        for b in range(L):
            qk = (qa * k_scr[b]).astype(bf)                    # (C, Tn)
            s.append(jnp.dot(mhc, qk, preferred_element_type=jnp.float32))
        m = s[0]
        for b in range(1, L):
            m = jnp.maximum(m, s[b])
        e = [jnp.exp(sb - m) for sb in s]                      # (nh, Tn) f32
        denom = e[0]
        for b in range(1, L):
            denom = denom + e[b]
        inv = pl.reciprocal(denom, approx=True)                # (nh, Tn)

        oa = None
        for b in range(L):
            p_full = jnp.dot(mch, (e[b] * inv).astype(bf),
                             preferred_element_type=jnp.float32)   # (C, Tn)
            term = p_full * v_scr[b]
            oa = term if oa is None else oa + term

        # ---- out projection + residual ----
        attn_a = jnp.dot(w_out, oa.astype(bf),
                         preferred_element_type=jnp.float32) + b_out_b
        r1 = x_ref[a] + attn_a                                 # (C, Tn) f32
        r1_mx = r1.astype(bf)

        # ---- MLP, chunked along the 4C hidden axis so each slice's GELU
        # temporaries stay in-register instead of round-tripping VMEM ----
        acc = r1 + b2_b                                        # (C, Tn) f32
        for j in range(n_mlp_chunks):
            h = jnp.dot(w1c_ref[j], r1_mx,
                        preferred_element_type=jnp.float32)    # (chunk, Tn)
            h = h + b1_b[j * mlp_chunk:(j + 1) * mlp_chunk]
            h = _gelu_exact(h.astype(elem_dtype)).astype(bf)
            acc = acc + jnp.dot(w2c_ref[j], h,
                                preferred_element_type=jnp.float32)
        o_ref[a] = acc.astype(o_ref.dtype)


# ------------------------------- wrapper ------------------------------------

def _elementwise_dtype():
    # bf16 VPU/EUP exists on v6e/v7x; v5e (and older) keep f32 elementwise.
    try:
        kind = jax.devices()[0].device_kind.lower()
    except Exception:
        return jnp.float32
    if ("v6" in kind) or ("v7" in kind) or ("7x" in kind):
        return jnp.bfloat16
    return jnp.float32


def _pick_tile(n, tile_n):
    # Lane-dense tiles (multiple of 128); pad N up to a tile multiple.  Keep
    # >= 4 grid steps where possible so each v7x TensorCore gets >= 2
    # pipelined steps (on 1-TC chips this still leaves steps for DMA overlap).
    tn = max(128, (min(tile_n, max(n, 128)) // 128) * 128)
    while tn > 128 and pl.cdiv(n, tn) < 4:
        tn -= 128
    n_pad = pl.cdiv(n, tn) * tn
    return tn, n_pad


def _pick_mlp_chunk(c4, target=32):
    for ch in range(min(target, c4), 7, -1):
        if c4 % ch == 0 and ch % 8 == 0:
            return ch
    return c4                                   # fallback: no chunking


def _itemsize(dt):
    return 2 if dt == jnp.bfloat16 else 4


def transformer_attention_3d(x, params, *, num_heads=8, tile_n=512):
    B, C, D, H, W = x.shape
    N = D * H * W
    assert C % num_heads == 0
    C4 = 4 * C

    elem_dtype = _elementwise_dtype()
    bf = jnp.bfloat16

    tn, n_pad = _pick_tile(N, tile_n)
    xs = x.reshape(B, C, N)                     # native layout: spatial on lanes
    if n_pad != N:
        # Padded spatial columns are fully independent and sliced away below.
        xs = jnp.pad(xs, ((0, 0), (0, 0), (0, n_pad - N)))

    w_in, b_in, w_out, b_out, w1, b1, w2, b2 = params

    mlp_chunk = _pick_mlp_chunk(C4)
    n_ch = C4 // mlp_chunk
    # Pre-chunk the MLP weights in the wrapper so the kernel indexes chunks
    # along a leading axis (no lane-slicing / transposes in the kernel).
    w1c = w1.reshape(n_ch, mlp_chunk, C).astype(bf)                      # (nc, chunk, C)
    w2c = jnp.transpose(w2.reshape(C, n_ch, mlp_chunk), (1, 0, 2)).astype(bf)  # (nc, C, chunk)
    w_in_h = w_in.astype(bf)
    w_out_h = w_out.astype(bf)

    hd = C // num_heads
    head_of_c = jnp.arange(C, dtype=jnp.int32) // hd
    mhc = (jnp.arange(num_heads, dtype=jnp.int32)[:, None]
           == head_of_c[None, :]).astype(bf)                   # (nh, C) head-sum
    mch = jnp.transpose(mhc)                                   # (C, nh) head-bcast

    def _full(a):
        nd = a.ndim
        return pl.BlockSpec(a.shape, lambda i: (0,) * nd)

    # Scratch dtypes: k bf16 everywhere; q/v follow the elementwise dtype
    # (f32 on v5e where VPU math stays f32, bf16 on v6e/v7x).
    q_dtype = elem_dtype
    k_dtype = jnp.bfloat16
    v_dtype = elem_dtype

    # VMEM budget from the actual footprint (double-buffered I/O + weights +
    # scratch + hoisted bias broadcasts), with generous headroom.
    tile_elems = B * C * tn
    footprint = (
        2 * 2 * tile_elems * 4                                         # x in + out, dbl-buffered f32
        + tile_elems * (_itemsize(q_dtype) + _itemsize(k_dtype) + _itemsize(v_dtype))
        + 2 * 2 * (3 * C * C + C * C + 2 * C4 * C)                     # bf16 weights, dbl-buffered
        + 2 * 4 * (3 * C + C + C4 + C)                                 # f32 biases
        + 2 * 2 * 2 * num_heads * C                                    # head masks
        + (3 * C + C + C4 + C) * tn * 4                                # hoisted broadcasts
    )
    vmem_limit = int(min(max(2 * footprint, 8 * 1024 * 1024), 32 * 1024 * 1024))

    kernel = functools.partial(_attn_mlp_kernel, num_heads=num_heads,
                               elem_dtype=elem_dtype)
    out = pl.pallas_call(
        kernel,
        out_shape=jax.ShapeDtypeStruct((B, C, n_pad), x.dtype),
        grid_spec=pltpu.PrefetchScalarGridSpec(
            num_scalar_prefetch=0,
            grid=(n_pad // tn,),
            in_specs=[
                pl.BlockSpec((B, C, tn), lambda i: (0, 0, i)),
                _full(w_in_h), _full(b_in), _full(w_out_h), _full(b_out),
                _full(w1c), _full(b1), _full(w2c), _full(b2),
                _full(mhc), _full(mch),
            ],
            out_specs=pl.BlockSpec((B, C, tn), lambda i: (0, 0, i)),
            scratch_shapes=[
                pltpu.VMEM((B, C, tn), q_dtype),
                pltpu.VMEM((B, C, tn), k_dtype),
                pltpu.VMEM((B, C, tn), v_dtype),
            ],
        ),
        compiler_params=pltpu.CompilerParams(
            dimension_semantics=("parallel",),
            vmem_limit_bytes=vmem_limit),
    )(xs, w_in_h, b_in, w_out_h, b_out, w1c, b1, w2c, b2, mhc, mch)

    if n_pad != N:
        out = out[:, :, :N]
    return out.reshape(B, C, D, H, W)


# ----------------------- deterministic parameter init -----------------------

def init_params(key, C):
    # PyTorch-native orientations: y = W @ x + b (column biases).
    ks = jax.random.split(key, 8)
    s = 0.05
    w_in = jax.random.normal(ks[0], (3 * C, C), jnp.float32) * s    # in_proj_weight
    b_in = jax.random.normal(ks[1], (3 * C, 1), jnp.float32) * s    # in_proj_bias
    w_out = jax.random.normal(ks[2], (C, C), jnp.float32) * s       # out_proj.weight
    b_out = jax.random.normal(ks[3], (C, 1), jnp.float32) * s
    w1 = jax.random.normal(ks[4], (4 * C, C), jnp.float32) * s      # mlp[0].weight
    b1 = jax.random.normal(ks[5], (4 * C, 1), jnp.float32) * s
    w2 = jax.random.normal(ks[6], (C, 4 * C), jnp.float32) * s      # mlp[2].weight
    b2 = jax.random.normal(ks[7], (C, 1), jnp.float32) * s
    return (w_in, b_in, w_out, b_out, w1, b1, w2, b2)


# ------------------------------ pure-JAX reference ---------------------------

def reference(x, params, num_heads=8):
    B, C, D, H, W = x.shape
    N = D * H * W
    xs = jnp.transpose(x.reshape(B, C, N), (0, 2, 1))   # (L=B, N, C)
    w_in, b_in, w_out, b_out, w1, b1, w2, b2 = params
    hd = C // num_heads
    qkv = xs @ w_in.T + b_in[:, 0]
    q, k, v = qkv[..., :C], qkv[..., C:2 * C], qkv[..., 2 * C:]
    split = lambda t: t.reshape(B, N, num_heads, hd)
    q, k, v = split(q), split(k), split(v)
    scores = jnp.einsum('anhd,bnhd->nhab', q, k) / jnp.sqrt(jnp.float32(hd))
    p = jax.nn.softmax(scores, axis=-1)
    o = jnp.einsum('nhab,bnhd->anhd', p, v).reshape(B, N, C)
    o = o @ w_out.T + b_out[:, 0]
    r1 = xs + o
    h = jax.nn.gelu(r1 @ w1.T + b1[:, 0], approximate=False)
    h = h @ w2.T + b2[:, 0]
    out = r1 + h
    return jnp.transpose(out, (0, 2, 1)).reshape(B, C, D, H, W)


# ---------------------------------- main -------------------------------------

if __name__ == "__main__":
    key = jax.random.PRNGKey(0)
    kx, kp = jax.random.split(key)

    # N = D*H*W = 512 spatial positions -> tn=128, grid=(4,): lane-dense tiles
    # and >= 2 pipelined steps per TensorCore on 2-TC parts.
    B, C, D, H, W = 2, 32, 8, 8, 8        # C must be divisible by num_heads=8
    x = jax.random.normal(kx, (B, C, D, H, W), jnp.float32)
    params = init_params(kp, C)

    y = transformer_attention_3d(x, params, num_heads=8)
    y = jax.block_until_ready(y)

    y_ref = reference(x, params, num_heads=8)
    assert y.shape == (B, C, D, H, W)
    max_err = float(jnp.max(jnp.abs(y - y_ref)))
    assert jnp.allclose(y, y_ref, atol=2e-2, rtol=2e-2), f"max abs err {max_err}"

    print("KERNEL_OK")
</pallas_src>

<mosaic_0001>
module attributes {stable_mosaic.version = 11 : i64} {
  func.func @_attn_mlp_kernel(%arg0: i32, %arg1: memref<2x32x128xf32, #tpu.memory_space<vmem>>, %arg2: memref<96x32xbf16, #tpu.memory_space<vmem>>, %arg3: memref<96x1xf32, #tpu.memory_space<vmem>>, %arg4: memref<32x32xbf16, #tpu.memory_space<vmem>>, %arg5: memref<32x1xf32, #tpu.memory_space<vmem>>, %arg6: memref<4x32x32xbf16, #tpu.memory_space<vmem>>, %arg7: memref<128x1xf32, #tpu.memory_space<vmem>>, %arg8: memref<4x32x32xbf16, #tpu.memory_space<vmem>>, %arg9: memref<32x1xf32, #tpu.memory_space<vmem>>, %arg10: memref<8x32xbf16, #tpu.memory_space<vmem>>, %arg11: memref<32x8xbf16, #tpu.memory_space<vmem>>, %arg12: memref<2x32x128xf32, #tpu.memory_space<vmem>>, %arg13: memref<2x32x128xf32, #tpu.memory_space<vmem>>, %arg14: memref<2x32x128xbf16, #tpu.memory_space<vmem>>, %arg15: memref<2x32x128xf32, #tpu.memory_space<vmem>>) attributes {dimension_semantics = [#tpu.dimension_semantics<parallel>], iteration_bounds = array<i64: 4>, scalar_prefetch = 0 : i64, scratch_operands = 3 : i64, tpu.core_type = #tpu.core_type<tc>, window_params = [{transform_indices = @transform_0, window_bounds = array<i64: 2, 32, 128>}, {pipeline_mode = #tpu.pipeline_mode<synchronous>, transform_indices = @transform_1, window_bounds = array<i64: 96, 32>}, {pipeline_mode = #tpu.pipeline_mode<synchronous>, transform_indices = @transform_2, window_bounds = array<i64: 96, 1>}, {pipeline_mode = #tpu.pipeline_mode<synchronous>, transform_indices = @transform_3, window_bounds = array<i64: 32, 32>}, {pipeline_mode = #tpu.pipeline_mode<synchronous>, transform_indices = @transform_4, window_bounds = array<i64: 32, 1>}, {pipeline_mode = #tpu.pipeline_mode<synchronous>, transform_indices = @transform_5, window_bounds = array<i64: 4, 32, 32>}, {pipeline_mode = #tpu.pipeline_mode<synchronous>, transform_indices = @transform_6, window_bounds = array<i64: 128, 1>}, {pipeline_mode = #tpu.pipeline_mode<synchronous>, transform_indices = @transform_7, window_bounds = array<i64: 4, 32, 32>}, {pipeline_mode = #tpu.pipeline_mode<synchronous>, transform_indices = @transform_8, window_bounds = array<i64: 32, 1>}, {pipeline_mode = #tpu.pipeline_mode<synchronous>, transform_indices = @transform_9, window_bounds = array<i64: 8, 32>}, {pipeline_mode = #tpu.pipeline_mode<synchronous>, transform_indices = @transform_10, window_bounds = array<i64: 32, 8>}, {transform_indices = @transform_11, window_bounds = array<i64: 2, 32, 128>}]} {
    %c0 = arith.constant 0 : index
    %c0_0 = arith.constant 0 : index
    %0 = vector.load %arg2[%c0, %c0_0] : memref<96x32xbf16, #tpu.memory_space<vmem>>, vector<96x32xbf16>
    %c0_1 = arith.constant 0 : index
    %c0_2 = arith.constant 0 : index
    %1 = vector.load %arg4[%c0_1, %c0_2] : memref<32x32xbf16, #tpu.memory_space<vmem>>, vector<32x32xbf16>
    %c0_3 = arith.constant 0 : index
    %c0_4 = arith.constant 0 : index
    %2 = vector.load %arg10[%c0_3, %c0_4] : memref<8x32xbf16, #tpu.memory_space<vmem>>, vector<8x32xbf16>
    %c0_5 = arith.constant 0 : index
    %c0_6 = arith.constant 0 : index
    %3 = vector.load %arg11[%c0_5, %c0_6] : memref<32x8xbf16, #tpu.memory_space<vmem>>, vector<32x8xbf16>
    %c0_7 = arith.constant 0 : index
    %c0_8 = arith.constant 0 : index
    %4 = vector.load %arg3[%c0_7, %c0_8] : memref<96x1xf32, #tpu.memory_space<vmem>>, vector<96x1xf32>
    %5 = vector.shape_cast %4 : vector<96x1xf32> to vector<96x1xf32>
    %6 = vector.broadcast %5 : vector<96x1xf32> to vector<96x128xf32>
    %c0_9 = arith.constant 0 : index
    %c0_10 = arith.constant 0 : index
    %7 = vector.load %arg5[%c0_9, %c0_10] : memref<32x1xf32, #tpu.memory_space<vmem>>, vector<32x1xf32>
    %8 = vector.shape_cast %7 : vector<32x1xf32> to vector<32x1xf32>
    %9 = vector.broadcast %8 : vector<32x1xf32> to vector<32x128xf32>
    %c0_11 = arith.constant 0 : index
    %c0_12 = arith.constant 0 : index
    %10 = vector.load %arg7[%c0_11, %c0_12] : memref<128x1xf32, #tpu.memory_space<vmem>>, vector<128x1xf32>
    %11 = vector.shape_cast %10 : vector<128x1xf32> to vector<128x1xf32>
    %12 = vector.broadcast %11 : vector<128x1xf32> to vector<128x128xf32>
    %c0_13 = arith.constant 0 : index
    %c0_14 = arith.constant 0 : index
    %13 = vector.load %arg9[%c0_13, %c0_14] : memref<32x1xf32, #tpu.memory_space<vmem>>, vector<32x1xf32>
    %14 = vector.shape_cast %13 : vector<32x1xf32> to vector<32x1xf32>
    %15 = vector.broadcast %14 : vector<32x1xf32> to vector<32x128xf32>
    %c0_15 = arith.constant 0 : index
    %c0_16 = arith.constant 0 : index
    %c0_17 = arith.constant 0 : index
    %16 = vector.load %arg1[%c0_15, %c0_16, %c0_17] : memref<2x32x128xf32, #tpu.memory_space<vmem>>, vector<1x32x128xf32>
    %17 = vector.shape_cast %16 : vector<1x32x128xf32> to vector<32x128xf32>
    %18 = arith.truncf %17 : vector<32x128xf32> to vector<32x128xbf16>
    %cst = arith.constant dense<0.000000e+00> : vector<96x128xf32>
    %19 = tpu.matmul %0, %18, %cst {dimension_numbers = #tpu.dot_dimension_numbers<[1], [0], [0], [1], [0, 0, 1, 1], [], []>} : vector<96x32xbf16>, vector<32x128xbf16>, vector<96x128xf32> -> vector<96x128xf32>
    %20 = arith.addf %19, %6 : vector<96x128xf32>
    %21 = vector.extract_strided_slice %20 {offsets = [0, 0], sizes = [32, 128], strides = [1, 1]} : vector<96x128xf32> to vector<32x128xf32>
    %cst_18 = arith.constant 5.000000e-01 : f32
    %22 = vector.broadcast %cst_18 : f32 to vector<32x128xf32>
    %23 = arith.mulf %21, %22 : vector<32x128xf32>
    %c0_19 = arith.constant 0 : index
    %c0_20 = arith.constant 0 : index
    %c0_21 = arith.constant 0 : index
    %24 = vector.load %arg13[%c0_19, %c0_20, %c0_21] : memref<2x32x128xf32, #tpu.memory_space<vmem>>, vector<1x32x128xf32>
    %25 = vector.shape_cast %24 : vector<1x32x128xf32> to vector<32x128xf32>
    %26 = vector.shape_cast %23 : vector<32x128xf32> to vector<1x32x128xf32>
    tpu.vector_store %arg13[%c0_19, %c0_20, %c0_21], %26 {strides = array<i32>} : memref<2x32x128xf32, #tpu.memory_space<vmem>>, vector<1x32x128xf32>,
    %27 = vector.extract_strided_slice %20 {offsets = [32, 0], sizes = [32, 128], strides = [1, 1]} : vector<96x128xf32> to vector<32x128xf32>
    %28 = arith.truncf %27 : vector<32x128xf32> to vector<32x128xbf16>
    %c0_22 = arith.constant 0 : index
    %c0_23 = arith.constant 0 : index
    %c0_24 = arith.constant 0 : index
    %29 = vector.load %arg14[%c0_22, %c0_23, %c0_24] : memref<2x32x128xbf16, #tpu.memory_space<vmem>>, vector<1x32x128xbf16>
    %30 = vector.shape_cast %29 : vector<1x32x128xbf16> to vector<32x128xbf16>
    %31 = vector.shape_cast %28 : vector<32x128xbf16> to vector<1x32x128xbf16>
    tpu.vector_store %arg14[%c0_22, %c0_23, %c0_24], %31 {strides = array<i32>} : memref<2x32x128xbf16, #tpu.memory_space<vmem>>, vector<1x32x128xbf16>,
    %32 = vector.extract_strided_slice %20 {offsets = [64, 0], sizes = [32, 128], strides = [1, 1]} : vector<96x128xf32> to vector<32x128xf32>
    %c0_25 = arith.constant 0 : index
    %c0_26 = arith.constant 0 : index
    %c0_27 = arith.constant 0 : index
    %33 = vector.load %arg15[%c0_25, %c0_26, %c0_27] : memref<2x32x128xf32, #tpu.memory_space<vmem>>, vector<1x32x128xf32>
    %34 = vector.shape_cast %33 : vector<1x32x128xf32> to vector<32x128xf32>
    %35 = vector.shape_cast %32 : vector<32x128xf32> to vector<1x32x128xf32>
    tpu.vector_store %arg15[%c0_25, %c0_26, %c0_27], %35 {strides = array<i32>} : memref<2x32x128xf32, #tpu.memory_space<vmem>>, vector<1x32x128xf32>,
    %c1 = arith.constant 1 : index
    %c0_28 = arith.constant 0 : index
    %c0_29 = arith.constant 0 : index
    %36 = vector.load %arg1[%c1, %c0_28, %c0_29] : memref<2x32x128xf32, #tpu.memory_space<vmem>>, vector<1x32x128xf32>
    %37 = vector.shape_cast %36 : vector<1x32x128xf32> to vector<32x128xf32>
    %38 = arith.truncf %37 : vector<32x128xf32> to vector<32x128xbf16>
    %cst_30 = arith.constant dense<0.000000e+00> : vector<96x128xf32>
    %39 = tpu.matmul %0, %38, %cst_30 {dimension_numbers = #tpu.dot_dimension_numbers<[1], [0], [0], [1], [0, 0, 1, 1], [], []>} : vector<96x32xbf16>, vector<32x128xbf16>, vector<96x128xf32> -> vector<96x128xf32>
    %40 = arith.addf %39, %6 : vector<96x128xf32>
    %41 = vector.extract_strided_slice %40 {offsets = [0, 0], sizes = [32, 128], strides = [1, 1]} : vector<96x128xf32> to vector<32x128xf32>
    %cst_31 = arith.constant 5.000000e-01 : f32
    %42 = vector.broadcast %cst_31 : f32 to vector<32x128xf32>
    %43 = arith.mulf %41, %42 : vector<32x128xf32>
    %c1_32 = arith.constant 1 : index
    %c0_33 = arith.constant 0 : index
    %c0_34 = arith.constant 0 : index
    %44 = vector.load %arg13[%c1_32, %c0_33, %c0_34] : memref<2x32x128xf32, #tpu.memory_space<vmem>>, vector<1x32x128xf32>
    %45 = vector.shape_cast %44 : vector<1x32x128xf32> to vector<32x128xf32>
    %46 = vector.shape_cast %43 : vector<32x128xf32> to vector<1x32x128xf32>
    tpu.vector_store %arg13[%c1_32, %c0_33, %c0_34], %46 {strides = array<i32>} : memref<2x32x128xf32, #tpu.memory_space<vmem>>, vector<1x32x128xf32>,
    %47 = vector.extract_strided_slice %40 {offsets = [32, 0], sizes = [32, 128], strides = [1, 1]} : vector<96x128xf32> to vector<32x128xf32>
    %48 = arith.truncf %47 : vector<32x128xf32> to vector<32x128xbf16>
    %c1_35 = arith.constant 1 : index
    %c0_36 = arith.constant 0 : index
    %c0_37 = arith.constant 0 : index
    %49 = vector.load %arg14[%c1_35, %c0_36, %c0_37] : memref<2x32x128xbf16, #tpu.memory_space<vmem>>, vector<1x32x128xbf16>
    %50 = vector.shape_cast %49 : vector<1x32x128xbf16> to vector<32x128xbf16>
    %51 = vector.shape_cast %48 : vector<32x128xbf16> to vector<1x32x128xbf16>
    tpu.vector_store %arg14[%c1_35, %c0_36, %c0_37], %51 {strides = array<i32>} : memref<2x32x128xbf16, #tpu.memory_space<vmem>>, vector<1x32x128xbf16>,
    %52 = vector.extract_strided_slice %40 {offsets = [64, 0], sizes = [32, 128], strides = [1, 1]} : vector<96x128xf32> to vector<32x128xf32>
    %c1_38 = arith.constant 1 : index
    %c0_39 = arith.constant 0 : index
    %c0_40 = arith.constant 0 : index
    %53 = vector.load %arg15[%c1_38, %c0_39, %c0_40] : memref<2x32x128xf32, #tpu.memory_space<vmem>>, vector<1x32x128xf32>
    %54 = vector.shape_cast %53 : vector<1x32x128xf32> to vector<32x128xf32>
    %55 = vector.shape_cast %52 : vector<32x128xf32> to vector<1x32x128xf32>
    tpu.vector_store %arg15[%c1_38, %c0_39, %c0_40], %55 {strides = array<i32>} : memref<2x32x128xf32, #tpu.memory_space<vmem>>, vector<1x32x128xf32>,
    %c0_41 = arith.constant 0 : index
    %c0_42 = arith.constant 0 : index
    %c0_43 = arith.constant 0 : index
    %56 = vector.load %arg13[%c0_41, %c0_42, %c0_43] : memref<2x32x128xf32, #tpu.memory_space<vmem>>, vector<1x32x128xf32>
    %57 = vector.shape_cast %56 : vector<1x32x128xf32> to vector<32x128xf32>
    %c0_44 = arith.constant 0 : index
    %c0_45 = arith.constant 0 : index
    %c0_46 = arith.constant 0 : index
    %58 = vector.load %arg14[%c0_44, %c0_45, %c0_46] : memref<2x32x128xbf16, #tpu.memory_space<vmem>>, vector<1x32x128xbf16>
    %59 = vector.shape_cast %58 : vector<1x32x128xbf16> to vector<32x128xbf16>
    %60 = arith.extf %59 : vector<32x128xbf16> to vector<32x128xf32>
    %61 = arith.mulf %57, %60 : vector<32x128xf32>
    %62 = arith.truncf %61 : vector<32x128xf32> to vector<32x128xbf16>
    %cst_47 = arith.constant dense<0.000000e+00> : vector<8x128xf32>
    %63 = tpu.matmul %2, %62, %cst_47 {dimension_numbers = #tpu.dot_dimension_numbers<[1], [0], [0], [1], [0, 0, 1, 1], [], []>} : vector<8x32xbf16>, vector<32x128xbf16>, vector<8x128xf32> -> vector<8x128xf32>
    %c1_48 = arith.constant 1 : index
    %c0_49 = arith.constant 0 : index
    %c0_50 = arith.constant 0 : index
    %64 = vector.load %arg14[%c1_48, %c0_49, %c0_50] : memref<2x32x128xbf16, #tpu.memory_space<vmem>>, vector<1x32x128xbf16>
    %65 = vector.shape_cast %64 : vector<1x32x128xbf16> to vector<32x128xbf16>
    %66 = arith.extf %65 : vector<32x128xbf16> to vector<32x128xf32>
    %67 = arith.mulf %57, %66 : vector<32x128xf32>
    %68 = arith.truncf %67 : vector<32x128xf32> to vector<32x128xbf16>
    %cst_51 = arith.constant dense<0.000000e+00> : vector<8x128xf32>
    %69 = tpu.matmul %2, %68, %cst_51 {dimension_numbers = #tpu.dot_dimension_numbers<[1], [0], [0], [1], [0, 0, 1, 1], [], []>} : vector<8x32xbf16>, vector<32x128xbf16>, vector<8x128xf32> -> vector<8x128xf32>
    %70 = arith.maximumf %63, %69 : vector<8x128xf32>
    %71 = arith.subf %63, %70 : vector<8x128xf32>
    %72 = math.exp %71 : vector<8x128xf32>
    %73 = arith.subf %69, %70 : vector<8x128xf32>
    %74 = math.exp %73 : vector<8x128xf32>
    %75 = arith.addf %72, %74 : vector<8x128xf32>
    %76 = tpu.reciprocal %75 {approx = true} : vector<8x128xf32> -> vector<8x128xf32>
    %77 = arith.mulf %72, %76 : vector<8x128xf32>
    %78 = arith.truncf %77 : vector<8x128xf32> to vector<8x128xbf16>
    %cst_52 = arith.constant dense<0.000000e+00> : vector<32x128xf32>
    %79 = tpu.matmul %3, %78, %cst_52 {dimension_numbers = #tpu.dot_dimension_numbers<[1], [0], [0], [1], [0, 0, 1, 1], [], []>} : vector<32x8xbf16>, vector<8x128xbf16>, vector<32x128xf32> -> vector<32x128xf32>
    %c0_53 = arith.constant 0 : index
    %c0_54 = arith.constant 0 : index
    %c0_55 = arith.constant 0 : index
    %80 = vector.load %arg15[%c0_53, %c0_54, %c0_55] : memref<2x32x128xf32, #tpu.memory_space<vmem>>, vector<1x32x128xf32>
    %81 = vector.shape_cast %80 : vector<1x32x128xf32> to vector<32x128xf32>
    %82 = arith.mulf %79, %81 : vector<32x128xf32>
    %83 = arith.mulf %74, %76 : vector<8x128xf32>
    %84 = arith.truncf %83 : vector<8x128xf32> to vector<8x128xbf16>
    %cst_56 = arith.constant dense<0.000000e+00> : vector<32x128xf32>
    %85 = tpu.matmul %3, %84, %cst_56 {dimension_numbers = #tpu.dot_dimension_numbers<[1], [0], [0], [1], [0, 0, 1, 1], [], []>} : vector<32x8xbf16>, vector<8x128xbf16>, vector<32x128xf32> -> vector<32x128xf32>
    %c1_57 = arith.constant 1 : index
    %c0_58 = arith.constant 0 : index
    %c0_59 = arith.constant 0 : index
    %86 = vector.load %arg15[%c1_57, %c0_58, %c0_59] : memref<2x32x128xf32, #tpu.memory_space<vmem>>, vector<1x32x128xf32>
    %87 = vector.shape_cast %86 : vector<1x32x128xf32> to vector<32x128xf32>
    %88 = arith.mulf %85, %87 : vector<32x128xf32>
    %89 = arith.addf %82, %88 : vector<32x128xf32>
    %90 = arith.truncf %89 : vector<32x128xf32> to vector<32x128xbf16>
    %cst_60 = arith.constant dense<0.000000e+00> : vector<32x128xf32>
    %91 = tpu.matmul %1, %90, %cst_60 {dimension_numbers = #tpu.dot_dimension_numbers<[1], [0], [0], [1], [0, 0, 1, 1], [], []>} : vector<32x32xbf16>, vector<32x128xbf16>, vector<32x128xf32> -> vector<32x128xf32>
    %92 = arith.addf %91, %9 : vector<32x128xf32>
    %c0_61 = arith.constant 0 : index
    %c0_62 = arith.constant 0 : index
    %c0_63 = arith.constant 0 : index
    %93 = vector.load %arg1[%c0_61, %c0_62, %c0_63] : memref<2x32x128xf32, #tpu.memory_space<vmem>>, vector<1x32x128xf32>
    %94 = vector.shape_cast %93 : vector<1x32x128xf32> to vector<32x128xf32>
    %95 = arith.addf %94, %92 : vector<32x128xf32>
    %96 = arith.truncf %95 : vector<32x128xf32> to vector<32x128xbf16>
    %97 = arith.addf %95, %15 : vector<32x128xf32>
    %c0_64 = arith.constant 0 : index
    %c0_65 = arith.constant 0 : index
    %c0_66 = arith.constant 0 : index
    %98 = vector.load %arg6[%c0_64, %c0_65, %c0_66] : memref<4x32x32xbf16, #tpu.memory_space<vmem>>, vector<1x32x32xbf16>
    %99 = vector.shape_cast %98 : vector<1x32x32xbf16> to vector<32x32xbf16>
    %cst_67 = arith.constant dense<0.000000e+00> : vector<32x128xf32>
    %100 = tpu.matmul %99, %96, %cst_67 {dimension_numbers = #tpu.dot_dimension_numbers<[1], [0], [0], [1], [0, 0, 1, 1], [], []>} : vector<32x32xbf16>, vector<32x128xbf16>, vector<32x128xf32> -> vector<32x128xf32>
    %101 = vector.extract_strided_slice %12 {offsets = [0, 0], sizes = [32, 128], strides = [1, 1]} : vector<128x128xf32> to vector<32x128xf32>
    %102 = arith.addf %100, %101 : vector<32x128xf32>
    %cst_68 = arith.constant 5.000000e-01 : f32
    %103 = vector.broadcast %cst_68 : f32 to vector<32x128xf32>
    %104 = arith.mulf %103, %102 : vector<32x128xf32>
    %cst_69 = arith.constant 0.707106769 : f32
    %105 = vector.broadcast %cst_69 : f32 to vector<32x128xf32>
    %106 = arith.mulf %102, %105 : vector<32x128xf32>
    %107 = math.absf %106 : vector<32x128xf32>
    %cst_70 = arith.constant 0.327591091 : f32
    %108 = vector.broadcast %cst_70 : f32 to vector<32x128xf32>
    %109 = arith.mulf %108, %107 : vector<32x128xf32>
    %cst_71 = arith.constant 1.000000e+00 : f32
    %110 = vector.broadcast %cst_71 : f32 to vector<32x128xf32>
    %111 = arith.addf %110, %109 : vector<32x128xf32>
    %112 = tpu.reciprocal %111 {approx = true} : vector<32x128xf32> -> vector<32x128xf32>
    %cst_72 = arith.constant 1.06140542 : f32
    %113 = vector.broadcast %cst_72 : f32 to vector<32x128xf32>
    %114 = arith.mulf %112, %113 : vector<32x128xf32>
    %cst_73 = arith.constant -1.45315206 : f32
    %115 = vector.broadcast %cst_73 : f32 to vector<32x128xf32>
    %116 = arith.addf %115, %114 : vector<32x128xf32>
    %117 = arith.mulf %112, %116 : vector<32x128xf32>
    %cst_74 = arith.constant 1.42141378 : f32
    %118 = vector.broadcast %cst_74 : f32 to vector<32x128xf32>
    %119 = arith.addf %118, %117 : vector<32x128xf32>
    %120 = arith.mulf %112, %119 : vector<32x128xf32>
    %cst_75 = arith.constant -0.284496725 : f32
    %121 = vector.broadcast %cst_75 : f32 to vector<32x128xf32>
    %122 = arith.addf %121, %120 : vector<32x128xf32>
    %123 = arith.mulf %112, %122 : vector<32x128xf32>
    %cst_76 = arith.constant 0.254829586 : f32
    %124 = vector.broadcast %cst_76 : f32 to vector<32x128xf32>
    %125 = arith.addf %124, %123 : vector<32x128xf32>
    %126 = arith.mulf %112, %125 : vector<32x128xf32>
    %cst_77 = arith.constant 0.000000e+00 : f32
    %127 = vector.broadcast %cst_77 : f32 to vector<32x128xf32>
    %128 = arith.subf %127, %107 : vector<32x128xf32>
    %129 = arith.mulf %128, %107 : vector<32x128xf32>
    %130 = math.exp %129 : vector<32x128xf32>
    %131 = arith.mulf %126, %130 : vector<32x128xf32>
    %cst_78 = arith.constant 1.000000e+00 : f32
    %132 = vector.broadcast %cst_78 : f32 to vector<32x128xf32>
    %133 = arith.subf %132, %131 : vector<32x128xf32>
    %cst_79 = arith.constant 0.000000e+00 : f32
    %134 = vector.broadcast %cst_79 : f32 to vector<32x128xf32>
    %135 = arith.cmpf oge, %106, %134 : vector<32x128xf32>
    %cst_80 = arith.constant 0.000000e+00 : f32
    %136 = vector.broadcast %cst_80 : f32 to vector<32x128xf32>
    %137 = arith.subf %136, %133 : vector<32x128xf32>
    %138 = arith.select %135, %133, %137 : vector<32x128xi1>, vector<32x128xf32>
    %cst_81 = arith.constant 1.000000e+00 : f32
    %139 = vector.broadcast %cst_81 : f32 to vector<32x128xf32>
    %140 = arith.addf %139, %138 : vector<32x128xf32>
    %141 = arith.mulf %104, %140 : vector<32x128xf32>
    %142 = arith.truncf %141 : vector<32x128xf32> to vector<32x128xbf16>
    %c0_82 = arith.constant 0 : index
    %c0_83 = arith.constant 0 : index
    %c0_84 = arith.constant 0 : index
    %143 = vector.load %arg8[%c0_82, %c0_83, %c0_84] : memref<4x32x32xbf16, #tpu.memory_space<vmem>>, vector<1x32x32xbf16>
    %144 = vector.shape_cast %143 : vector<1x32x32xbf16> to vector<32x32xbf16>
    %cst_85 = arith.constant dense<0.000000e+00> : vector<32x128xf32>
    %145 = tpu.matmul %144, %142, %cst_85 {dimension_numbers = #tpu.dot_dimension_numbers<[1], [0], [0], [1], [0, 0, 1, 1], [], []>} : vector<32x32xbf16>, vector<32x128xbf16>, vector<32x128xf32> -> vector<32x128xf32>
    %146 = arith.addf %97, %145 : vector<32x128xf32>
    %c1_86 = arith.constant 1 : index
    %c0_87 = arith.constant 0 : index
    %c0_88 = arith.constant 0 : index
    %147 = vector.load %arg6[%c1_86, %c0_87, %c0_88] : memref<4x32x32xbf16, #tpu.memory_space<vmem>>, vector<1x32x32xbf16>
    %148 = vector.shape_cast %147 : vector<1x32x32xbf16> to vector<32x32xbf16>
    %cst_89 = arith.constant dense<0.000000e+00> : vector<32x128xf32>
    %149 = tpu.matmul %148, %96, %cst_89 {dimension_numbers = #tpu.dot_dimension_numbers<[1], [0], [0], [1], [0, 0, 1, 1], [], []>} : vector<32x32xbf16>, vector<32x128xbf16>, vector<32x128xf32> -> vector<32x128xf32>
    %150 = vector.extract_strided_slice %12 {offsets = [32, 0], sizes = [32, 128], strides = [1, 1]} : vector<128x128xf32> to vector<32x128xf32>
    %151 = arith.addf %149, %150 : vector<32x128xf32>
    %cst_90 = arith.constant 5.000000e-01 : f32
    %152 = vector.broadcast %cst_90 : f32 to vector<32x128xf32>
    %153 = arith.mulf %152, %151 : vector<32x128xf32>
    %cst_91 = arith.constant 0.707106769 : f32
    %154 = vector.broadcast %cst_91 : f32 to vector<32x128xf32>
    %155 = arith.mulf %151, %154 : vector<32x128xf32>
    %156 = math.absf %155 : vector<32x128xf32>
    %cst_92 = arith.constant 0.327591091 : f32
    %157 = vector.broadcast %cst_92 : f32 to vector<32x128xf32>
    %158 = arith.mulf %157, %156 : vector<32x128xf32>
    %cst_93 = arith.constant 1.000000e+00 : f32
    %159 = vector.broadcast %cst_93 : f32 to vector<32x128xf32>
    %160 = arith.addf %159, %158 : vector<32x128xf32>
    %161 = tpu.reciprocal %160 {approx = true} : vector<32x128xf32> -> vector<32x128xf32>
    %cst_94 = arith.constant 1.06140542 : f32
    %162 = vector.broadcast %cst_94 : f32 to vector<32x128xf32>
    %163 = arith.mulf %161, %162 : vector<32x128xf32>
    %cst_95 = arith.constant -1.45315206 : f32
    %164 = vector.broadcast %cst_95 : f32 to vector<32x128xf32>
    %165 = arith.addf %164, %163 : vector<32x128xf32>
    %166 = arith.mulf %161, %165 : vector<32x128xf32>
    %cst_96 = arith.constant 1.42141378 : f32
    %167 = vector.broadcast %cst_96 : f32 to vector<32x128xf32>
    %168 = arith.addf %167, %166 : vector<32x128xf32>
    %169 = arith.mulf %161, %168 : vector<32x128xf32>
    %cst_97 = arith.constant -0.284496725 : f32
    %170 = vector.broadcast %cst_97 : f32 to vector<32x128xf32>
    %171 = arith.addf %170, %169 : vector<32x128xf32>
    %172 = arith.mulf %161, %171 : vector<32x128xf32>
    %cst_98 = arith.constant 0.254829586 : f32
    %173 = vector.broadcast %cst_98 : f32 to vector<32x128xf32>
    %174 = arith.addf %173, %172 : vector<32x128xf32>
    %175 = arith.mulf %161, %174 : vector<32x128xf32>
    %cst_99 = arith.constant 0.000000e+00 : f32
    %176 = vector.broadcast %cst_99 : f32 to vector<32x128xf32>
    %177 = arith.subf %176, %156 : vector<32x128xf32>
    %178 = arith.mulf %177, %156 : vector<32x128xf32>
    %179 = math.exp %178 : vector<32x128xf32>
    %180 = arith.mulf %175, %179 : vector<32x128xf32>
    %cst_100 = arith.constant 1.000000e+00 : f32
    %181 = vector.broadcast %cst_100 : f32 to vector<32x128xf32>
    %182 = arith.subf %181, %180 : vector<32x128xf32>
    %cst_101 = arith.constant 0.000000e+00 : f32
    %183 = vector.broadcast %cst_101 : f32 to vector<32x128xf32>
    %184 = arith.cmpf oge, %155, %183 : vector<32x128xf32>
    %cst_102 = arith.constant 0.000000e+00 : f32
    %185 = vector.broadcast %cst_102 : f32 to vector<32x128xf32>
    %186 = arith.subf %185, %182 : vector<32x128xf32>
    %187 = arith.select %184, %182, %186 : vector<32x128xi1>, vector<32x128xf32>
    %cst_103 = arith.constant 1.000000e+00 : f32
    %188 = vector.broadcast %cst_103 : f32 to vector<32x128xf32>
    %189 = arith.addf %188, %187 : vector<32x128xf32>
    %190 = arith.mulf %153, %189 : vector<32x128xf32>
    %191 = arith.truncf %190 : vector<32x128xf32> to vector<32x128xbf16>
    %c1_104 = arith.constant 1 : index
    %c0_105 = arith.constant 0 : index
    %c0_106 = arith.constant 0 : index
    %192 = vector.load %arg8[%c1_104, %c0_105, %c0_106] : memref<4x32x32xbf16, #tpu.memory_space<vmem>>, vector<1x32x32xbf16>
    %193 = vector.shape_cast %192 : vector<1x32x32xbf16> to vector<32x32xbf16>
    %cst_107 = arith.constant dense<0.000000e+00> : vector<32x128xf32>
    %194 = tpu.matmul %193, %191, %cst_107 {dimension_numbers = #tpu.dot_dimension_numbers<[1], [0], [0], [1], [0, 0, 1, 1], [], []>} : vector<32x32xbf16>, vector<32x128xbf16>, vector<32x128xf32> -> vector<32x128xf32>
    %195 = arith.addf %146, %194 : vector<32x128xf32>
    %c2 = arith.constant 2 : index
    %c0_108 = arith.constant 0 : index
    %c0_109 = arith.constant 0 : index
    %196 = vector.load %arg6[%c2, %c0_108, %c0_109] : memref<4x32x32xbf16, #tpu.memory_space<vmem>>, vector<1x32x32xbf16>
    %197 = vector.shape_cast %196 : vector<1x32x32xbf16> to vector<32x32xbf16>
    %cst_110 = arith.constant dense<0.000000e+00> : vector<32x128xf32>
    %198 = tpu.matmul %197, %96, %cst_110 {dimension_numbers = #tpu.dot_dimension_numbers<[1], [0], [0], [1], [0, 0, 1, 1], [], []>} : vector<32x32xbf16>, vector<32x128xbf16>, vector<32x128xf32> -> vector<32x128xf32>
    %199 = vector.extract_strided_slice %12 {offsets = [64, 0], sizes = [32, 128], strides = [1, 1]} : vector<128x128xf32> to vector<32x128xf32>
    %200 = arith.addf %198, %199 : vector<32x128xf32>
    %cst_111 = arith.constant 5.000000e-01 : f32
    %201 = vector.broadcast %cst_111 : f32 to vector<32x128xf32>
    %202 = arith.mulf %201, %200 : vector<32x128xf32>
    %cst_112 = arith.constant 0.707106769 : f32
    %203 = vector.broadcast %cst_112 : f32 to vector<32x128xf32>
    %204 = arith.mulf %200, %203 : vector<32x128xf32>
    %205 = math.absf %204 : vector<32x128xf32>
    %cst_113 = arith.constant 0.327591091 : f32
    %206 = vector.broadcast %cst_113 : f32 to vector<32x128xf32>
    %207 = arith.mulf %206, %205 : vector<32x128xf32>
    %cst_114 = arith.constant 1.000000e+00 : f32
    %208 = vector.broadcast %cst_114 : f32 to vector<32x128xf32>
    %209 = arith.addf %208, %207 : vector<32x128xf32>
    %210 = tpu.reciprocal %209 {approx = true} : vector<32x128xf32> -> vector<32x128xf32>
    %cst_115 = arith.constant 1.06140542 : f32
    %211 = vector.broadcast %cst_115 : f32 to vector<32x128xf32>
    %212 = arith.mulf %210, %211 : vector<32x128xf32>
    %cst_116 = arith.constant -1.45315206 : f32
    %213 = vector.broadcast %cst_116 : f32 to vector<32x128xf32>
    %214 = arith.addf %213, %212 : vector<32x128xf32>
    %215 = arith.mulf %210, %214 : vector<32x128xf32>
    %cst_117 = arith.constant 1.42141378 : f32
    %216 = vector.broadcast %cst_117 : f32 to vector<32x128xf32>
    %217 = arith.addf %216, %215 : vector<32x128xf32>
    %218 = arith.mulf %210, %217 : vector<32x128xf32>
    %cst_118 = arith.constant -0.284496725 : f32
    %219 = vector.broadcast %cst_118 : f32 to vector<32x128xf32>
    %220 = arith.addf %219, %218 : vector<32x128xf32>
    %221 = arith.mulf %210, %220 : vector<32x128xf32>
    %cst_119 = arith.constant 0.254829586 : f32
    %222 = vector.broadcast %cst_119 : f32 to vector<32x128xf32>
    %223 = arith.addf %222, %221 : vector<32x128xf32>
    %224 = arith.mulf %210, %223 : vector<32x128xf32>
    %cst_120 = arith.constant 0.000000e+00 : f32
    %225 = vector.broadcast %cst_120 : f32 to vector<32x128xf32>
    %226 = arith.subf %225, %205 : vector<32x128xf32>
    %227 = arith.mulf %226, %205 : vector<32x128xf32>
    %228 = math.exp %227 : vector<32x128xf32>
    %229 = arith.mulf %224, %228 : vector<32x128xf32>
    %cst_121 = arith.constant 1.000000e+00 : f32
    %230 = vector.broadcast %cst_121 : f32 to vector<32x128xf32>
    %231 = arith.subf %230, %229 : vector<32x128xf32>
    %cst_122 = arith.constant 0.000000e+00 : f32
    %232 = vector.broadcast %cst_122 : f32 to vector<32x128xf32>
    %233 = arith.cmpf oge, %204, %232 : vector<32x128xf32>
    %cst_123 = arith.constant 0.000000e+00 : f32
    %234 = vector.broadcast %cst_123 : f32 to vector<32x128xf32>
    %235 = arith.subf %234, %231 : vector<32x128xf32>
    %236 = arith.select %233, %231, %235 : vector<32x128xi1>, vector<32x128xf32>
    %cst_124 = arith.constant 1.000000e+00 : f32
    %237 = vector.broadcast %cst_124 : f32 to vector<32x128xf32>
    %238 = arith.addf %237, %236 : vector<32x128xf32>
    %239 = arith.mulf %202, %238 : vector<32x128xf32>
    %240 = arith.truncf %239 : vector<32x128xf32> to vector<32x128xbf16>
    %c2_125 = arith.constant 2 : index
    %c0_126 = arith.constant 0 : index
    %c0_127 = arith.constant 0 : index
    %241 = vector.load %arg8[%c2_125, %c0_126, %c0_127] : memref<4x32x32xbf16, #tpu.memory_space<vmem>>, vector<1x32x32xbf16>
    %242 = vector.shape_cast %241 : vector<1x32x32xbf16> to vector<32x32xbf16>
    %cst_128 = arith.constant dense<0.000000e+00> : vector<32x128xf32>
    %243 = tpu.matmul %242, %240, %cst_128 {dimension_numbers = #tpu.dot_dimension_numbers<[1], [0], [0], [1], [0, 0, 1, 1], [], []>} : vector<32x32xbf16>, vector<32x128xbf16>, vector<32x128xf32> -> vector<32x128xf32>
    %244 = arith.addf %195, %243 : vector<32x128xf32>
    %c3 = arith.constant 3 : index
    %c0_129 = arith.constant 0 : index
    %c0_130 = arith.constant 0 : index
    %245 = vector.load %arg6[%c3, %c0_129, %c0_130] : memref<4x32x32xbf16, #tpu.memory_space<vmem>>, vector<1x32x32xbf16>
    %246 = vector.shape_cast %245 : vector<1x32x32xbf16> to vector<32x32xbf16>
    %cst_131 = arith.constant dense<0.000000e+00> : vector<32x128xf32>
    %247 = tpu.matmul %246, %96, %cst_131 {dimension_numbers = #tpu.dot_dimension_numbers<[1], [0], [0], [1], [0, 0, 1, 1], [], []>} : vector<32x32xbf16>, vector<32x128xbf16>, vector<32x128xf32> -> vector<32x128xf32>
    %248 = vector.extract_strided_slice %12 {offsets = [96, 0], sizes = [32, 128], strides = [1, 1]} : vector<128x128xf32> to vector<32x128xf32>
    %249 = arith.addf %247, %248 : vector<32x128xf32>
    %cst_132 = arith.constant 5.000000e-01 : f32
    %250 = vector.broadcast %cst_132 : f32 to vector<32x128xf32>
    %251 = arith.mulf %250, %249 : vector<32x128xf32>
    %cst_133 = arith.constant 0.707106769 : f32
    %252 = vector.broadcast %cst_133 : f32 to vector<32x128xf32>
    %253 = arith.mulf %249, %252 : vector<32x128xf32>
    %254 = math.absf %253 : vector<32x128xf32>
    %cst_134 = arith.constant 0.327591091 : f32
    %255 = vector.broadcast %cst_134 : f32 to vector<32x128xf32>
    %256 = arith.mulf %255, %254 : vector<32x128xf32>
    %cst_135 = arith.constant 1.000000e+00 : f32
    %257 = vector.broadcast %cst_135 : f32 to vector<32x128xf32>
    %258 = arith.addf %257, %256 : vector<32x128xf32>
    %259 = tpu.reciprocal %258 {approx = true} : vector<32x128xf32> -> vector<32x128xf32>
    %cst_136 = arith.constant 1.06140542 : f32
    %260 = vector.broadcast %cst_136 : f32 to vector<32x128xf32>
    %261 = arith.mulf %259, %260 : vector<32x128xf32>
    %cst_137 = arith.constant -1.45315206 : f32
    %262 = vector.broadcast %cst_137 : f32 to vector<32x128xf32>
    %263 = arith.addf %262, %261 : vector<32x128xf32>
    %264 = arith.mulf %259, %263 : vector<32x128xf32>
    %cst_138 = arith.constant 1.42141378 : f32
    %265 = vector.broadcast %cst_138 : f32 to vector<32x128xf32>
    %266 = arith.addf %265, %264 : vector<32x128xf32>
    %267 = arith.mulf %259, %266 : vector<32x128xf32>
    %cst_139 = arith.constant -0.284496725 : f32
    %268 = vector.broadcast %cst_139 : f32 to vector<32x128xf32>
    %269 = arith.addf %268, %267 : vector<32x128xf32>
    %270 = arith.mulf %259, %269 : vector<32x128xf32>
    %cst_140 = arith.constant 0.254829586 : f32
    %271 = vector.broadcast %cst_140 : f32 to vector<32x128xf32>
    %272 = arith.addf %271, %270 : vector<32x128xf32>
    %273 = arith.mulf %259, %272 : vector<32x128xf32>
    %cst_141 = arith.constant 0.000000e+00 : f32
    %274 = vector.broadcast %cst_141 : f32 to vector<32x128xf32>
    %275 = arith.subf %274, %254 : vector<32x128xf32>
    %276 = arith.mulf %275, %254 : vector<32x128xf32>
    %277 = math.exp %276 : vector<32x128xf32>
    %278 = arith.mulf %273, %277 : vector<32x128xf32>
    %cst_142 = arith.constant 1.000000e+00 : f32
    %279 = vector.broadcast %cst_142 : f32 to vector<32x128xf32>
    %280 = arith.subf %279, %278 : vector<32x128xf32>
    %cst_143 = arith.constant 0.000000e+00 : f32
    %281 = vector.broadcast %cst_143 : f32 to vector<32x128xf32>
    %282 = arith.cmpf oge, %253, %281 : vector<32x128xf32>
    %cst_144 = arith.constant 0.000000e+00 : f32
    %283 = vector.broadcast %cst_144 : f32 to vector<32x128xf32>
    %284 = arith.subf %283, %280 : vector<32x128xf32>
    %285 = arith.select %282, %280, %284 : vector<32x128xi1>, vector<32x128xf32>
    %cst_145 = arith.constant 1.000000e+00 : f32
    %286 = vector.broadcast %cst_145 : f32 to vector<32x128xf32>
    %287 = arith.addf %286, %285 : vector<32x128xf32>
    %288 = arith.mulf %251, %287 : vector<32x128xf32>
    %289 = arith.truncf %288 : vector<32x128xf32> to vector<32x128xbf16>
    %c3_146 = arith.constant 3 : index
    %c0_147 = arith.constant 0 : index
    %c0_148 = arith.constant 0 : index
    %290 = vector.load %arg8[%c3_146, %c0_147, %c0_148] : memref<4x32x32xbf16, #tpu.memory_space<vmem>>, vector<1x32x32xbf16>
    %291 = vector.shape_cast %290 : vector<1x32x32xbf16> to vector<32x32xbf16>
    %cst_149 = arith.constant dense<0.000000e+00> : vector<32x128xf32>
    %292 = tpu.matmul %291, %289, %cst_149 {dimension_numbers = #tpu.dot_dimension_numbers<[1], [0], [0], [1], [0, 0, 1, 1], [], []>} : vector<32x32xbf16>, vector<32x128xbf16>, vector<32x128xf32> -> vector<32x128xf32>
    %293 = arith.addf %244, %292 : vector<32x128xf32>
    %c0_150 = arith.constant 0 : index
    %c0_151 = arith.constant 0 : index
    %c0_152 = arith.constant 0 : index
    %294 = vector.load %arg12[%c0_150, %c0_151, %c0_152] : memref<2x32x128xf32, #tpu.memory_space<vmem>>, vector<1x32x128xf32>
    %295 = vector.shape_cast %294 : vector<1x32x128xf32> to vector<32x128xf32>
    %296 = vector.shape_cast %293 : vector<32x128xf32> to vector<1x32x128xf32>
    tpu.vector_store %arg12[%c0_150, %c0_151, %c0_152], %296 {strides = array<i32>} : memref<2x32x128xf32, #tpu.memory_space<vmem>>, vector<1x32x128xf32>,
    %c1_153 = arith.constant 1 : index
    %c0_154 = arith.constant 0 : index
    %c0_155 = arith.constant 0 : index
    %297 = vector.load %arg13[%c1_153, %c0_154, %c0_155] : memref<2x32x128xf32, #tpu.memory_space<vmem>>, vector<1x32x128xf32>
    %298 = vector.shape_cast %297 : vector<1x32x128xf32> to vector<32x128xf32>
    %c0_156 = arith.constant 0 : index
    %c0_157 = arith.constant 0 : index
    %c0_158 = arith.constant 0 : index
    %299 = vector.load %arg14[%c0_156, %c0_157, %c0_158] : memref<2x32x128xbf16, #tpu.memory_space<vmem>>, vector<1x32x128xbf16>
    %300 = vector.shape_cast %299 : vector<1x32x128xbf16> to vector<32x128xbf16>
    %301 = arith.extf %300 : vector<32x128xbf16> to vector<32x128xf32>
    %302 = arith.mulf %298, %301 : vector<32x128xf32>
    %303 = arith.truncf %302 : vector<32x128xf32> to vector<32x128xbf16>
    %cst_159 = arith.constant dense<0.000000e+00> : vector<8x128xf32>
    %304 = tpu.matmul %2, %303, %cst_159 {dimension_numbers = #tpu.dot_dimension_numbers<[1], [0], [0], [1], [0, 0, 1, 1], [], []>} : vector<8x32xbf16>, vector<32x128xbf16>, vector<8x128xf32> -> vector<8x128xf32>
    %c1_160 = arith.constant 1 : index
    %c0_161 = arith.constant 0 : index
    %c0_162 = arith.constant 0 : index
    %305 = vector.load %arg14[%c1_160, %c0_161, %c0_162] : memref<2x32x128xbf16, #tpu.memory_space<vmem>>, vector<1x32x128xbf16>
    %306 = vector.shape_cast %305 : vector<1x32x128xbf16> to vector<32x128xbf16>
    %307 = arith.extf %306 : vector<32x128xbf16> to vector<32x128xf32>
    %308 = arith.mulf %298, %307 : vector<32x128xf32>
    %309 = arith.truncf %308 : vector<32x128xf32> to vector<32x128xbf16>
    %cst_163 = arith.constant dense<0.000000e+00> : vector<8x128xf32>
    %310 = tpu.matmul %2, %309, %cst_163 {dimension_numbers = #tpu.dot_dimension_numbers<[1], [0], [0], [1], [0, 0, 1, 1], [], []>} : vector<8x32xbf16>, vector<32x128xbf16>, vector<8x128xf32> -> vector<8x128xf32>
    %311 = arith.maximumf %304, %310 : vector<8x128xf32>
    %312 = arith.subf %304, %311 : vector<8x128xf32>
    %313 = math.exp %312 : vector<8x128xf32>
    %314 = arith.subf %310, %311 : vector<8x128xf32>
    %315 = math.exp %314 : vector<8x128xf32>
    %316 = arith.addf %313, %315 : vector<8x128xf32>
    %317 = tpu.reciprocal %316 {approx = true} : vector<8x128xf32> -> vector<8x128xf32>
    %318 = arith.mulf %313, %317 : vector<8x128xf32>
    %319 = arith.truncf %318 : vector<8x128xf32> to vector<8x128xbf16>
    %cst_164 = arith.constant dense<0.000000e+00> : vector<32x128xf32>
    %320 = tpu.matmul %3, %319, %cst_164 {dimension_numbers = #tpu.dot_dimension_numbers<[1], [0], [0], [1], [0, 0, 1, 1], [], []>} : vector<32x8xbf16>, vector<8x128xbf16>, vector<32x128xf32> -> vector<32x128xf32>
    %c0_165 = arith.constant 0 : index
    %c0_166 = arith.constant 0 : index
    %c0_167 = arith.constant 0 : index
    %321 = vector.load %arg15[%c0_165, %c0_166, %c0_167] : memref<2x32x128xf32, #tpu.memory_space<vmem>>, vector<1x32x128xf32>
    %322 = vector.shape_cast %321 : vector<1x32x128xf32> to vector<32x128xf32>
    %323 = arith.mulf %320, %322 : vector<32x128xf32>
    %324 = arith.mulf %315, %317 : vector<8x128xf32>
    %325 = arith.truncf %324 : vector<8x128xf32> to vector<8x128xbf16>
    %cst_168 = arith.constant dense<0.000000e+00> : vector<32x128xf32>
    %326 = tpu.matmul %3, %325, %cst_168 {dimension_numbers = #tpu.dot_dimension_numbers<[1], [0], [0], [1], [0, 0, 1, 1], [], []>} : vector<32x8xbf16>, vector<8x128xbf16>, vector<32x128xf32> -> vector<32x128xf32>
    %c1_169 = arith.constant 1 : index
    %c0_170 = arith.constant 0 : index
    %c0_171 = arith.constant 0 : index
    %327 = vector.load %arg15[%c1_169, %c0_170, %c0_171] : memref<2x32x128xf32, #tpu.memory_space<vmem>>, vector<1x32x128xf32>
    %328 = vector.shape_cast %327 : vector<1x32x128xf32> to vector<32x128xf32>
    %329 = arith.mulf %326, %328 : vector<32x128xf32>
    %330 = arith.addf %323, %329 : vector<32x128xf32>
    %331 = arith.truncf %330 : vector<32x128xf32> to vector<32x128xbf16>
    %cst_172 = arith.constant dense<0.000000e+00> : vector<32x128xf32>
    %332 = tpu.matmul %1, %331, %cst_172 {dimension_numbers = #tpu.dot_dimension_numbers<[1], [0], [0], [1], [0, 0, 1, 1], [], []>} : vector<32x32xbf16>, vector<32x128xbf16>, vector<32x128xf32> -> vector<32x128xf32>
    %333 = arith.addf %332, %9 : vector<32x128xf32>
    %c1_173 = arith.constant 1 : index
    %c0_174 = arith.constant 0 : index
    %c0_175 = arith.constant 0 : index
    %334 = vector.load %arg1[%c1_173, %c0_174, %c0_175] : memref<2x32x128xf32, #tpu.memory_space<vmem>>, vector<1x32x128xf32>
    %335 = vector.shape_cast %334 : vector<1x32x128xf32> to vector<32x128xf32>
    %336 = arith.addf %335, %333 : vector<32x128xf32>
    %337 = arith.truncf %336 : vector<32x128xf32> to vector<32x128xbf16>
    %338 = arith.addf %336, %15 : vector<32x128xf32>
    %c0_176 = arith.constant 0 : index
    %c0_177 = arith.constant 0 : index
    %c0_178 = arith.constant 0 : index
    %339 = vector.load %arg6[%c0_176, %c0_177, %c0_178] : memref<4x32x32xbf16, #tpu.memory_space<vmem>>, vector<1x32x32xbf16>
    %340 = vector.shape_cast %339 : vector<1x32x32xbf16> to vector<32x32xbf16>
    %cst_179 = arith.constant dense<0.000000e+00> : vector<32x128xf32>
    %341 = tpu.matmul %340, %337, %cst_179 {dimension_numbers = #tpu.dot_dimension_numbers<[1], [0], [0], [1], [0, 0, 1, 1], [], []>} : vector<32x32xbf16>, vector<32x128xbf16>, vector<32x128xf32> -> vector<32x128xf32>
    %342 = vector.extract_strided_slice %12 {offsets = [0, 0], sizes = [32, 128], strides = [1, 1]} : vector<128x128xf32> to vector<32x128xf32>
    %343 = arith.addf %341, %342 : vector<32x128xf32>
    %cst_180 = arith.constant 5.000000e-01 : f32
    %344 = vector.broadcast %cst_180 : f32 to vector<32x128xf32>
    %345 = arith.mulf %344, %343 : vector<32x128xf32>
    %cst_181 = arith.constant 0.707106769 : f32
    %346 = vector.broadcast %cst_181 : f32 to vector<32x128xf32>
    %347 = arith.mulf %343, %346 : vector<32x128xf32>
    %348 = math.absf %347 : vector<32x128xf32>
    %cst_182 = arith.constant 0.327591091 : f32
    %349 = vector.broadcast %cst_182 : f32 to vector<32x128xf32>
    %350 = arith.mulf %349, %348 : vector<32x128xf32>
    %cst_183 = arith.constant 1.000000e+00 : f32
    %351 = vector.broadcast %cst_183 : f32 to vector<32x128xf32>
    %352 = arith.addf %351, %350 : vector<32x128xf32>
    %353 = tpu.reciprocal %352 {approx = true} : vector<32x128xf32> -> vector<32x128xf32>
    %cst_184 = arith.constant 1.06140542 : f32
    %354 = vector.broadcast %cst_184 : f32 to vector<32x128xf32>
    %355 = arith.mulf %353, %354 : vector<32x128xf32>
    %cst_185 = arith.constant -1.45315206 : f32
    %356 = vector.broadcast %cst_185 : f32 to vector<32x128xf32>
    %357 = arith.addf %356, %355 : vector<32x128xf32>
    %358 = arith.mulf %353, %357 : vector<32x128xf32>
    %cst_186 = arith.constant 1.42141378 : f32
    %359 = vector.broadcast %cst_186 : f32 to vector<32x128xf32>
    %360 = arith.addf %359, %358 : vector<32x128xf32>
    %361 = arith.mulf %353, %360 : vector<32x128xf32>
    %cst_187 = arith.constant -0.284496725 : f32
    %362 = vector.broadcast %cst_187 : f32 to vector<32x128xf32>
    %363 = arith.addf %362, %361 : vector<32x128xf32>
    %364 = arith.mulf %353, %363 : vector<32x128xf32>
    %cst_188 = arith.constant 0.254829586 : f32
    %365 = vector.broadcast %cst_188 : f32 to vector<32x128xf32>
    %366 = arith.addf %365, %364 : vector<32x128xf32>
    %367 = arith.mulf %353, %366 : vector<32x128xf32>
    %cst_189 = arith.constant 0.000000e+00 : f32
    %368 = vector.broadcast %cst_189 : f32 to vector<32x128xf32>
    %369 = arith.subf %368, %348 : vector<32x128xf32>
    %370 = arith.mulf %369, %348 : vector<32x128xf32>
    %371 = math.exp %370 : vector<32x128xf32>
    %372 = arith.mulf %367, %371 : vector<32x128xf32>
    %cst_190 = arith.constant 1.000000e+00 : f32
    %373 = vector.broadcast %cst_190 : f32 to vector<32x128xf32>
    %374 = arith.subf %373, %372 : vector<32x128xf32>
    %cst_191 = arith.constant 0.000000e+00 : f32
    %375 = vector.broadcast %cst_191 : f32 to vector<32x128xf32>
    %376 = arith.cmpf oge, %347, %375 : vector<32x128xf32>
    %cst_192 = arith.constant 0.000000e+00 : f32
    %377 = vector.broadcast %cst_192 : f32 to vector<32x128xf32>
    %378 = arith.subf %377, %374 : vector<32x128xf32>
    %379 = arith.select %376, %374, %378 : vector<32x128xi1>, vector<32x128xf32>
    %cst_193 = arith.constant 1.000000e+00 : f32
    %380 = vector.broadcast %cst_193 : f32 to vector<32x128xf32>
    %381 = arith.addf %380, %379 : vector<32x128xf32>
    %382 = arith.mulf %345, %381 : vector<32x128xf32>
    %383 = arith.truncf %382 : vector<32x128xf32> to vector<32x128xbf16>
    %c0_194 = arith.constant 0 : index
    %c0_195 = arith.constant 0 : index
    %c0_196 = arith.constant 0 : index
    %384 = vector.load %arg8[%c0_194, %c0_195, %c0_196] : memref<4x32x32xbf16, #tpu.memory_space<vmem>>, vector<1x32x32xbf16>
    %385 = vector.shape_cast %384 : vector<1x32x32xbf16> to vector<32x32xbf16>
    %cst_197 = arith.constant dense<0.000000e+00> : vector<32x128xf32>
    %386 = tpu.matmul %385, %383, %cst_197 {dimension_numbers = #tpu.dot_dimension_numbers<[1], [0], [0], [1], [0, 0, 1, 1], [], []>} : vector<32x32xbf16>, vector<32x128xbf16>, vector<32x128xf32> -> vector<32x128xf32>
    %387 = arith.addf %338, %386 : vector<32x128xf32>
    %c1_198 = arith.constant 1 : index
    %c0_199 = arith.constant 0 : index
    %c0_200 = arith.constant 0 : index
    %388 = vector.load %arg6[%c1_198, %c0_199, %c0_200] : memref<4x32x32xbf16, #tpu.memory_space<vmem>>, vector<1x32x32xbf16>
    %389 = vector.shape_cast %388 : vector<1x32x32xbf16> to vector<32x32xbf16>
    %cst_201 = arith.constant dense<0.000000e+00> : vector<32x128xf32>
    %390 = tpu.matmul %389, %337, %cst_201 {dimension_numbers = #tpu.dot_dimension_numbers<[1], [0], [0], [1], [0, 0, 1, 1], [], []>} : vector<32x32xbf16>, vector<32x128xbf16>, vector<32x128xf32> -> vector<32x128xf32>
    %391 = vector.extract_strided_slice %12 {offsets = [32, 0], sizes = [32, 128], strides = [1, 1]} : vector<128x128xf32> to vector<32x128xf32>
    %392 = arith.addf %390, %391 : vector<32x128xf32>
    %cst_202 = arith.constant 5.000000e-01 : f32
    %393 = vector.broadcast %cst_202 : f32 to vector<32x128xf32>
    %394 = arith.mulf %393, %392 : vector<32x128xf32>
    %cst_203 = arith.constant 0.707106769 : f32
    %395 = vector.broadcast %cst_203 : f32 to vector<32x128xf32>
    %396 = arith.mulf %392, %395 : vector<32x128xf32>
    %397 = math.absf %396 : vector<32x128xf32>
    %cst_204 = arith.constant 0.327591091 : f32
    %398 = vector.broadcast %cst_204 : f32 to vector<32x128xf32>
    %399 = arith.mulf %398, %397 : vector<32x128xf32>
    %cst_205 = arith.constant 1.000000e+00 : f32
    %400 = vector.broadcast %cst_205 : f32 to vector<32x128xf32>
    %401 = arith.addf %400, %399 : vector<32x128xf32>
    %402 = tpu.reciprocal %401 {approx = true} : vector<32x128xf32> -> vector<32x128xf32>
    %cst_206 = arith.constant 1.06140542 : f32
    %403 = vector.broadcast %cst_206 : f32 to vector<32x128xf32>
    %404 = arith.mulf %402, %403 : vector<32x128xf32>
    %cst_207 = arith.constant -1.45315206 : f32
    %405 = vector.broadcast %cst_207 : f32 to vector<32x128xf32>
    %406 = arith.addf %405, %404 : vector<32x128xf32>
    %407 = arith.mulf %402, %406 : vector<32x128xf32>
    %cst_208 = arith.constant 1.42141378 : f32
    %408 = vector.broadcast %cst_208 : f32 to vector<32x128xf32>
    %409 = arith.addf %408, %407 : vector<32x128xf32>
    %410 = arith.mulf %402, %409 : vector<32x128xf32>
    %cst_209 = arith.constant -0.284496725 : f32
    %411 = vector.broadcast %cst_209 : f32 to vector<32x128xf32>
    %412 = arith.addf %411, %410 : vector<32x128xf32>
    %413 = arith.mulf %402, %412 : vector<32x128xf32>
    %cst_210 = arith.constant 0.254829586 : f32
    %414 = vector.broadcast %cst_210 : f32 to vector<32x128xf32>
    %415 = arith.addf %414, %413 : vector<32x128xf32>
    %416 = arith.mulf %402, %415 : vector<32x128xf32>
    %cst_211 = arith.constant 0.000000e+00 : f32
    %417 = vector.broadcast %cst_211 : f32 to vector<32x128xf32>
    %418 = arith.subf %417, %397 : vector<32x128xf32>
    %419 = arith.mulf %418, %397 : vector<32x128xf32>
    %420 = math.exp %419 : vector<32x128xf32>
    %421 = arith.mulf %416, %420 : vector<32x128xf32>
    %cst_212 = arith.constant 1.000000e+00 : f32
    %422 = vector.broadcast %cst_212 : f32 to vector<32x128xf32>
    %423 = arith.subf %422, %421 : vector<32x128xf32>
    %cst_213 = arith.constant 0.000000e+00 : f32
    %424 = vector.broadcast %cst_213 : f32 to vector<32x128xf32>
    %425 = arith.cmpf oge, %396, %424 : vector<32x128xf32>
    %cst_214 = arith.constant 0.000000e+00 : f32
    %426 = vector.broadcast %cst_214 : f32 to vector<32x128xf32>
    %427 = arith.subf %426, %423 : vector<32x128xf32>
    %428 = arith.select %425, %423, %427 : vector<32x128xi1>, vector<32x128xf32>
    %cst_215 = arith.constant 1.000000e+00 : f32
    %429 = vector.broadcast %cst_215 : f32 to vector<32x128xf32>
    %430 = arith.addf %429, %428 : vector<32x128xf32>
    %431 = arith.mulf %394, %430 : vector<32x128xf32>
    %432 = arith.truncf %431 : vector<32x128xf32> to vector<32x128xbf16>
    %c1_216 = arith.constant 1 : index
    %c0_217 = arith.constant 0 : index
    %c0_218 = arith.constant 0 : index
    %433 = vector.load %arg8[%c1_216, %c0_217, %c0_218] : memref<4x32x32xbf16, #tpu.memory_space<vmem>>, vector<1x32x32xbf16>
    %434 = vector.shape_cast %433 : vector<1x32x32xbf16> to vector<32x32xbf16>
    %cst_219 = arith.constant dense<0.000000e+00> : vector<32x128xf32>
    %435 = tpu.matmul %434, %432, %cst_219 {dimension_numbers = #tpu.dot_dimension_numbers<[1], [0], [0], [1], [0, 0, 1, 1], [], []>} : vector<32x32xbf16>, vector<32x128xbf16>, vector<32x128xf32> -> vector<32x128xf32>
    %436 = arith.addf %387, %435 : vector<32x128xf32>
    %c2_220 = arith.constant 2 : index
    %c0_221 = arith.constant 0 : index
    %c0_222 = arith.constant 0 : index
    %437 = vector.load %arg6[%c2_220, %c0_221, %c0_222] : memref<4x32x32xbf16, #tpu.memory_space<vmem>>, vector<1x32x32xbf16>
    %438 = vector.shape_cast %437 : vector<1x32x32xbf16> to vector<32x32xbf16>
    %cst_223 = arith.constant dense<0.000000e+00> : vector<32x128xf32>
    %439 = tpu.matmul %438, %337, %cst_223 {dimension_numbers = #tpu.dot_dimension_numbers<[1], [0], [0], [1], [0, 0, 1, 1], [], []>} : vector<32x32xbf16>, vector<32x128xbf16>, vector<32x128xf32> -> vector<32x128xf32>
    %440 = vector.extract_strided_slice %12 {offsets = [64, 0], sizes = [32, 128], strides = [1, 1]} : vector<128x128xf32> to vector<32x128xf32>
    %441 = arith.addf %439, %440 : vector<32x128xf32>
    %cst_224 = arith.constant 5.000000e-01 : f32
    %442 = vector.broadcast %cst_224 : f32 to vector<32x128xf32>
    %443 = arith.mulf %442, %441 : vector<32x128xf32>
    %cst_225 = arith.constant 0.707106769 : f32
    %444 = vector.broadcast %cst_225 : f32 to vector<32x128xf32>
    %445 = arith.mulf %441, %444 : vector<32x128xf32>
    %446 = math.absf %445 : vector<32x128xf32>
    %cst_226 = arith.constant 0.327591091 : f32
    %447 = vector.broadcast %cst_226 : f32 to vector<32x128xf32>
    %448 = arith.mulf %447, %446 : vector<32x128xf32>
    %cst_227 = arith.constant 1.000000e+00 : f32
    %449 = vector.broadcast %cst_227 : f32 to vector<32x128xf32>
    %450 = arith.addf %449, %448 : vector<32x128xf32>
    %451 = tpu.reciprocal %450 {approx = true} : vector<32x128xf32> -> vector<32x128xf32>
    %cst_228 = arith.constant 1.06140542 : f32
    %452 = vector.broadcast %cst_228 : f32 to vector<32x128xf32>
    %453 = arith.mulf %451, %452 : vector<32x128xf32>
    %cst_229 = arith.constant -1.45315206 : f32
    %454 = vector.broadcast %cst_229 : f32 to vector<32x128xf32>
    %455 = arith.addf %454, %453 : vector<32x128xf32>
    %456 = arith.mulf %451, %455 : vector<32x128xf32>
    %cst_230 = arith.constant 1.42141378 : f32
    %457 = vector.broadcast %cst_230 : f32 to vector<32x128xf32>
    %458 = arith.addf %457, %456 : vector<32x128xf32>
    %459 = arith.mulf %451, %458 : vector<32x128xf32>
    %cst_231 = arith.constant -0.284496725 : f32
    %460 = vector.broadcast %cst_231 : f32 to vector<32x128xf32>
    %461 = arith.addf %460, %459 : vector<32x128xf32>
    %462 = arith.mulf %451, %461 : vector<32x128xf32>
    %cst_232 = arith.constant 0.254829586 : f32
    %463 = vector.broadcast %cst_232 : f32 to vector<32x128xf32>
    %464 = arith.addf %463, %462 : vector<32x128xf32>
    %465 = arith.mulf %451, %464 : vector<32x128xf32>
    %cst_233 = arith.constant 0.000000e+00 : f32
    %466 = vector.broadcast %cst_233 : f32 to vector<32x128xf32>
    %467 = arith.subf %466, %446 : vector<32x128xf32>
    %468 = arith.mulf %467, %446 : vector<32x128xf32>
    %469 = math.exp %468 : vector<32x128xf32>
    %470 = arith.mulf %465, %469 : vector<32x128xf32>
    %cst_234 = arith.constant 1.000000e+00 : f32
    %471 = vector.broadcast %cst_234 : f32 to vector<32x128xf32>
    %472 = arith.subf %471, %470 : vector<32x128xf32>
    %cst_235 = arith.constant 0.000000e+00 : f32
    %473 = vector.broadcast %cst_235 : f32 to vector<32x128xf32>
    %474 = arith.cmpf oge, %445, %473 : vector<32x128xf32>
    %cst_236 = arith.constant 0.000000e+00 : f32
    %475 = vector.broadcast %cst_236 : f32 to vector<32x128xf32>
    %476 = arith.subf %475, %472 : vector<32x128xf32>
    %477 = arith.select %474, %472, %476 : vector<32x128xi1>, vector<32x128xf32>
    %cst_237 = arith.constant 1.000000e+00 : f32
    %478 = vector.broadcast %cst_237 : f32 to vector<32x128xf32>
    %479 = arith.addf %478, %477 : vector<32x128xf32>
    %480 = arith.mulf %443, %479 : vector<32x128xf32>
    %481 = arith.truncf %480 : vector<32x128xf32> to vector<32x128xbf16>
    %c2_238 = arith.constant 2 : index
    %c0_239 = arith.constant 0 : index
    %c0_240 = arith.constant 0 : index
    %482 = vector.load %arg8[%c2_238, %c0_239, %c0_240] : memref<4x32x32xbf16, #tpu.memory_space<vmem>>, vector<1x32x32xbf16>
    %483 = vector.shape_cast %482 : vector<1x32x32xbf16> to vector<32x32xbf16>
    %cst_241 = arith.constant dense<0.000000e+00> : vector<32x128xf32>
    %484 = tpu.matmul %483, %481, %cst_241 {dimension_numbers = #tpu.dot_dimension_numbers<[1], [0], [0], [1], [0, 0, 1, 1], [], []>} : vector<32x32xbf16>, vector<32x128xbf16>, vector<32x128xf32> -> vector<32x128xf32>
    %485 = arith.addf %436, %484 : vector<32x128xf32>
    %c3_242 = arith.constant 3 : index
    %c0_243 = arith.constant 0 : index
    %c0_244 = arith.constant 0 : index
    %486 = vector.load %arg6[%c3_242, %c0_243, %c0_244] : memref<4x32x32xbf16, #tpu.memory_space<vmem>>, vector<1x32x32xbf16>
    %487 = vector.shape_cast %486 : vector<1x32x32xbf16> to vector<32x32xbf16>
    %cst_245 = arith.constant dense<0.000000e+00> : vector<32x128xf32>
    %488 = tpu.matmul %487, %337, %cst_245 {dimension_numbers = #tpu.dot_dimension_numbers<[1], [0], [0], [1], [0, 0, 1, 1], [], []>} : vector<32x32xbf16>, vector<32x128xbf16>, vector<32x128xf32> -> vector<32x128xf32>
    %489 = vector.extract_strided_slice %12 {offsets = [96, 0], sizes = [32, 128], strides = [1, 1]} : vector<128x128xf32> to vector<32x128xf32>
    %490 = arith.addf %488, %489 : vector<32x128xf32>
    %cst_246 = arith.constant 5.000000e-01 : f32
    %491 = vector.broadcast %cst_246 : f32 to vector<32x128xf32>
    %492 = arith.mulf %491, %490 : vector<32x128xf32>
    %cst_247 = arith.constant 0.707106769 : f32
    %493 = vector.broadcast %cst_247 : f32 to vector<32x128xf32>
    %494 = arith.mulf %490, %493 : vector<32x128xf32>
    %495 = math.absf %494 : vector<32x128xf32>
    %cst_248 = arith.constant 0.327591091 : f32
    %496 = vector.broadcast %cst_248 : f32 to vector<32x128xf32>
    %497 = arith.mulf %496, %495 : vector<32x128xf32>
    %cst_249 = arith.constant 1.000000e+00 : f32
    %498 = vector.broadcast %cst_249 : f32 to vector<32x128xf32>
    %499 = arith.addf %498, %497 : vector<32x128xf32>
    %500 = tpu.reciprocal %499 {approx = true} : vector<32x128xf32> -> vector<32x128xf32>
    %cst_250 = arith.constant 1.06140542 : f32
    %501 = vector.broadcast %cst_250 : f32 to vector<32x128xf32>
    %502 = arith.mulf %500, %501 : vector<32x128xf32>
    %cst_251 = arith.constant -1.45315206 : f32
    %503 = vector.broadcast %cst_251 : f32 to vector<32x128xf32>
    %504 = arith.addf %503, %502 : vector<32x128xf32>
    %505 = arith.mulf %500, %504 : vector<32x128xf32>
    %cst_252 = arith.constant 1.42141378 : f32
    %506 = vector.broadcast %cst_252 : f32 to vector<32x128xf32>
    %507 = arith.addf %506, %505 : vector<32x128xf32>
    %508 = arith.mulf %500, %507 : vector<32x128xf32>
    %cst_253 = arith.constant -0.284496725 : f32
    %509 = vector.broadcast %cst_253 : f32 to vector<32x128xf32>
    %510 = arith.addf %509, %508 : vector<32x128xf32>
    %511 = arith.mulf %500, %510 : vector<32x128xf32>
    %cst_254 = arith.constant 0.254829586 : f32
    %512 = vector.broadcast %cst_254 : f32 to vector<32x128xf32>
    %513 = arith.addf %512, %511 : vector<32x128xf32>
    %514 = arith.mulf %500, %513 : vector<32x128xf32>
    %cst_255 = arith.constant 0.000000e+00 : f32
    %515 = vector.broadcast %cst_255 : f32 to vector<32x128xf32>
    %516 = arith.subf %515, %495 : vector<32x128xf32>
    %517 = arith.mulf %516, %495 : vector<32x128xf32>
    %518 = math.exp %517 : vector<32x128xf32>
    %519 = arith.mulf %514, %518 : vector<32x128xf32>
    %cst_256 = arith.constant 1.000000e+00 : f32
    %520 = vector.broadcast %cst_256 : f32 to vector<32x128xf32>
    %521 = arith.subf %520, %519 : vector<32x128xf32>
    %cst_257 = arith.constant 0.000000e+00 : f32
    %522 = vector.broadcast %cst_257 : f32 to vector<32x128xf32>
    %523 = arith.cmpf oge, %494, %522 : vector<32x128xf32>
    %cst_258 = arith.constant 0.000000e+00 : f32
    %524 = vector.broadcast %cst_258 : f32 to vector<32x128xf32>
    %525 = arith.subf %524, %521 : vector<32x128xf32>
    %526 = arith.select %523, %521, %525 : vector<32x128xi1>, vector<32x128xf32>
    %cst_259 = arith.constant 1.000000e+00 : f32
    %527 = vector.broadcast %cst_259 : f32 to vector<32x128xf32>
    %528 = arith.addf %527, %526 : vector<32x128xf32>
    %529 = arith.mulf %492, %528 : vector<32x128xf32>
    %530 = arith.truncf %529 : vector<32x128xf32> to vector<32x128xbf16>
    %c3_260 = arith.constant 3 : index
    %c0_261 = arith.constant 0 : index
    %c0_262 = arith.constant 0 : index
    %531 = vector.load %arg8[%c3_260, %c0_261, %c0_262] : memref<4x32x32xbf16, #tpu.memory_space<vmem>>, vector<1x32x32xbf16>
    %532 = vector.shape_cast %531 : vector<1x32x32xbf16> to vector<32x32xbf16>
    %cst_263 = arith.constant dense<0.000000e+00> : vector<32x128xf32>
    %533 = tpu.matmul %532, %530, %cst_263 {dimension_numbers = #tpu.dot_dimension_numbers<[1], [0], [0], [1], [0, 0, 1, 1], [], []>} : vector<32x32xbf16>, vector<32x128xbf16>, vector<32x128xf32> -> vector<32x128xf32>
    %534 = arith.addf %485, %533 : vector<32x128xf32>
    %c1_264 = arith.constant 1 : index
    %c0_265 = arith.constant 0 : index
    %c0_266 = arith.constant 0 : index
    %535 = vector.load %arg12[%c1_264, %c0_265, %c0_266] : memref<2x32x128xf32, #tpu.memory_space<vmem>>, vector<1x32x128xf32>
    %536 = vector.shape_cast %535 : vector<1x32x128xf32> to vector<32x128xf32>
    %537 = vector.shape_cast %534 : vector<32x128xf32> to vector<1x32x128xf32>
    tpu.vector_store %arg12[%c1_264, %c0_265, %c0_266], %537 {strides = array<i32>} : memref<2x32x128xf32, #tpu.memory_space<vmem>>, vector<1x32x128xf32>,
    return
  }
  func.func @transform_0(%arg0: i32) -> (i32, i32, i32) {
    %c0_i32 = arith.constant 0 : i32
    %c0_i32_0 = arith.constant 0 : i32
    %c0_i32_1 = arith.constant 0 : i32
    return %c0_i32, %c0_i32_0, %arg0 : i32, i32, i32
  }
  func.func @transform_1(%arg0: i32) -> (i32, i32) {
    %c0_i32 = arith.constant 0 : i32
    %c0_i32_0 = arith.constant 0 : i32
    %c0_i32_1 = arith.constant 0 : i32
    return %c0_i32, %c0_i32_0 : i32, i32
  }
  func.func @transform_2(%arg0: i32) -> (i32, i32) {
    %c0_i32 = arith.constant 0 : i32
    %c0_i32_0 = arith.constant 0 : i32
    %c0_i32_1 = arith.constant 0 : i32
    return %c0_i32, %c0_i32_0 : i32, i32
  }
  func.func @transform_3(%arg0: i32) -> (i32, i32) {
    %c0_i32 = arith.constant 0 : i32
    %c0_i32_0 = arith.constant 0 : i32
    %c0_i32_1 = arith.constant 0 : i32
    return %c0_i32, %c0_i32_0 : i32, i32
  }
  func.func @transform_4(%arg0: i32) -> (i32, i32) {
    %c0_i32 = arith.constant 0 : i32
    %c0_i32_0 = arith.constant 0 : i32
    %c0_i32_1 = arith.constant 0 : i32
    return %c0_i32, %c0_i32_0 : i32, i32
  }
  func.func @transform_5(%arg0: i32) -> (i32, i32, i32) {
    %c0_i32 = arith.constant 0 : i32
    %c0_i32_0 = arith.constant 0 : i32
    %c0_i32_1 = arith.constant 0 : i32
    %c0_i32_2 = arith.constant 0 : i32
    return %c0_i32, %c0_i32_0, %c0_i32_1 : i32, i32, i32
  }
  func.func @transform_6(%arg0: i32) -> (i32, i32) {
    %c0_i32 = arith.constant 0 : i32
    %c0_i32_0 = arith.constant 0 : i32
    %c0_i32_1 = arith.constant 0 : i32
    return %c0_i32, %c0_i32_0 : i32, i32
  }
  func.func @transform_7(%arg0: i32) -> (i32, i32, i32) {
    %c0_i32 = arith.constant 0 : i32
    %c0_i32_0 = arith.constant 0 : i32
    %c0_i32_1 = arith.constant 0 : i32
    %c0_i32_2 = arith.constant 0 : i32
    return %c0_i32, %c0_i32_0, %c0_i32_1 : i32, i32, i32
  }
  func.func @transform_8(%arg0: i32) -> (i32, i32) {
    %c0_i32 = arith.constant 0 : i32
    %c0_i32_0 = arith.constant 0 : i32
    %c0_i32_1 = arith.constant 0 : i32
    return %c0_i32, %c0_i32_0 : i32, i32
  }
  func.func @transform_9(%arg0: i32) -> (i32, i32) {
    %c0_i32 = arith.constant 0 : i32
    %c0_i32_0 = arith.constant 0 : i32
    %c0_i32_1 = arith.constant 0 : i32
    return %c0_i32, %c0_i32_0 : i32, i32
  }
  func.func @transform_10(%arg0: i32) -> (i32, i32) {
    %c0_i32 = arith.constant 0 : i32
    %c0_i32_0 = arith.constant 0 : i32
    %c0_i32_1 = arith.constant 0 : i32
    return %c0_i32, %c0_i32_0 : i32, i32
  }
  func.func @transform_11(%arg0: i32) -> (i32, i32, i32) {
    %c0_i32 = arith.constant 0 : i32
    %c0_i32_0 = arith.constant 0 : i32
    %c0_i32_1 = arith.constant 0 : i32
    return %c0_i32, %c0_i32_0, %arg0 : i32, i32, i32
  }
}

</mosaic_0001>

<llo_original>
// kernel: tpu_custom_call.1
$region0: #{tpu_custom_call.1}
  #allocation0 [shape = 'u32[]', space=smem, size = 0x4, offset = 0x4, fixed_abs, tag = 'smem constant byte address 0x4 - core index']
  #allocation1 [shape = 'u32[144,128]{1,0:T(1,128)}', space=vmem, size = 0x12000, scoped, tag = 'internal scratch']
  #allocation2 [shape = 'f32[2,32,128]{2,1,0:T(8,128)}', space=vmem, size = 0x8000, scoped, tag = 'scratch operand']
  #allocation3 [shape = 'bf16[2,32,128]{2,1,0:T(16,128)(2,1)}', space=vmem, size = 0x4000, scoped, tag = 'scratch operand']
  #allocation4 [shape = 'f32[2,32,128]{2,1,0:T(8,128)}', space=vmem, size = 0x8000, scoped, tag = 'scratch operand']
  %s0 = inlined_call_operand.vmem [shape: f32[2,32,512], index: 0, kind: input, shape index: {}]
  %s1 = inlined_call_operand.vmem [shape: bf16[96,32], index: 1, kind: input, shape index: {}]
  %s2 = inlined_call_operand.vmem [shape: f32[96,1], index: 2, kind: input, shape index: {}]
  %s3 = inlined_call_operand.hbm [shape: bf16[32,32], index: 3, kind: input, shape index: {}]
  %s4 = inlined_call_operand.vmem [shape: f32[32,1], index: 4, kind: input, shape index: {}]
  %s5 = inlined_call_operand.vmem [shape: bf16[4,32,32], index: 5, kind: input, shape index: {}]
  %s6 = inlined_call_operand.vmem [shape: f32[128,1], index: 6, kind: input, shape index: {}]
  %s7 = inlined_call_operand.vmem [shape: bf16[4,32,32], index: 7, kind: input, shape index: {}]
  %s8 = inlined_call_operand.vmem [shape: f32[32,1], index: 8, kind: input, shape index: {}]
  %s9 = inlined_call_operand.vmem [shape: bf16[8,32], index: 9, kind: input, shape index: {}]
  %s10 = inlined_call_operand.vmem [shape: bf16[32,8], index: 10, kind: input, shape index: {}]
  %s11 = inlined_call_operand.hbm [shape: f32[2,32,512], index: 11, kind: output, shape index: {}]
  %s12 = sld [smem:[#allocation0]]
  $region119: #{tpu_custom_call.1} parent=0
    _
  %s14 = ssub.s32 1, %s12
  %s15 = scalar_select 0, %s14, %s12
  $region1: #{tpu_custom_call.1} parent=0
    #allocation5 [shape = 'u8[65536]{0}', space=vmem, size = 0x10000, scoped, tag = 'input window, operand 0']
    #allocation6 [shape = 'u8[8192]{0}', space=vmem, size = 0x2000, scoped, tag = 'input window, operand 3, single buffered']
    #allocation7 [shape = 's32[2]{0}', space=sflag, size = 0x8, scoped, tag = 'scoped memory for tpu_custom_call.1']
    #allocation8 [shape = 's32[2]{0}', space=sflag, size = 0x8, scoped, tag = 'scoped memory for tpu_custom_call.1']
    #allocation9 [shape = 'u8[65536]{0}', space=vmem, size = 0x10000, scoped, tag = 'output window, operand 0']
    %16 = vsyncpa [#allocation7], 0
    %17 = vsyncpa [#allocation8], 0
    %s18 = scalar_lea.sflag [#allocation8], 1
    %19 = vsyncpa %s18, 0
    loop: start=0, step=1, limit=6
    $region2: #{tpu_custom_call.1} parent=1 // loop_pre_header
      _
    $region3: #{tpu_custom_call.1} parent=1 // loop_header
      %s21 = sphi 0, %s25
      %p22 = scmp.ge.s32.totalorder %s21, 6
      %s31 = sphi 0, %s33
      %s34 = sphi 0, %s31
      %s35 = sphi 0, %s34
      %s51 = sphi 0, %s35
      %s55 = sphi 0, %s55
      %s57 = sphi 0, %s55
      %s58 = sphi 0, %s57
      %s72 = sphi 0, %s58
      %s76 = sphi 0, %s76
      %s78 = sphi 0, %s76
      %s79 = sphi 0, %s78
      %s93 = sphi 0, %s79
      %s97 = sphi 0, %s97
      %s99 = sphi 0, %s97
      %s100 = sphi 0, %s99
      %s114 = sphi 0, %s100
      %s118 = sphi 0, %s118
      %s120 = sphi 0, %s118
      %s121 = sphi 0, %s120
      %s135 = sphi 0, %s121
      %s139 = sphi 0, %s139
      %s141 = sphi 0, %s139
      %s142 = sphi 0, %s141
      %s156 = sphi 0, %s142
      %s160 = sphi 0, %s160
      %s162 = sphi 0, %s160
      %s163 = sphi 0, %s162
      %s177 = sphi 0, %s163
      %s181 = sphi 0, %s181
      %s183 = sphi 0, %s181
      %s184 = sphi 0, %s183
      %s198 = sphi 0, %s184
      %s202 = sphi 0, %s202
      %s204 = sphi 0, %s202
      %s205 = sphi 0, %s204
      %s219 = sphi 0, %s205
      %s223 = sphi 0, %s223
      %s225 = sphi 0, %s223
      %s226 = sphi 0, %s225
      %s240 = sphi 0, %s226
      %s244 = sphi 0, %s244
      %s246 = sphi 0, %s244
      %s247 = sphi 0, %s246
      %s261 = sphi 0, %s247
      %s267 = sphi 0, %s269
      %s270 = sphi 0, %s267
      %s271 = sphi 0, %s270
      %s287 = sphi 0, %s271
    $region4: #{tpu_custom_call.1} parent=1 // loop_header_branch
      %24 = sbr.rel (%p22) target = $region8
    $region5: #{tpu_custom_call.1} parent=1 // loop_body
      %s26 = ssub.s32 %s21, 1
      %s27 = ssub.s32 %s21, 2
      %s28 = sadd.s32 %s21, 1
      %s29 = ssub.s32 %s21, %s28
      %p30 = scmp.eq.s32.totalorder %s29, 0
      %s32 = sadd.s32 %s31, 1
      %s33 = scalar_select %p30, %s31, %s32
      %p36 = pneg %p30
      %p37 = scmp.eq.s32.totalorder %s21, 3
      %p38 = por %p36, %p37
      %p39 = scmp.ne.s32.totalorder %s31, %s34
      %p40 = scmp.eq.s32.totalorder %s21, 0
      %p41 = por %p39, %p40
      %p42 = scmp.ne.s32.totalorder %s31, %s34
      %p43 = scmp.eq.s32.totalorder %s26, 3
      %p44 = por %p42, %p43
      %p45 = scmp.ne.s32.totalorder %s34, %s35
      %p46 = scmp.eq.s32.totalorder %s26, 0
      %p47 = por %p45, %p46
      %p48 = scmp.ne.s32.totalorder %s34, %s35
      %p49 = scmp.eq.s32.totalorder %s27, 3
      %p50 = por %p48, %p49
      %p52 = scmp.ne.s32.totalorder %s35, %s51
      %p53 = scmp.eq.s32.totalorder %s27, 0
      %p54 = por %p52, %p53
      %s56 = sadd.s32 %s55, 1
      %p59 = scmp.eq.s32.totalorder %s21, 3
      %p60 = scmp.ne.s32.totalorder %s55, %s57
      %p61 = scmp.eq.s32.totalorder %s21, 0
      %p62 = por %p60, %p61
      %p63 = scmp.ne.s32.totalorder %s55, %s57
      %p64 = scmp.eq.s32.totalorder %s26, 3
      %p65 = por %p63, %p64
      %p66 = scmp.ne.s32.totalorder %s57, %s58
      %p67 = scmp.eq.s32.totalorder %s26, 0
      %p68 = por %p66, %p67
      %p69 = scmp.ne.s32.totalorder %s57, %s58
      %p70 = scmp.eq.s32.totalorder %s27, 3
      %p71 = por %p69, %p70
      %p73 = scmp.ne.s32.totalorder %s58, %s72
      %p74 = scmp.eq.s32.totalorder %s27, 0
      %p75 = por %p73, %p74
      %s77 = sadd.s32 %s76, 1
      %p80 = scmp.eq.s32.totalorder %s21, 3
      %p81 = scmp.ne.s32.totalorder %s76, %s78
      %p82 = scmp.eq.s32.totalorder %s21, 0
      %p83 = por %p81, %p82
      %p84 = scmp.ne.s32.totalorder %s76, %s78
      %p85 = scmp.eq.s32.totalorder %s26, 3
      %p86 = por %p84, %p85
      %p87 = scmp.ne.s32.totalorder %s78, %s79
      %p88 = scmp.eq.s32.totalorder %s26, 0
      %p89 = por %p87, %p88
      %p90 = scmp.ne.s32.totalorder %s78, %s79
      %p91 = scmp.eq.s32.totalorder %s27, 3
      %p92 = por %p90, %p91
      %p94 = scmp.ne.s32.totalorder %s79, %s93
      %p95 = scmp.eq.s32.totalorder %s27, 0
      %p96 = por %p94, %p95
      %s98 = sadd.s32 %s97, 1
      %p101 = scmp.eq.s32.totalorder %s21, 3
      %p102 = scmp.ne.s32.totalorder %s97, %s99
      %p103 = scmp.eq.s32.totalorder %s21, 0
      %p104 = por %p102, %p103
      %p105 = scmp.ne.s32.totalorder %s97, %s99
      %p106 = scmp.eq.s32.totalorder %s26, 3
      %p107 = por %p105, %p106
      %p108 = scmp.ne.s32.totalorder %s99, %s100
      %p109 = scmp.eq.s32.totalorder %s26, 0
      %p110 = por %p108, %p109
      %p111 = scmp.ne.s32.totalorder %s99, %s100
      %p112 = scmp.eq.s32.totalorder %s27, 3
      %p113 = por %p111, %p112
      %p115 = scmp.ne.s32.totalorder %s100, %s114
      %p116 = scmp.eq.s32.totalorder %s27, 0
      %p117 = por %p115, %p116
      %s119 = sadd.s32 %s118, 1
      %p122 = scmp.eq.s32.totalorder %s21, 3
      %p123 = scmp.ne.s32.totalorder %s118, %s120
      %p124 = scmp.eq.s32.totalorder %s21, 0
      %p125 = por %p123, %p124
      %p126 = scmp.ne.s32.totalorder %s118, %s120
      %p127 = scmp.eq.s32.totalorder %s26, 3
      %p128 = por %p126, %p127
      %p129 = scmp.ne.s32.totalorder %s120, %s121
      %p130 = scmp.eq.s32.totalorder %s26, 0
      %p131 = por %p129, %p130
      %p132 = scmp.ne.s32.totalorder %s120, %s121
      %p133 = scmp.eq.s32.totalorder %s27, 3
      %p134 = por %p132, %p133
      %p136 = scmp.ne.s32.totalorder %s121, %s135
      %p137 = scmp.eq.s32.totalorder %s27, 0
      %p138 = por %p136, %p137
      %s140 = sadd.s32 %s139, 1
      %p143 = scmp.eq.s32.totalorder %s21, 3
      %p144 = scmp.ne.s32.totalorder %s139, %s141
      %p145 = scmp.eq.s32.totalorder %s21, 0
      %p146 = por %p144, %p145
      %p147 = scmp.ne.s32.totalorder %s139, %s141
      %p148 = scmp.eq.s32.totalorder %s26, 3
      %p149 = por %p147, %p148
      %p150 = scmp.ne.s32.totalorder %s141, %s142
      %p151 = scmp.eq.s32.totalorder %s26, 0
      %p152 = por %p150, %p151
      %p153 = scmp.ne.s32.totalorder %s141, %s142
      %p154 = scmp.eq.s32.totalorder %s27, 3
      %p155 = por %p153, %p154
      %p157 = scmp.ne.s32.totalorder %s142, %s156
      %p158 = scmp.eq.s32.totalorder %s27, 0
      %p159 = por %p157, %p158
      %s161 = sadd.s32 %s160, 1
      %p164 = scmp.eq.s32.totalorder %s21, 3
      %p165 = scmp.ne.s32.totalorder %s160, %s162
      %p166 = scmp.eq.s32.totalorder %s21, 0
      %p167 = por %p165, %p166
      %p168 = scmp.ne.s32.totalorder %s160, %s162
      %p169 = scmp.eq.s32.totalorder %s26, 3
      %p170 = por %p168, %p169
      %p171 = scmp.ne.s32.totalorder %s162, %s163
      %p172 = scmp.eq.s32.totalorder %s26, 0
      %p173 = por %p171, %p172
      %p174 = scmp.ne.s32.totalorder %s162, %s163
      %p175 = scmp.eq.s32.totalorder %s27, 3
      %p176 = por %p174, %p175
      %p178 = scmp.ne.s32.totalorder %s163, %s177
      %p179 = scmp.eq.s32.totalorder %s27, 0
      %p180 = por %p178, %p179
      %s182 = sadd.s32 %s181, 1
      %p185 = scmp.eq.s32.totalorder %s21, 3
      %p186 = scmp.ne.s32.totalorder %s181, %s183
      %p187 = scmp.eq.s32.totalorder %s21, 0
      %p188 = por %p186, %p187
      %p189 = scmp.ne.s32.totalorder %s181, %s183
      %p190 = scmp.eq.s32.totalorder %s26, 3
      %p191 = por %p189, %p190
      %p192 = scmp.ne.s32.totalorder %s183, %s184
      %p193 = scmp.eq.s32.totalorder %s26, 0
      %p194 = por %p192, %p193
      %p195 = scmp.ne.s32.totalorder %s183, %s184
      %p196 = scmp.eq.s32.totalorder %s27, 3
      %p197 = por %p195, %p196
      %p199 = scmp.ne.s32.totalorder %s184, %s198
      %p200 = scmp.eq.s32.totalorder %s27, 0
      %p201 = por %p199, %p200
      %s203 = sadd.s32 %s202, 1
      %p206 = scmp.eq.s32.totalorder %s21, 3
      %p207 = scmp.ne.s32.totalorder %s202, %s204
      %p208 = scmp.eq.s32.totalorder %s21, 0
      %p209 = por %p207, %p208
      %p210 = scmp.ne.s32.totalorder %s202, %s204
      %p211 = scmp.eq.s32.totalorder %s26, 3
      %p212 = por %p210, %p211
      %p213 = scmp.ne.s32.totalorder %s204, %s205
      %p214 = scmp.eq.s32.totalorder %s26, 0
      %p215 = por %p213, %p214
      %p216 = scmp.ne.s32.totalorder %s204, %s205
      %p217 = scmp.eq.s32.totalorder %s27, 3
      %p218 = por %p216, %p217
      %p220 = scmp.ne.s32.totalorder %s205, %s219
      %p221 = scmp.eq.s32.totalorder %s27, 0
      %p222 = por %p220, %p221
      %s224 = sadd.s32 %s223, 1
      %p227 = scmp.eq.s32.totalorder %s21, 3
      %p228 = scmp.ne.s32.totalorder %s223, %s225
      %p229 = scmp.eq.s32.totalorder %s21, 0
      %p230 = por %p228, %p229
      %p231 = scmp.ne.s32.totalorder %s223, %s225
      %p232 = scmp.eq.s32.totalorder %s26, 3
      %p233 = por %p231, %p232
      %p234 = scmp.ne.s32.totalorder %s225, %s226
      %p235 = scmp.eq.s32.totalorder %s26, 0
      %p236 = por %p234, %p235
      %p237 = scmp.ne.s32.totalorder %s225, %s226
      %p238 = scmp.eq.s32.totalorder %s27, 3
      %p239 = por %p237, %p238
      %p241 = scmp.ne.s32.totalorder %s226, %s240
      %p242 = scmp.eq.s32.totalorder %s27, 0
      %p243 = por %p241, %p242
      %s245 = sadd.s32 %s244, 1
      %p248 = scmp.eq.s32.totalorder %s21, 3
      %p249 = scmp.ne.s32.totalorder %s244, %s246
      %p250 = scmp.eq.s32.totalorder %s21, 0
      %p251 = por %p249, %p250
      %p252 = scmp.ne.s32.totalorder %s244, %s246
      %p253 = scmp.eq.s32.totalorder %s26, 3
      %p254 = por %p252, %p253
      %p255 = scmp.ne.s32.totalorder %s246, %s247
      %p256 = scmp.eq.s32.totalorder %s26, 0
      %p257 = por %p255, %p256
      %p258 = scmp.ne.s32.totalorder %s246, %s247
      %p259 = scmp.eq.s32.totalorder %s27, 3
      %p260 = por %p258, %p259
      %p262 = scmp.ne.s32.totalorder %s247, %s261
      %p263 = scmp.eq.s32.totalorder %s27, 0
      %p264 = por %p262, %p263
      %s265 = ssub.s32 %s21, %s28
      %p266 = scmp.eq.s32.totalorder %s265, 0
      %s268 = sadd.s32 %s267, 1
      %s269 = scalar_select %p266, %s267, %s268
      %p272 = pneg %p266
      %p273 = scmp.eq.s32.totalorder %s21, 3
      %p274 = por %p272, %p273
      %p275 = scmp.ne.s32.totalorder %s267, %s270
      %p276 = scmp.eq.s32.totalorder %s21, 0
      %p277 = por %p275, %p276
      %p278 = scmp.ne.s32.totalorder %s267, %s270
      %p279 = scmp.eq.s32.totalorder %s26, 3
      %p280 = por %p278, %p279
      %p281 = scmp.ne.s32.totalorder %s270, %s271
      %p282 = scmp.eq.s32.totalorder %s26, 0
      %p283 = por %p281, %p282
      %p284 = scmp.ne.s32.totalorder %s270, %s271
      %p285 = scmp.eq.s32.totalorder %s27, 3
      %p286 = por %p284, %p285
      %p288 = scmp.ne.s32.totalorder %s271, %s287
      %p289 = scmp.eq.s32.totalorder %s27, 0
      %p290 = por %p288, %p289
      %p291 = scmp.le.s32.totalorder 1, %s21
      %p292 = scmp.lt.s32.totalorder %s21, 5
      %p293 = pnand %p291, %p292
      %p294 = pneg %p293
      // Predicated region
      $region9: #{tpu_custom_call.1} parent=5 // pred_check
        _
      $region10: #{tpu_custom_call.1} parent=5 // pred_check_branch
        %296 = sbr.rel (%p293) target = $region12
      $region11: #{tpu_custom_call.1} parent=5 // pred_region
        %s297 = ssub.s32 %s21, 1
        // Predicated region
        $region13: #{tpu_custom_call.1} parent=11 // pred_check
          %p298 = pneg %p68
        $region14: #{tpu_custom_call.1} parent=11 // pred_check_branch
          %300 = sbr.rel (%p298) target = $region16
        $region15: #{tpu_custom_call.1} parent=11 // pred_region
          _
        $region16: #{tpu_custom_call.1} parent=11 // pred_fallthru
          _
        // Predicated region
        $region17: #{tpu_custom_call.1} parent=11 // pred_check
          %p301 = pneg %p89
        $region18: #{tpu_custom_call.1} parent=11 // pred_check_branch
          %303 = sbr.rel (%p301) target = $region20
        $region19: #{tpu_custom_call.1} parent=11 // pred_region
          _
        $region20: #{tpu_custom_call.1} parent=11 // pred_fallthru
          _
        // Predicated region
        $region21: #{tpu_custom_call.1} parent=11 // pred_check
          %p304 = pneg %p110
        $region22: #{tpu_custom_call.1} parent=11 // pred_check_branch
          %306 = sbr.rel (%p304) target = $region24
        $region23: #{tpu_custom_call.1} parent=11 // pred_region
          %s308 = ssub.s32 256, 256
          %309 = vsyncadd [#allocation7], %s308
          %s310 = sshll.u32 [#allocation6], 4
          %s311 = int_to_ptr.vmem [resolvable:$true] %s310
          %316 = dma.hbm_to_vmem [thread:$0]  %s3, 256, %s311, [#allocation7], 64, 64, 4
        $region24: #{tpu_custom_call.1} parent=11 // pred_fallthru
          _
        // Predicated region
        $region25: #{tpu_custom_call.1} parent=11 // pred_check
          %p317 = pneg %p131
        $region26: #{tpu_custom_call.1} parent=11 // pred_check_branch
          %319 = sbr.rel (%p317) target = $region28
        $region27: #{tpu_custom_call.1} parent=11 // pred_region
          _
        $region28: #{tpu_custom_call.1} parent=11 // pred_fallthru
          _
        // Predicated region
        $region29: #{tpu_custom_call.1} parent=11 // pred_check
          %p320 = pneg %p152
        $region30: #{tpu_custom_call.1} parent=11 // pred_check_branch
          %322 = sbr.rel (%p320) target = $region32
        $region31: #{tpu_custom_call.1} parent=11 // pred_region
          _
        $region32: #{tpu_custom_call.1} parent=11 // pred_fallthru
          _
        // Predicated region
        $region33: #{tpu_custom_call.1} parent=11 // pred_check
          %p323 = pneg %p173
        $region34: #{tpu_custom_call.1} parent=11 // pred_check_branch
          %325 = sbr.rel (%p323) target = $region36
        $region35: #{tpu_custom_call.1} parent=11 // pred_region
          _
        $region36: #{tpu_custom_call.1} parent=11 // pred_fallthru
          _
        // Predicated region
        $region37: #{tpu_custom_call.1} parent=11 // pred_check
          %p326 = pneg %p194
        $region38: #{tpu_custom_call.1} parent=11 // pred_check_branch
          %328 = sbr.rel (%p326) target = $region40
        $region39: #{tpu_custom_call.1} parent=11 // pred_region
          _
        $region40: #{tpu_custom_call.1} parent=11 // pred_fallthru
          _
        // Predicated region
        $region41: #{tpu_custom_call.1} parent=11 // pred_check
          %p329 = pneg %p215
        $region42: #{tpu_custom_call.1} parent=11 // pred_check_branch
          %331 = sbr.rel (%p329) target = $region44
        $region43: #{tpu_custom_call.1} parent=11 // pred_region
          _
        $region44: #{tpu_custom_call.1} parent=11 // pred_fallthru
          _
        // Predicated region
        $region45: #{tpu_custom_call.1} parent=11 // pred_check
          %p332 = pneg %p236
        $region46: #{tpu_custom_call.1} parent=11 // pred_check_branch
          %334 = sbr.rel (%p332) target = $region48
        $region47: #{tpu_custom_call.1} parent=11 // pred_region
          _
        $region48: #{tpu_custom_call.1} parent=11 // pred_fallthru
          _
        // Predicated region
        $region49: #{tpu_custom_call.1} parent=11 // pred_check
          %p335 = pneg %p257
        $region50: #{tpu_custom_call.1} parent=11 // pred_check_branch
          %337 = sbr.rel (%p335) target = $region52
        $region51: #{tpu_custom_call.1} parent=11 // pred_region
          _
        $region52: #{tpu_custom_call.1} parent=11 // pred_fallthru
          _
      $region12: #{tpu_custom_call.1} parent=5 // pred_fallthru
        _
      %p338 = scmp.lt.s32.totalorder %s21, 4
      // Predicated region
      $region53: #{tpu_custom_call.1} parent=5 // pred_check
        %p339 = pneg %p338
      $region54: #{tpu_custom_call.1} parent=5 // pred_check_branch
        %341 = sbr.rel (%p339) target = $region56
      $region55: #{tpu_custom_call.1} parent=5 // pred_region
        // Predicated region
        $region57: #{tpu_custom_call.1} parent=55 // pred_check
          %p342 = pneg %p41
        $region58: #{tpu_custom_call.1} parent=55 // pred_check_branch
          %344 = sbr.rel (%p342) target = $region60
        $region59: #{tpu_custom_call.1} parent=55 // pred_region
          %s345 = sand.u32 %s31, 1
          %s346 = sand.u32 %s31, 1
          %s347 = smul.addr %s346, 64
          %s348 = scalar_lea.vmem [#allocation5], %s347
          %s349 = smul.addr %s21, 8
          %s350 = scalar_lea.vmem %s0, %s349
          // Predicated region
          $region61: #{tpu_custom_call.1} parent=59 // pred_check
            _
          $region62: #{tpu_custom_call.1} parent=59 // pred_check_branch
            %352 = sbr.rel (0) target = $region64
          $region63: #{tpu_custom_call.1} parent=59 // pred_region
            // Predicated region
            $region65: #{tpu_custom_call.1} parent=63 // pred_check
              _
            $region66: #{tpu_custom_call.1} parent=63 // pred_check_branch
              %354 = sbr.rel (0) target = $region68
            $region67: #{tpu_custom_call.1} parent=63 // pred_region
              // Predicated region
              $region80: #{tpu_custom_call.1} parent=67 // pred_check
                _
              $region81: #{tpu_custom_call.1} parent=67 // pred_check_branch
                %383 = sbr.rel (0) target = $region83
              $region82: #{tpu_custom_call.1} parent=67 // pred_region
                loop: start=0, step=1, limit=1
                $region84: #{tpu_custom_call.1} parent=82 // loop_pre_header
                  _
                $region85: #{tpu_custom_call.1} parent=82 // loop_header
                  %s385 = sphi 0, %s389
                  %p386 = scmp.ge.s32.totalorder %s385, 1
                  %s390 = sphi %s350, %s350
                  %s391 = sphi %s348, %s348
                $region86: #{tpu_custom_call.1} parent=82 // loop_header_branch
                  %388 = sbr.rel (%p386) target = $region90
                $region87: #{tpu_custom_call.1} parent=82 // loop_body
                  %v392 = vld [vmem:[%s390] sm:$0xff]
                  %393 = vst [vmem:[%s391] sm:$0xff] %v392
                  %v394 = vld [vmem:[%s390 + $0x20] sm:$0xff]
                  %395 = vst [vmem:[%s391 + $0x8] sm:$0xff] %v394
                  %v396 = vld [vmem:[%s390 + $0x40] sm:$0xff]
                  %397 = vst [vmem:[%s391 + $0x10] sm:$0xff] %v396
                  %v398 = vld [vmem:[%s390 + $0x60] sm:$0xff]
                  %399 = vst [vmem:[%s391 + $0x18] sm:$0xff] %v398
                  %v400 = vld [vmem:[%s390 + $0x80] sm:$0xff]
                  %401 = vst [vmem:[%s391 + $0x20] sm:$0xff] %v400
                  %v402 = vld [vmem:[%s390 + $0xa0] sm:$0xff]
                  %403 = vst [vmem:[%s391 + $0x28] sm:$0xff] %v402
                  %v404 = vld [vmem:[%s390 + $0xc0] sm:$0xff]
                  %405 = vst [vmem:[%s391 + $0x30] sm:$0xff] %v404
                  %v406 = vld [vmem:[%s390 + $0xe0] sm:$0xff]
                  %407 = vst [vmem:[%s391 + $0x38] sm:$0xff] %v406
                $region88: #{tpu_custom_call.1} parent=82 // loop_footer
                  %s389 = sadd.s32 1, %s385
                $region89: #{tpu_custom_call.1} parent=82 // loop_footer_branch
                  %384 = sbr.rel target = $region85
                $region90: #{tpu_custom_call.1} parent=82 // loop_exit
                  _
              $region83: #{tpu_custom_call.1} parent=67 // pred_fallthru
                _
              // Predicated region
              $region91: #{tpu_custom_call.1} parent=67 // pred_check
                _
              $region92: #{tpu_custom_call.1} parent=67 // pred_check_branch
                %409 = sbr.rel target = $region94
              $region93: #{tpu_custom_call.1} parent=67 // pred_region
                _
              $region94: #{tpu_custom_call.1} parent=67 // pred_fallthru
                _
            $region68: #{tpu_custom_call.1} parent=63 // pred_fallthru
              _
            // Predicated region
            $region69: #{tpu_custom_call.1} parent=63 // pred_check
              _
            $region70: #{tpu_custom_call.1} parent=63 // pred_check_branch
              %356 = sbr.rel target = $region72
            $region71: #{tpu_custom_call.1} parent=63 // pred_region
              loop: start=0, step=1, limit=1
              $region73: #{tpu_custom_call.1} parent=71 // loop_pre_header
                _
              $region74: #{tpu_custom_call.1} parent=71 // loop_header
                %s359 = sphi 0, %s363
                %p360 = scmp.ge.s32.totalorder %s359, 1
                %s364 = sphi %s350, %s350
                %s365 = sphi %s348, %s348
              $region75: #{tpu_custom_call.1} parent=71 // loop_header_branch
                %362 = sbr.rel (%p360) target = $region79
              $region76: #{tpu_custom_call.1} parent=71 // loop_body
                %v366 = vld [vmem:[%s364] sm:$0xff]
                %367 = vst [vmem:[%s365] sm:$0xff] %v366
                %v368 = vld [vmem:[%s364 + $0x20] sm:$0xff]
                %369 = vst [vmem:[%s365 + $0x8] sm:$0xff] %v368
                %v370 = vld [vmem:[%s364 + $0x40] sm:$0xff]
                %371 = vst [vmem:[%s365 + $0x10] sm:$0xff] %v370
                %v372 = vld [vmem:[%s364 + $0x60] sm:$0xff]
                %373 = vst [vmem:[%s365 + $0x18] sm:$0xff] %v372
                %v374 = vld [vmem:[%s364 + $0x80] sm:$0xff]
                %375 = vst [vmem:[%s365 + $0x20] sm:$0xff] %v374
                %v376 = vld [vmem:[%s364 + $0xa0] sm:$0xff]
                %377 = vst [vmem:[%s365 + $0x28] sm:$0xff] %v376
                %v378 = vld [vmem:[%s364 + $0xc0] sm:$0xff]
                %379 = vst [vmem:[%s365 + $0x30] sm:$0xff] %v378
                %v380 = vld [vmem:[%s364 + $0xe0] sm:$0xff]
                %381 = vst [vmem:[%s365 + $0x38] sm:$0xff] %v380
              $region77: #{tpu_custom_call.1} parent=71 // loop_footer
                %s363 = sadd.s32 1, %s359
              $region78: #{tpu_custom_call.1} parent=71 // loop_footer_branch
                %358 = sbr.rel target = $region74
              $region79: #{tpu_custom_call.1} parent=71 // loop_exit
                _
            $region72: #{tpu_custom_call.1} parent=63 // pred_fallthru
              _
          $region64: #{tpu_custom_call.1} parent=59 // pred_fallthru
            _
          %410 = vnop
        $region60: #{tpu_custom_call.1} parent=55 // pred_fallthru
          _
      $region56: #{tpu_custom_call.1} parent=5 // pred_fallthru
        _
      %p411 = scmp.le.s32.totalorder 1, %s21
      %p412 = scmp.lt.s32.totalorder %s21, 5
      %p413 = pnand %p411, %p412
      %p414 = pneg %p413
      // Predicated region
      $region95: #{tpu_custom_call.1} parent=5 // pred_check
        _
      $region96: #{tpu_custom_call.1} parent=5 // pred_check_branch
        %416 = sbr.rel (%p413) target = $region98
      $region97: #{tpu_custom_call.1} parent=5 // pred_region
        %s417 = ssub.s32 %s21, 1
        %s418 = sand.u32 %s34, 1
        %s419 = sand.u32 %s34, 1
        %s420 = smul.addr %s419, 64
        %s421 = scalar_lea.vmem [#allocation5], %s420
        // Predicated region
        $region99: #{tpu_custom_call.1} parent=97 // pred_check
          %p422 = pneg %p47
        $region100: #{tpu_custom_call.1} parent=97 // pred_check_branch
          %424 = sbr.rel (%p422) target = $region102
        $region101: #{tpu_custom_call.1} parent=97 // pred_region
          _
        $region102: #{tpu_custom_call.1} parent=97 // pred_fallthru
          _
        // Predicated region
        $region103: #{tpu_custom_call.1} parent=97 // pred_check
          %p425 = pneg %p110
        $region104: #{tpu_custom_call.1} parent=97 // pred_check_branch
          %427 = sbr.rel (%p425) target = $region106
        $region105: #{tpu_custom_call.1} parent=97 // pred_region
          %428 = dma.done [#allocation7], 256
        $region106: #{tpu_custom_call.1} parent=97 // pred_fallthru
          _
        %s429 = sand.u32 %s34, 1
        %s430 = sand.u32 %s34, 1
        %s431 = smul.addr %s430, 64
        %s432 = scalar_lea.vmem [#allocation5], %s431
        %p433 = pneg %p47
        %p434 = pneg %p44
        %p435 = pneg %p68
        %p436 = pneg %p65
        %p437 = pneg %p89
        %p438 = pneg %p86
        %p439 = pneg %p110
        %p440 = pneg %p107
        %p441 = pneg %p131
        %p442 = pneg %p128
        %p443 = pneg %p152
        %p444 = pneg %p149
        %p445 = pneg %p173
        %p446 = pneg %p170
        %p447 = pneg %p194
        %p448 = pneg %p191
        %p449 = pneg %p215
        %p450 = pneg %p212
        %p451 = pneg %p236
        %p452 = pneg %p233
        %p453 = pneg %p257
        %p454 = pneg %p254
        %p455 = pneg %p283
        %p456 = pneg %p280
        %s457 = sand.u32 %s270, 1
        %s458 = scalar_lea.sflag [#allocation8], %s457
        %s459 = sand.u32 %s270, 1
        %s460 = smul.addr %s459, 64
        %s461 = scalar_lea.vmem [#allocation9], %s460
        %v463 = vld [vmem:[%s1] sm:$0xf]
        %v464 = vld [vmem:[%s1 + $0x4] sm:$0xf]
        %v465 = vld [vmem:[%s1 + $0x8] sm:$0xf]
        %v466 = vld [vmem:[%s1 + $0xc] sm:$0xf]
        %v467 = vld [vmem:[%s1 + $0x10] sm:$0xf]
        %v468 = vld [vmem:[%s1 + $0x14] sm:$0xf]
        %v469 = vld [vmem:[%s1 + $0x18] sm:$0xf]
        %v470 = vld [vmem:[%s1 + $0x1c] sm:$0xf]
        %v471 = vld [vmem:[%s1 + $0x20] sm:$0xf]
        %v472 = vld [vmem:[%s1 + $0x24] sm:$0xf]
        %v473 = vld [vmem:[%s1 + $0x28] sm:$0xf]
        %v474 = vld [vmem:[%s1 + $0x2c] sm:$0xf]
        %v475 = vld [vmem:[#allocation6] sm:$0xf]
        %v476 = vld [vmem:[#allocation6 + $0x4] sm:$0xf]
        %v477 = vld [vmem:[#allocation6 + $0x8] sm:$0xf]
        %v478 = vld [vmem:[#allocation6 + $0xc] sm:$0xf]
        %v479 = vld [vmem:[%s9] sm:$0xf]
        %v480 = vld [vmem:[%s10] sm:$0xf]
        %v481 = vld [vmem:[%s10 + $0x4] sm:$0xf]
        %v482 = vld [vmem:[%s10 + $0x8] sm:$0xf]
        %v483 = vld [vmem:[%s10 + $0xc] sm:$0xf]
        %v484 = vld [vmem:[%s2] sm:$0xff]
        %v485 = vld [vmem:[%s2 + $0x8] sm:$0xff]
        %v486 = vld [vmem:[%s2 + $0x10] sm:$0xff]
        %v487 = vld [vmem:[%s2 + $0x18] sm:$0xff]
        %v488 = vld [vmem:[%s2 + $0x20] sm:$0xff]
        %v489 = vld [vmem:[%s2 + $0x28] sm:$0xff]
        %v490 = vld [vmem:[%s2 + $0x30] sm:$0xff]
        %v491 = vld [vmem:[%s2 + $0x38] sm:$0xff]
        %v492 = vld [vmem:[%s2 + $0x40] sm:$0xff]
        %v493 = vld [vmem:[%s2 + $0x48] sm:$0xff]
        %v494 = vld [vmem:[%s2 + $0x50] sm:$0xff]
        %v495 = vld [vmem:[%s2 + $0x58] sm:$0xff]
        %497 = vset.pattern.permute.xlu0 0
        %498 = vperm.xlu0 %497, %v484
        %v499 = vpop.permute.xlu0 %498
        %502 = vset.pattern.permute.xlu0 0
        %503 = vperm.xlu0 %502, %v485
        %v504 = vpop.permute.xlu0 %503
        %507 = vset.pattern.permute.xlu0 0
        %508 = vperm.xlu0 %507, %v486
        %v509 = vpop.permute.xlu0 %508
        %512 = vset.pattern.permute.xlu0 0
        %513 = vperm.xlu0 %512, %v487
        %v514 = vpop.permute.xlu0 %513
        %517 = vset.pattern.permute.xlu0 0
        %518 = vperm.xlu0 %517, %v488
        %v519 = vpop.permute.xlu0 %518
        %522 = vset.pattern.permute.xlu0 0
        %523 = vperm.xlu0 %522, %v489
        %v524 = vpop.permute.xlu0 %523
        %527 = vset.pattern.permute.xlu0 0
        %528 = vperm.xlu0 %527, %v490
        %v529 = vpop.permute.xlu0 %528
        %532 = vset.pattern.permute.xlu0 0
        %533 = vperm.xlu0 %532, %v491
        %v534 = vpop.permute.xlu0 %533
        %537 = vset.pattern.permute.xlu0 0
        %538 = vperm.xlu0 %537, %v492
        %v539 = vpop.permute.xlu0 %538
        %542 = vset.pattern.permute.xlu0 0
        %543 = vperm.xlu0 %542, %v493
        %v544 = vpop.permute.xlu0 %543
        %547 = vset.pattern.permute.xlu0 0
        %548 = vperm.xlu0 %547, %v494
        %v549 = vpop.permute.xlu0 %548
        %552 = vset.pattern.permute.xlu0 0
        %553 = vperm.xlu0 %552, %v495
        %v554 = vpop.permute.xlu0 %553
        %v556 = vld [vmem:[%s4] sm:$0xff]
        %v557 = vld [vmem:[%s4 + $0x8] sm:$0xff]
        %v558 = vld [vmem:[%s4 + $0x10] sm:$0xff]
        %v559 = vld [vmem:[%s4 + $0x18] sm:$0xff]
        %561 = vset.pattern.permute.xlu0 0
        %562 = vperm.xlu0 %561, %v556
        %v563 = vpop.permute.xlu0 %562
        %566 = vset.pattern.permute.xlu0 0
        %567 = vperm.xlu0 %566, %v557
        %v568 = vpop.permute.xlu0 %567
        %571 = vset.pattern.permute.xlu0 0
        %572 = vperm.xlu0 %571, %v558
        %v573 = vpop.permute.xlu0 %572
        %576 = vset.pattern.permute.xlu0 0
        %577 = vperm.xlu0 %576, %v559
        %v578 = vpop.permute.xlu0 %577
        %v580 = vld [vmem:[%s6] sm:$0xff]
        %v581 = vld [vmem:[%s6 + $0x8] sm:$0xff]
        %v582 = vld [vmem:[%s6 + $0x10] sm:$0xff]
        %v583 = vld [vmem:[%s6 + $0x18] sm:$0xff]
        %v584 = vld [vmem:[%s6 + $0x20] sm:$0xff]
        %v585 = vld [vmem:[%s6 + $0x28] sm:$0xff]
        %v586 = vld [vmem:[%s6 + $0x30] sm:$0xff]
        %v587 = vld [vmem:[%s6 + $0x38] sm:$0xff]
        %v588 = vld [vmem:[%s6 + $0x40] sm:$0xff]
        %v589 = vld [vmem:[%s6 + $0x48] sm:$0xff]
        %v590 = vld [vmem:[%s6 + $0x50] sm:$0xff]
        %v591 = vld [vmem:[%s6 + $0x58] sm:$0xff]
        %v592 = vld [vmem:[%s6 + $0x60] sm:$0xff]
        %v593 = vld [vmem:[%s6 + $0x68] sm:$0xff]
        %v594 = vld [vmem:[%s6 + $0x70] sm:$0xff]
        %v595 = vld [vmem:[%s6 + $0x78] sm:$0xff]
        %v596 = vld [vmem:[%s8] sm:$0xff]
        %v597 = vld [vmem:[%s8 + $0x8] sm:$0xff]
        %v598 = vld [vmem:[%s8 + $0x10] sm:$0xff]
        %v599 = vld [vmem:[%s8 + $0x18] sm:$0xff]
        %601 = vset.pattern.permute.xlu0 0
        %602 = vperm.xlu0 %601, %v596
        %v603 = vpop.permute.xlu0 %602
        %606 = vset.pattern.permute.xlu0 0
        %607 = vperm.xlu0 %606, %v597
        %v608 = vpop.permute.xlu0 %607
        %611 = vset.pattern.permute.xlu0 0
        %612 = vperm.xlu0 %611, %v598
        %v613 = vpop.permute.xlu0 %612
        %616 = vset.pattern.permute.xlu0 0
        %617 = vperm.xlu0 %616, %v599
        %v618 = vpop.permute.xlu0 %617
        %v620 = vld [vmem:[%s421] sm:$0xff]
        %v621 = vld [vmem:[%s421 + $0x8] sm:$0xff]
        %v622 = vld [vmem:[%s421 + $0x10] sm:$0xff]
        %v623 = vld [vmem:[%s421 + $0x18] sm:$0xff]
        %v624 = vpack.c.bf16 %v621, %v620
        %v625 = vpack.c.bf16 %v623, %v622
        %v638 = vunpack.c.l.b16 %v463
        %v639 = vunpack.c.l.b16 %v464
        %v640 = vunpack.c.l.b16 %v465
        %v641 = vunpack.c.l.b16 %v466
        %v642 = vunpack.c.l.b16 %v467
        %v643 = vunpack.c.l.b16 %v468
        %v644 = vunpack.c.l.b16 %v469
        %v645 = vunpack.c.l.b16 %v470
        %v646 = vunpack.c.l.b16 %v471
        %v647 = vunpack.c.l.b16 %v472
        %v648 = vunpack.c.l.b16 %v473
        %v649 = vunpack.c.l.b16 %v474
        %v650 = vpack.c.b16 %v639, %v638
        %v651 = vpack.c.b16 %v641, %v640
        %v652 = vpack.c.b16 %v643, %v642
        %v653 = vpack.c.b16 %v645, %v644
        %v654 = vpack.c.b16 %v647, %v646
        %v655 = vpack.c.b16 %v649, %v648
        %vm656 = vcmask 261120
        %v658 = vsel %vm656, %v650, 0
        %v661 = vsel %vm656, %v651, 0
        %v664 = vsel %vm656, %v652, 0
        %v667 = vsel %vm656, %v653, 0
        %v670 = vsel %vm656, %v654, 0
        %v673 = vsel %vm656, %v655, 0
        %675 = vmatprep.subr.bf16.mxu0 0
        %676 = vmatpush1.bf16.msra.mxu0 %v624
        %677 = vmatprep.subr.bf16.mxu0 0
        %678 = vmatpush1.bf16.msra.mxu0 %v625
        %679 = vmatprep.subr.bf16.mxu0 0
        %680 = vmatpush1.bf16.msra.mxu0 0
        %681 = vmatprep.subr.bf16.mxu0 0
        %682 = vmatpush1.bf16.msra.mxu0 0
        %683 = vmatprep.subr.bf16.mxu0 0
        %684 = vmatpush1.bf16.msra.mxu0 0
        %685 = vmatprep.subr.bf16.mxu0 0
        %686 = vmatpush1.bf16.msra.mxu0 0
        %687 = vmatprep.subr.bf16.mxu0 0
        %688 = vmatpush1.bf16.msra.mxu0 0
        %689 = vmatprep.subr.bf16.mxu0 0
        %690 = vmatpush1.bf16.msra.mxu0 0
        %691 = vmatprep.subr.bf16.mxu0 0
        %692 = vmatpush1.bf16.msra.mxu0 0
        %693 = vmatprep.subr.bf16.mxu0 0
        %694 = vmatpush1.bf16.msra.mxu0 0
        %695 = vmatprep.subr.bf16.mxu0 0
        %696 = vmatpush1.bf16.msra.mxu0 0
        %697 = vmatprep.subr.bf16.mxu0 0
        %698 = vmatpush1.bf16.msra.mxu0 0
        %699 = vmatprep.subr.bf16.mxu0 0
        %700 = vmatpush1.bf16.msra.mxu0 0
        %701 = vmatprep.subr.bf16.mxu0 0
        %702 = vmatpush1.bf16.msra.mxu0 0
        %703 = vmatprep.subr.bf16.mxu0 0
        %704 = vmatpush1.bf16.msra.mxu0 0
        %705 = vmatprep.subr.bf16.mxu0 0
        %706 = vmatpush1.bf16.msra.mxu0 0
        %707 = vmatprep.mubr.bf16.mxu0 0
        %708 = vmatmul.mubr.bf16.gmra.mrb[0].mxu0 %v658
        %v709 = vpop.f32.mrb[0].mxu0
        %v710 = vadd.f32 %v499, %v709
        %v711 = vpop.f32.mrb[0].mxu0
        %v712 = vpop.f32.mrb[0].mxu0
        %v713 = vadd.f32 %v504, %v712
        %v714 = vpop.f32.mrb[0].mxu0
        %715 = vmatprep.mubr.bf16.mxu0 0
        %716 = vmatmul.mubr.bf16.gmra.mrb[0].mxu0 %v661
        %v717 = vpop.f32.mrb[0].mxu0
        %v718 = vadd.f32 %v509, %v717
        %v719 = vpop.f32.mrb[0].mxu0
        %v720 = vpop.f32.mrb[0].mxu0
        %v721 = vadd.f32 %v514, %v720
        %v722 = vpop.f32.mrb[0].mxu0
        %723 = vmatprep.mubr.bf16.mxu0 0
        %724 = vmatmul.mubr.bf16.gmra.mrb[0].mxu0 %v664
        %v725 = vpop.f32.mrb[0].mxu0
        %v726 = vadd.f32 %v519, %v725
        %v727 = vpop.f32.mrb[0].mxu0
        %v728 = vpop.f32.mrb[0].mxu0
        %v729 = vadd.f32 %v524, %v728
        %v730 = vpop.f32.mrb[0].mxu0
        %731 = vmatprep.mubr.bf16.mxu0 0
        %732 = vmatmul.mubr.bf16.gmra.mrb[0].mxu0 %v667
        %v733 = vpop.f32.mrb[0].mxu0
        %v734 = vadd.f32 %v529, %v733
        %v735 = vpop.f32.mrb[0].mxu0
        %v736 = vpop.f32.mrb[0].mxu0
        %v737 = vadd.f32 %v534, %v736
        %v738 = vpop.f32.mrb[0].mxu0
        %739 = vmatprep.mubr.bf16.mxu0 0
        %740 = vmatmul.mubr.bf16.gmra.mrb[0].mxu0 %v670
        %v741 = vpop.f32.mrb[0].mxu0
        %v742 = vadd.f32 %v539, %v741
        %v743 = vpop.f32.mrb[0].mxu0
        %v744 = vpop.f32.mrb[0].mxu0
        %v745 = vadd.f32 %v544, %v744
        %v746 = vpop.f32.mrb[0].mxu0
        %747 = vmatprep.mubr.bf16.mxu0 0
        %748 = vmatmul.mubr.bf16.gmra.mrb[0].mxu0 %v673
        %v749 = vpop.f32.mrb[0].mxu0
        %v750 = vadd.f32 %v549, %v749
        %v751 = vpop.f32.mrb[0].mxu0
        %v752 = vpop.f32.mrb[0].mxu0
        %v753 = vadd.f32 %v554, %v752
        %v754 = vpop.f32.mrb[0].mxu0
        %755 = vdwg.mxu0
        %v756 = vmul.f32 %v710, 0.5
        %v757 = vmul.f32 %v713, 0.5
        %v758 = vmul.f32 %v718, 0.5
        %v759 = vmul.f32 %v721, 0.5
        %760 = vst [vmem:[#allocation2] sm:$0xff] %v756
        %761 = vst [vmem:[#allocation2 + $0x8] sm:$0xff] %v757
        %762 = vst [vmem:[#allocation2 + $0x10] sm:$0xff] %v758
        %763 = vst [vmem:[#allocation2 + $0x18] sm:$0xff] %v759
        %v764 = vpack.c.bf16 %v729, %v726
        %v765 = vpack.c.bf16 %v737, %v734
        %766 = vst [vmem:[#allocation3] sm:$0xff] %v764
        %767 = vst [vmem:[#allocation3 + $0x8] sm:$0xff] %v765
        %768 = vst [vmem:[#allocation4] sm:$0xff] %v742
        %769 = vst [vmem:[#allocation4 + $0x8] sm:$0xff] %v745
        %770 = vst [vmem:[#allocation4 + $0x10] sm:$0xff] %v750
        %771 = vst [vmem:[#allocation4 + $0x18] sm:$0xff] %v753
        %s772 = scalar_lea.vmem %s421, 32 [#allocation5]
        %v773 = vld [vmem:[%s772] sm:$0xff]
        %v774 = vld [vmem:[%s772 + $0x8] sm:$0xff]
        %v775 = vld [vmem:[%s772 + $0x10] sm:$0xff]
        %v776 = vld [vmem:[%s772 + $0x18] sm:$0xff]
        %v777 = vpack.c.bf16 %v774, %v773
        %v778 = vpack.c.bf16 %v776, %v775
        %779 = vmatprep.subr.bf16.mxu0 0
        %780 = vmatpush1.bf16.msra.mxu0 %v777
        %781 = vmatprep.subr.bf16.mxu0 0
        %782 = vmatpush1.bf16.msra.mxu0 %v778
        %783 = vmatprep.subr.bf16.mxu0 0
        %784 = vmatpush1.bf16.msra.mxu0 0
        %785 = vmatprep.subr.bf16.mxu0 0
        %786 = vmatpush1.bf16.msra.mxu0 0
        %787 = vmatprep.subr.bf16.mxu0 0
        %788 = vmatpush1.bf16.msra.mxu0 0
        %789 = vmatprep.subr.bf16.mxu0 0
        %790 = vmatpush1.bf16.msra.mxu0 0
        %791 = vmatprep.subr.bf16.mxu0 0
        %792 = vmatpush1.bf16.msra.mxu0 0
        %793 = vmatprep.subr.bf16.mxu0 0
        %794 = vmatpush1.bf16.msra.mxu0 0
        %795 = vmatprep.subr.bf16.mxu0 0
        %796 = vmatpush1.bf16.msra.mxu0 0
        %797 = vmatprep.subr.bf16.mxu0 0
        %798 = vmatpush1.bf16.msra.mxu0 0
        %799 = vmatprep.subr.bf16.mxu0 0
        %800 = vmatpush1.bf16.msra.mxu0 0
        %801 = vmatprep.subr.bf16.mxu0 0
        %802 = vmatpush1.bf16.msra.mxu0 0
        %803 = vmatprep.subr.bf16.mxu0 0
        %804 = vmatpush1.bf16.msra.mxu0 0
        %805 = vmatprep.subr.bf16.mxu0 0
        %806 = vmatpush1.bf16.msra.mxu0 0
        %807 = vmatprep.subr.bf16.mxu0 0
        %808 = vmatpush1.bf16.msra.mxu0 0
        %809 = vmatprep.subr.bf16.mxu0 0
        %810 = vmatpush1.bf16.msra.mxu0 0
        %811 = vmatprep.mubr.bf16.mxu0 0
        %812 = vmatmul.mubr.bf16.gmra.mrb[0].mxu0 %v658
        %v813 = vpop.f32.mrb[0].mxu0
        %v814 = vadd.f32 %v499, %v813
        %v815 = vpop.f32.mrb[0].mxu0
        %v816 = vpop.f32.mrb[0].mxu0
        %v817 = vadd.f32 %v504, %v816
        %v818 = vpop.f32.mrb[0].mxu0
        %819 = vmatprep.mubr.bf16.mxu0 0
        %820 = vmatmul.mubr.bf16.gmra.mrb[0].mxu0 %v661
        %v821 = vpop.f32.mrb[0].mxu0
        %v822 = vadd.f32 %v509, %v821
        %v823 = vpop.f32.mrb[0].mxu0
        %v824 = vpop.f32.mrb[0].mxu0
        %v825 = vadd.f32 %v514, %v824
        %v826 = vpop.f32.mrb[0].mxu0
        %827 = vmatprep.mubr.bf16.mxu0 0
        %828 = vmatmul.mubr.bf16.gmra.mrb[0].mxu0 %v664
        %v829 = vpop.f32.mrb[0].mxu0
        %v830 = vadd.f32 %v519, %v829
        %v831 = vpop.f32.mrb[0].mxu0
        %v832 = vpop.f32.mrb[0].mxu0
        %v833 = vadd.f32 %v524, %v832
        %v834 = vpop.f32.mrb[0].mxu0
        %835 = vmatprep.mubr.bf16.mxu0 0
        %836 = vmatmul.mubr.bf16.gmra.mrb[0].mxu0 %v667
        %v837 = vpop.f32.mrb[0].mxu0
        %v838 = vadd.f32 %v529, %v837
        %v839 = vpop.f32.mrb[0].mxu0
        %v840 = vpop.f32.mrb[0].mxu0
        %v841 = vadd.f32 %v534, %v840
        %v842 = vpop.f32.mrb[0].mxu0
        %843 = vmatprep.mubr.bf16.mxu0 0
        %844 = vmatmul.mubr.bf16.gmra.mrb[0].mxu0 %v670
        %v845 = vpop.f32.mrb[0].mxu0
        %v846 = vadd.f32 %v539, %v845
        %v847 = vpop.f32.mrb[0].mxu0
        %v848 = vpop.f32.mrb[0].mxu0
        %v849 = vadd.f32 %v544, %v848
        %v850 = vpop.f32.mrb[0].mxu0
        %851 = vmatprep.mubr.bf16.mxu0 0
        %852 = vmatmul.mubr.bf16.gmra.mrb[0].mxu0 %v673
        %v853 = vpop.f32.mrb[0].mxu0
        %v854 = vadd.f32 %v549, %v853
        %v855 = vpop.f32.mrb[0].mxu0
        %v856 = vpop.f32.mrb[0].mxu0
        %v857 = vadd.f32 %v554, %v856
        %v858 = vpop.f32.mrb[0].mxu0
        %859 = vdwg.mxu0
        %v860 = vmul.f32 %v814, 0.5
        %v861 = vmul.f32 %v817, 0.5
        %v862 = vmul.f32 %v822, 0.5
        %v863 = vmul.f32 %v825, 0.5
        %s864 = scalar_lea.vmem [#allocation2], 32
        %865 = vst [vmem:[%s864] sm:$0xff] %v860
        %866 = vst [vmem:[%s864 + $0x8] sm:$0xff] %v861
        %867 = vst [vmem:[%s864 + $0x10] sm:$0xff] %v862
        %868 = vst [vmem:[%s864 + $0x18] sm:$0xff] %v863
        %v869 = vpack.c.bf16 %v833, %v830
        %v870 = vpack.c.bf16 %v841, %v838
        %s871 = scalar_lea.vmem [#allocation3], 16
        %872 = vst [vmem:[%s871] sm:$0xff] %v869
        %873 = vst [vmem:[%s871 + $0x8] sm:$0xff] %v870
        %s874 = scalar_lea.vmem [#allocation4], 32
        %875 = vst [vmem:[%s874] sm:$0xff] %v846
        %876 = vst [vmem:[%s874 + $0x8] sm:$0xff] %v849
        %877 = vst [vmem:[%s874 + $0x10] sm:$0xff] %v854
        %878 = vst [vmem:[%s874 + $0x18] sm:$0xff] %v857
        %v879 = vld [vmem:[#allocation2] sm:$0xff]
        %v880 = vld [vmem:[#allocation2 + $0x8] sm:$0xff]
        %v881 = vld [vmem:[#allocation2 + $0x10] sm:$0xff]
        %v882 = vld [vmem:[#allocation2 + $0x18] sm:$0xff]
        %v883 = vld [vmem:[#allocation3] sm:$0xff]
        %v884 = vld [vmem:[#allocation3 + $0x8] sm:$0xff]
        %v885 = vunpack.c.l.bf16 %v883
        %v886 = vunpack.c.h.bf16 %v883
        %v887 = vunpack.c.l.bf16 %v884
        %v888 = vunpack.c.h.bf16 %v884
        %v889 = vmul.f32 %v879, %v885
        %v890 = vmul.f32 %v880, %v886
        %v891 = vmul.f32 %v881, %v887
        %v892 = vmul.f32 %v882, %v888
        %v893 = vpack.c.bf16 %v890, %v889
        %v894 = vpack.c.bf16 %v892, %v891
        %v896 = vsel %vm656, %v479, 0
        %898 = vmatprep.subr.bf16.mxu0 0
        %899 = vmatpush1.bf16.msra.mxu0 %v893
        %900 = vmatprep.subr.bf16.mxu0 0
        %901 = vmatpush1.bf16.msra.mxu0 %v894
        %902 = vmatprep.subr.bf16.mxu0 0
        %903 = vmatpush1.bf16.msra.mxu0 0
        %904 = vmatprep.subr.bf16.mxu0 0
        %905 = vmatpush1.bf16.msra.mxu0 0
        %906 = vmatprep.subr.bf16.mxu0 0
        %907 = vmatpush1.bf16.msra.mxu0 0
        %908 = vmatprep.subr.bf16.mxu0 0
        %909 = vmatpush1.bf16.msra.mxu0 0
        %910 = vmatprep.subr.bf16.mxu0 0
        %911 = vmatpush1.bf16.msra.mxu0 0
        %912 = vmatprep.subr.bf16.mxu0 0
        %913 = vmatpush1.bf16.msra.mxu0 0
        %914 = vmatprep.subr.bf16.mxu0 0
        %915 = vmatpush1.bf16.msra.mxu0 0
        %916 = vmatprep.subr.bf16.mxu0 0
        %917 = vmatpush1.bf16.msra.mxu0 0
        %918 = vmatprep.subr.bf16.mxu0 0
        %919 = vmatpush1.bf16.msra.mxu0 0
        %920 = vmatprep.subr.bf16.mxu0 0
        %921 = vmatpush1.bf16.msra.mxu0 0
        %922 = vmatprep.subr.bf16.mxu0 0
        %923 = vmatpush1.bf16.msra.mxu0 0
        %924 = vmatprep.subr.bf16.mxu0 0
        %925 = vmatpush1.bf16.msra.mxu0 0
        %926 = vmatprep.subr.bf16.mxu0 0
        %927 = vmatpush1.bf16.msra.mxu0 0
        %928 = vmatprep.subr.bf16.mxu0 0
        %929 = vmatpush1.bf16.msra.mxu0 0
        %930 = vmatprep.mubr.bf16.mxu0 0
        %931 = vmatmul.mubr.bf16.gmra.mrb[0].mxu0 %v896
        %v932 = vpop.f32.mrb[0].mxu0
        %v933 = vadd.f32 0.0, %v932
        %v934 = vpop.f32.mrb[0].mxu0
        %v935 = vpop.f32.mrb[0].mxu0
        %v936 = vpop.f32.mrb[0].mxu0
        %937 = vdwg.mxu0
        %v938 = vld [vmem:[%s871] sm:$0xff]
        %v939 = vld [vmem:[%s871 + $0x8] sm:$0xff]
        %v940 = vunpack.c.l.bf16 %v938
        %v941 = vunpack.c.h.bf16 %v938
        %v942 = vunpack.c.l.bf16 %v939
        %v943 = vunpack.c.h.bf16 %v939
        %v944 = vmul.f32 %v879, %v940
        %v945 = vmul.f32 %v880, %v941
        %v946 = vmul.f32 %v881, %v942
        %v947 = vmul.f32 %v882, %v943
        %v948 = vpack.c.bf16 %v945, %v944
        %v949 = vpack.c.bf16 %v947, %v946
        %950 = vmatprep.subr.bf16.mxu0 0
        %951 = vmatpush1.bf16.msra.mxu0 %v948
        %952 = vmatprep.subr.bf16.mxu0 0
        %953 = vmatpush1.bf16.msra.mxu0 %v949
        %954 = vmatprep.subr.bf16.mxu0 0
        %955 = vmatpush1.bf16.msra.mxu0 0
        %956 = vmatprep.subr.bf16.mxu0 0
        %957 = vmatpush1.bf16.msra.mxu0 0
        %958 = vmatprep.subr.bf16.mxu0 0
        %959 = vmatpush1.bf16.msra.mxu0 0
        %960 = vmatprep.subr.bf16.mxu0 0
        %961 = vmatpush1.bf16.msra.mxu0 0
        %962 = vmatprep.subr.bf16.mxu0 0
        %963 = vmatpush1.bf16.msra.mxu0 0
        %964 = vmatprep.subr.bf16.mxu0 0
        %965 = vmatpush1.bf16.msra.mxu0 0
        %966 = vmatprep.subr.bf16.mxu0 0
        %967 = vmatpush1.bf16.msra.mxu0 0
        %968 = vmatprep.subr.bf16.mxu0 0
        %969 = vmatpush1.bf16.msra.mxu0 0
        %970 = vmatprep.subr.bf16.mxu0 0
        %971 = vmatpush1.bf16.msra.mxu0 0
        %972 = vmatprep.subr.bf16.mxu0 0
        %973 = vmatpush1.bf16.msra.mxu0 0
        %974 = vmatprep.subr.bf16.mxu0 0
        %975 = vmatpush1.bf16.msra.mxu0 0
        %976 = vmatprep.subr.bf16.mxu0 0
        %977 = vmatpush1.bf16.msra.mxu0 0
        %978 = vmatprep.subr.bf16.mxu0 0
        %979 = vmatpush1.bf16.msra.mxu0 0
        %980 = vmatprep.subr.bf16.mxu0 0
        %981 = vmatpush1.bf16.msra.mxu0 0
        %982 = vmatprep.mubr.bf16.mxu0 0
        %983 = vmatmul.mubr.bf16.gmra.mrb[0].mxu0 %v896
        %v984 = vpop.f32.mrb[0].mxu0
        %v985 = vadd.f32 0.0, %v984
        %v986 = vpop.f32.mrb[0].mxu0
        %v987 = vpop.f32.mrb[0].mxu0
        %v988 = vpop.f32.mrb[0].mxu0
        %989 = vdwg.mxu0
        %v990 = vmax.f32 %v933, %v985
        %v991 = vsub.f32 %v933, %v990
        %v992 = vmul.f32 %v991, 1.442695
        %v993 = vpow.pop %v992
        %v994 = vsub.f32 %v985, %v990
        %v995 = vmul.f32 %v994, 1.442695
        %v996 = vpow.pop %v995
        %v997 = vadd.f32 %v993, %v996
        %v998 = vrcp.pop %v997
        %v999 = vmul.f32 %v993, %v998
        %v1000 = vpack.c.bf16 %v999, %v999
        %v1005 = vunpack.c.l.b16 %v480
        %v1006 = vunpack.c.l.b16 %v481
        %v1007 = vunpack.c.l.b16 %v482
        %v1008 = vunpack.c.l.b16 %v483
        %v1009 = vpack.c.b16 %v1006, %v1005
        %v1010 = vpack.c.b16 %v1008, %v1007
        %vm1011 = vcmask 64512
        %v1013 = vsel %vm1011, %v1009, 0
        %v1016 = vsel %vm1011, %v1010, 0
        %vm1018 = vcmask 1043456
        %v1020 = vsel %vm1018, %v1000, 0
        %1022 = vmatprep.subr.bf16.mxu0 0
        %1023 = vmatpush1.bf16.msra.mxu0 %v1020
        %1024 = vmatprep.subr.bf16.mxu0 0
        %1025 = vmatpush1.bf16.msra.mxu0 0
        %1026 = vmatprep.subr.bf16.mxu0 0
        %1027 = vmatpush1.bf16.msra.mxu0 0
        %1028 = vmatprep.subr.bf16.mxu0 0
        %1029 = vmatpush1.bf16.msra.mxu0 0
        %1030 = vmatprep.subr.bf16.mxu0 0
        %1031 = vmatpush1.bf16.msra.mxu0 0
        %1032 = vmatprep.subr.bf16.mxu0 0
        %1033 = vmatpush1.bf16.msra.mxu0 0
        %1034 = vmatprep.subr.bf16.mxu0 0
        %1035 = vmatpush1.bf16.msra.mxu0 0
        %1036 = vmatprep.subr.bf16.mxu0 0
        %1037 = vmatpush1.bf16.msra.mxu0 0
        %1038 = vmatprep.subr.bf16.mxu0 0
        %1039 = vmatpush1.bf16.msra.mxu0 0
        %1040 = vmatprep.subr.bf16.mxu0 0
        %1041 = vmatpush1.bf16.msra.mxu0 0
        %1042 = vmatprep.subr.bf16.mxu0 0
        %1043 = vmatpush1.bf16.msra.mxu0 0
        %1044 = vmatprep.subr.bf16.mxu0 0
        %1045 = vmatpush1.bf16.msra.mxu0 0
        %1046 = vmatprep.subr.bf16.mxu0 0
        %1047 = vmatpush1.bf16.msra.mxu0 0
        %1048 = vmatprep.subr.bf16.mxu0 0
        %1049 = vmatpush1.bf16.msra.mxu0 0
        %1050 = vmatprep.subr.bf16.mxu0 0
        %1051 = vmatpush1.bf16.msra.mxu0 0
        %1052 = vmatprep.subr.bf16.mxu0 0
        %1053 = vmatpush1.bf16.msra.mxu0 0
        %1054 = vmatprep.mubr.bf16.mxu0 0
        %1055 = vmatmul.mubr.bf16.gmra.mrb[0].mxu0 %v1013
        %v1056 = vpop.f32.mrb[0].mxu0
        %v1057 = vadd.f32 0.0, %v1056
        %v1058 = vpop.f32.mrb[0].mxu0
        %v1059 = vpop.f32.mrb[0].mxu0
        %v1060 = vadd.f32 0.0, %v1059
        %v1061 = vpop.f32.mrb[0].mxu0
        %1062 = vmatprep.mubr.bf16.mxu0 0
        %1063 = vmatmul.mubr.bf16.gmra.mrb[0].mxu0 %v1016
        %v1064 = vpop.f32.mrb[0].mxu0
        %v1065 = vadd.f32 0.0, %v1064
        %v1066 = vpop.f32.mrb[0].mxu0
        %v1067 = vpop.f32.mrb[0].mxu0
        %v1068 = vadd.f32 0.0, %v1067
        %v1069 = vpop.f32.mrb[0].mxu0
        %1070 = vdwg.mxu0
        %v1071 = vld [vmem:[#allocation4] sm:$0xff]
        %v1072 = vld [vmem:[#allocation4 + $0x8] sm:$0xff]
        %v1073 = vld [vmem:[#allocation4 + $0x10] sm:$0xff]
        %v1074 = vld [vmem:[#allocation4 + $0x18] sm:$0xff]
        %v1075 = vmul.f32 %v1057, %v1071
        %v1076 = vmul.f32 %v1060, %v1072
        %v1077 = vmul.f32 %v1065, %v1073
        %v1078 = vmul.f32 %v1068, %v1074
        %v1079 = vmul.f32 %v996, %v998
        %v1080 = vpack.c.bf16 %v1079, %v1079
        %v1082 = vsel %vm1018, %v1080, 0
        %1084 = vmatprep.subr.bf16.mxu0 0
        %1085 = vmatpush1.bf16.msra.mxu0 %v1082
        %1086 = vmatprep.subr.bf16.mxu0 0
        %1087 = vmatpush1.bf16.msra.mxu0 0
        %1088 = vmatprep.subr.bf16.mxu0 0
        %1089 = vmatpush1.bf16.msra.mxu0 0
        %1090 = vmatprep.subr.bf16.mxu0 0
        %1091 = vmatpush1.bf16.msra.mxu0 0
        %1092 = vmatprep.subr.bf16.mxu0 0
        %1093 = vmatpush1.bf16.msra.mxu0 0
        %1094 = vmatprep.subr.bf16.mxu0 0
        %1095 = vmatpush1.bf16.msra.mxu0 0
        %1096 = vmatprep.subr.bf16.mxu0 0
        %1097 = vmatpush1.bf16.msra.mxu0 0
        %1098 = vmatprep.subr.bf16.mxu0 0
        %1099 = vmatpush1.bf16.msra.mxu0 0
        %1100 = vmatprep.subr.bf16.mxu0 0
        %1101 = vmatpush1.bf16.msra.mxu0 0
        %1102 = vmatprep.subr.bf16.mxu0 0
        %1103 = vmatpush1.bf16.msra.mxu0 0
        %1104 = vmatprep.subr.bf16.mxu0 0
        %1105 = vmatpush1.bf16.msra.mxu0 0
        %1106 = vmatprep.subr.bf16.mxu0 0
        %1107 = vmatpush1.bf16.msra.mxu0 0
        %1108 = vmatprep.subr.bf16.mxu0 0
        %1109 = vmatpush1.bf16.msra.mxu0 0
        %1110 = vmatprep.subr.bf16.mxu0 0
        %1111 = vmatpush1.bf16.msra.mxu0 0
        %1112 = vmatprep.subr.bf16.mxu0 0
        %1113 = vmatpush1.bf16.msra.mxu0 0
        %1114 = vmatprep.subr.bf16.mxu0 0
        %1115 = vmatpush1.bf16.msra.mxu0 0
        %1116 = vmatprep.mubr.bf16.mxu0 0
        %1117 = vmatmul.mubr.bf16.gmra.mrb[0].mxu0 %v1013
        %v1118 = vpop.f32.mrb[0].mxu0
        %v1119 = vadd.f32 0.0, %v1118
        %v1120 = vpop.f32.mrb[0].mxu0
        %v1121 = vpop.f32.mrb[0].mxu0
        %v1122 = vadd.f32 0.0, %v1121
        %v1123 = vpop.f32.mrb[0].mxu0
        %1124 = vmatprep.mubr.bf16.mxu0 0
        %1125 = vmatmul.mubr.bf16.gmra.mrb[0].mxu0 %v1016
        %v1126 = vpop.f32.mrb[0].mxu0
        %v1127 = vadd.f32 0.0, %v1126
        %v1128 = vpop.f32.mrb[0].mxu0
        %v1129 = vpop.f32.mrb[0].mxu0
        %v1130 = vadd.f32 0.0, %v1129
        %v1131 = vpop.f32.mrb[0].mxu0
        %1132 = vdwg.mxu0
        %v1133 = vld [vmem:[%s874] sm:$0xff]
        %v1134 = vld [vmem:[%s874 + $0x8] sm:$0xff]
        %v1135 = vld [vmem:[%s874 + $0x10] sm:$0xff]
        %v1136 = vld [vmem:[%s874 + $0x18] sm:$0xff]
        %v1137 = vmul.f32 %v1119, %v1133
        %v1138 = vmul.f32 %v1122, %v1134
        %v1139 = vmul.f32 %v1127, %v1135
        %v1140 = vmul.f32 %v1130, %v1136
        %v1141 = vadd.f32 %v1075, %v1137
        %v1142 = vadd.f32 %v1076, %v1138
        %v1143 = vadd.f32 %v1077, %v1139
        %v1144 = vadd.f32 %v1078, %v1140
        %v1145 = vpack.c.bf16 %v1142, %v1141
        %v1146 = vpack.c.bf16 %v1144, %v1143
        %v1151 = vunpack.c.l.b16 %v475
        %v1152 = vunpack.c.l.b16 %v476
        %v1153 = vunpack.c.l.b16 %v477
        %v1154 = vunpack.c.l.b16 %v478
        %v1155 = vpack.c.b16 %v1152, %v1151
        %v1156 = vpack.c.b16 %v1154, %v1153
        %v1158 = vsel %vm656, %v1155, 0
        %v1161 = vsel %vm656, %v1156, 0
        %1163 = vmatprep.subr.bf16.mxu0 0
        %1164 = vmatpush1.bf16.msra.mxu0 %v1145
        %1165 = vmatprep.subr.bf16.mxu0 0
        %1166 = vmatpush1.bf16.msra.mxu0 %v1146
        %1167 = vmatprep.subr.bf16.mxu0 0
        %1168 = vmatpush1.bf16.msra.mxu0 0
        %1169 = vmatprep.subr.bf16.mxu0 0
        %1170 = vmatpush1.bf16.msra.mxu0 0
        %1171 = vmatprep.subr.bf16.mxu0 0
        %1172 = vmatpush1.bf16.msra.mxu0 0
        %1173 = vmatprep.subr.bf16.mxu0 0
        %1174 = vmatpush1.bf16.msra.mxu0 0
        %1175 = vmatprep.subr.bf16.mxu0 0
        %1176 = vmatpush1.bf16.msra.mxu0 0
        %1177 = vmatprep.subr.bf16.mxu0 0
        %1178 = vmatpush1.bf16.msra.mxu0 0
        %1179 = vmatprep.subr.bf16.mxu0 0
        %1180 = vmatpush1.bf16.msra.mxu0 0
        %1181 = vmatprep.subr.bf16.mxu0 0
        %1182 = vmatpush1.bf16.msra.mxu0 0
        %1183 = vmatprep.subr.bf16.mxu0 0
        %1184 = vmatpush1.bf16.msra.mxu0 0
        %1185 = vmatprep.subr.bf16.mxu0 0
        %1186 = vmatpush1.bf16.msra.mxu0 0
        %1187 = vmatprep.subr.bf16.mxu0 0
        %1188 = vmatpush1.bf16.msra.mxu0 0
        %1189 = vmatprep.subr.bf16.mxu0 0
        %1190 = vmatpush1.bf16.msra.mxu0 0
        %1191 = vmatprep.subr.bf16.mxu0 0
        %1192 = vmatpush1.bf16.msra.mxu0 0
        %1193 = vmatprep.subr.bf16.mxu0 0
        %1194 = vmatpush1.bf16.msra.mxu0 0
        %1195 = vmatprep.mubr.bf16.mxu0 0
        %1196 = vmatmul.mubr.bf16.gmra.mrb[0].mxu0 %v1158
        %v1197 = vpop.f32.mrb[0].mxu0
        %v1198 = vadd.f32 %v563, %v1197
        %v1199 = vpop.f32.mrb[0].mxu0
        %v1200 = vpop.f32.mrb[0].mxu0
        %v1201 = vadd.f32 %v568, %v1200
        %v1202 = vpop.f32.mrb[0].mxu0
        %1203 = vmatprep.mubr.bf16.mxu0 0
        %1204 = vmatmul.mubr.bf16.gmra.mrb[0].mxu0 %v1161
        %v1205 = vpop.f32.mrb[0].mxu0
        %v1206 = vadd.f32 %v573, %v1205
        %v1207 = vpop.f32.mrb[0].mxu0
        %v1208 = vpop.f32.mrb[0].mxu0
        %v1209 = vadd.f32 %v578, %v1208
        %v1210 = vpop.f32.mrb[0].mxu0
        %1211 = vdwg.mxu0
        %v1212 = vld [vmem:[%s421] sm:$0xff]
        %v1213 = vld [vmem:[%s421 + $0x8] sm:$0xff]
        %v1214 = vld [vmem:[%s421 + $0x10] sm:$0xff]
        %v1215 = vld [vmem:[%s421 + $0x18] sm:$0xff]
        %v1216 = vadd.f32 %v1212, %v1198
        %v1217 = vadd.f32 %v1213, %v1201
        %v1218 = vadd.f32 %v1214, %v1206
        %v1219 = vadd.f32 %v1215, %v1209
        %v1220 = vpack.c.bf16 %v1217, %v1216
        %v1221 = vpack.c.bf16 %v1219, %v1218
        %v1222 = vadd.f32 %v1216, %v603
        %v1223 = vadd.f32 %v1217, %v608
        %v1224 = vadd.f32 %v1218, %v613
        %v1225 = vadd.f32 %v1219, %v618
        %v1226 = vld [vmem:[%s5] sm:$0xf]
        %v1227 = vld [vmem:[%s5 + $0x4] sm:$0xf]
        %v1228 = vld [vmem:[%s5 + $0x8] sm:$0xf]
        %v1229 = vld [vmem:[%s5 + $0xc] sm:$0xf]
        %1231 = vset.pattern.permute.xlu0 0
        %1232 = vperm.xlu0 %1231, %v580
        %v1233 = vpop.permute.xlu0 %1232
        %1236 = vset.pattern.permute.xlu0 0
        %1237 = vperm.xlu0 %1236, %v581
        %v1238 = vpop.permute.xlu0 %1237
        %1241 = vset.pattern.permute.xlu0 0
        %1242 = vperm.xlu0 %1241, %v582
        %v1243 = vpop.permute.xlu0 %1242
        %1246 = vset.pattern.permute.xlu0 0
        %1247 = vperm.xlu0 %1246, %v583
        %v1248 = vpop.permute.xlu0 %1247
        %v1254 = vunpack.c.l.b16 %v1226
        %v1255 = vunpack.c.l.b16 %v1227
        %v1256 = vunpack.c.l.b16 %v1228
        %v1257 = vunpack.c.l.b16 %v1229
        %v1258 = vpack.c.b16 %v1255, %v1254
        %v1259 = vpack.c.b16 %v1257, %v1256
        %v1261 = vsel %vm656, %v1258, 0
        %v1264 = vsel %vm656, %v1259, 0
        %1266 = vmatprep.subr.bf16.mxu0 0
        %1267 = vmatpush1.bf16.msra.mxu0 %v1220
        %1268 = vmatprep.subr.bf16.mxu0 0
        %1269 = vmatpush1.bf16.msra.mxu0 %v1221
        %1270 = vmatprep.subr.bf16.mxu0 0
        %1271 = vmatpush1.bf16.msra.mxu0 0
        %1272 = vmatprep.subr.bf16.mxu0 0
        %1273 = vmatpush1.bf16.msra.mxu0 0
        %1274 = vmatprep.subr.bf16.mxu0 0
        %1275 = vmatpush1.bf16.msra.mxu0 0
        %1276 = vmatprep.subr.bf16.mxu0 0
        %1277 = vmatpush1.bf16.msra.mxu0 0
        %1278 = vmatprep.subr.bf16.mxu0 0
        %1279 = vmatpush1.bf16.msra.mxu0 0
        %1280 = vmatprep.subr.bf16.mxu0 0
        %1281 = vmatpush1.bf16.msra.mxu0 0
        %1282 = vmatprep.subr.bf16.mxu0 0
        %1283 = vmatpush1.bf16.msra.mxu0 0
        %1284 = vmatprep.subr.bf16.mxu0 0
        %1285 = vmatpush1.bf16.msra.mxu0 0
        %1286 = vmatprep.subr.bf16.mxu0 0
        %1287 = vmatpush1.bf16.msra.mxu0 0
        %1288 = vmatprep.subr.bf16.mxu0 0
        %1289 = vmatpush1.bf16.msra.mxu0 0
        %1290 = vmatprep.subr.bf16.mxu0 0
        %1291 = vmatpush1.bf16.msra.mxu0 0
        %1292 = vmatprep.subr.bf16.mxu0 0
        %1293 = vmatpush1.bf16.msra.mxu0 0
        %1294 = vmatprep.subr.bf16.mxu0 0
        %1295 = vmatpush1.bf16.msra.mxu0 0
        %1296 = vmatprep.subr.bf16.mxu0 0
        %1297 = vmatpush1.bf16.msra.mxu0 0
        %1298 = vmatprep.mubr.bf16.mxu0 0
        %1299 = vmatmul.mubr.bf16.gmra.mrb[0].mxu0 %v1261
        %v1300 = vpop.f32.mrb[0].mxu0
        %v1301 = vadd.f32 %v1233, %v1300
        %v1302 = vpop.f32.mrb[0].mxu0
        %v1303 = vpop.f32.mrb[0].mxu0
        %v1304 = vadd.f32 %v1238, %v1303
        %v1305 = vpop.f32.mrb[0].mxu0
        %1306 = vmatprep.mubr.bf16.mxu0 0
        %1307 = vmatmul.mubr.bf16.gmra.mrb[0].mxu0 %v1264
        %v1308 = vpop.f32.mrb[0].mxu0
        %v1309 = vadd.f32 %v1243, %v1308
        %v1310 = vpop.f32.mrb[0].mxu0
        %v1311 = vpop.f32.mrb[0].mxu0
        %v1312 = vadd.f32 %v1248, %v1311
        %v1313 = vpop.f32.mrb[0].mxu0
        %1314 = vdwg.mxu0
        %v1315 = vmul.f32 %v1301, 0.5
        %v1316 = vmul.f32 %v1304, 0.5
        %v1317 = vmul.f32 %v1309, 0.5
        %v1318 = vmul.f32 %v1312, 0.5
        %v1319 = vmul.f32 %v1301, 0.70710677
        %v1320 = vmul.f32 %v1304, 0.70710677
        %v1321 = vmul.f32 %v1309, 0.70710677
        %v1322 = vmul.f32 %v1312, 0.70710677
        %v1323 = vand.u32 2147483647, %v1319
        %v1324 = vand.u32 2147483647, %v1320
        %v1325 = vand.u32 2147483647, %v1321
        %v1326 = vand.u32 2147483647, %v1322
        %v1327 = vmul.f32 %v1323, 0.3275911
        %v1328 = vmul.f32 %v1324, 0.3275911
        %v1329 = vmul.f32 %v1325, 0.3275911
        %v1330 = vmul.f32 %v1326, 0.3275911
        %v1331 = vadd.f32 %v1327, 1.0
        %v1332 = vadd.f32 %v1328, 1.0
        %v1333 = vadd.f32 %v1329, 1.0
        %v1334 = vadd.f32 %v1330, 1.0
        %v1335 = vrcp.pop %v1331
        %v1336 = vrcp.pop %v1332
        %v1337 = vrcp.pop %v1333
        %v1338 = vrcp.pop %v1334
        %v1339 = vmul.f32 %v1335, 1.0614054
        %v1340 = vmul.f32 %v1336, 1.0614054
        %v1341 = vmul.f32 %v1337, 1.0614054
        %v1342 = vmul.f32 %v1338, 1.0614054
        %v1343 = vadd.f32 %v1339, -1.4531521
        %v1344 = vadd.f32 %v1340, -1.4531521
        %v1345 = vadd.f32 %v1341, -1.4531521
        %v1346 = vadd.f32 %v1342, -1.4531521
        %v1347 = vmul.f32 %v1335, %v1343
        %v1348 = vmul.f32 %v1336, %v1344
        %v1349 = vmul.f32 %v1337, %v1345
        %v1350 = vmul.f32 %v1338, %v1346
        %v1351 = vadd.f32 %v1347, 1.4214138
        %v1352 = vadd.f32 %v1348, 1.4214138
        %v1353 = vadd.f32 %v1349, 1.4214138
        %v1354 = vadd.f32 %v1350, 1.4214138
        %v1355 = vmul.f32 %v1335, %v1351
        %v1356 = vmul.f32 %v1336, %v1352
        %v1357 = vmul.f32 %v1337, %v1353
        %v1358 = vmul.f32 %v1338, %v1354
        %v1359 = vadd.f32 %v1355, -0.28449672
        %v1360 = vadd.f32 %v1356, -0.28449672
        %v1361 = vadd.f32 %v1357, -0.28449672
        %v1362 = vadd.f32 %v1358, -0.28449672
        %v1363 = vmul.f32 %v1335, %v1359
        %v1364 = vmul.f32 %v1336, %v1360
        %v1365 = vmul.f32 %v1337, %v1361
        %v1366 = vmul.f32 %v1338, %v1362
        %v1367 = vadd.f32 %v1363, 0.2548296
        %v1368 = vadd.f32 %v1364, 0.2548296
        %v1369 = vadd.f32 %v1365, 0.2548296
        %v1370 = vadd.f32 %v1366, 0.2548296
        %v1371 = vmul.f32 %v1335, %v1367
        %v1372 = vmul.f32 %v1336, %v1368
        %v1373 = vmul.f32 %v1337, %v1369
        %v1374 = vmul.f32 %v1338, %v1370
        %v1375 = vsub.f32 0.0, %v1323
        %v1376 = vsub.f32 0.0, %v1324
        %v1377 = vsub.f32 0.0, %v1325
        %v1378 = vsub.f32 0.0, %v1326
        %v1379 = vmul.f32 %v1375, %v1323
        %v1380 = vmul.f32 %v1376, %v1324
        %v1381 = vmul.f32 %v1377, %v1325
        %v1382 = vmul.f32 %v1378, %v1326
        %v1383 = vmul.f32 %v1379, 1.442695
        %v1384 = vpow.pop %v1383
        %v1385 = vmul.f32 %v1380, 1.442695
        %v1386 = vpow.pop %v1385
        %v1387 = vmul.f32 %v1381, 1.442695
        %v1388 = vpow.pop %v1387
        %v1389 = vmul.f32 %v1382, 1.442695
        %v1390 = vpow.pop %v1389
        %v1391 = vmul.f32 %v1371, %v1384
        %v1392 = vmul.f32 %v1372, %v1386
        %v1393 = vmul.f32 %v1373, %v1388
        %v1394 = vmul.f32 %v1374, %v1390
        %v1395 = vsub.f32 1.0, %v1391
        %v1396 = vsub.f32 1.0, %v1392
        %v1397 = vsub.f32 1.0, %v1393
        %v1398 = vsub.f32 1.0, %v1394
        %vm1399 = vcmp.ge.f32.partialorder %v1319, 0.0
        %vm1400 = vcmp.ge.f32.partialorder %v1320, 0.0
        %vm1401 = vcmp.ge.f32.partialorder %v1321, 0.0
        %vm1402 = vcmp.ge.f32.partialorder %v1322, 0.0
        %v1403 = vsub.f32 0.0, %v1395
        %v1404 = vsub.f32 0.0, %v1396
        %v1405 = vsub.f32 0.0, %v1397
        %v1406 = vsub.f32 0.0, %v1398
        %v1407 = vsel %vm1399, %v1395, %v1403
        %v1408 = vsel %vm1400, %v1396, %v1404
        %v1409 = vsel %vm1401, %v1397, %v1405
        %v1410 = vsel %vm1402, %v1398, %v1406
        %v1411 = vadd.f32 %v1407, 1.0
        %v1412 = vadd.f32 %v1408, 1.0
        %v1413 = vadd.f32 %v1409, 1.0
        %v1414 = vadd.f32 %v1410, 1.0
        %v1415 = vmul.f32 %v1315, %v1411
        %v1416 = vmul.f32 %v1316, %v1412
        %v1417 = vmul.f32 %v1317, %v1413
        %v1418 = vmul.f32 %v1318, %v1414
        %v1419 = vpack.c.bf16 %v1416, %v1415
        %v1420 = vpack.c.bf16 %v1418, %v1417
        %v1421 = vld [vmem:[%s7] sm:$0xf]
        %v1422 = vld [vmem:[%s7 + $0x4] sm:$0xf]
        %v1423 = vld [vmem:[%s7 + $0x8] sm:$0xf]
        %v1424 = vld [vmem:[%s7 + $0xc] sm:$0xf]
        %v1429 = vunpack.c.l.b16 %v1421
        %v1430 = vunpack.c.l.b16 %v1422
        %v1431 = vunpack.c.l.b16 %v1423
        %v1432 = vunpack.c.l.b16 %v1424
        %v1433 = vpack.c.b16 %v1430, %v1429
        %v1434 = vpack.c.b16 %v1432, %v1431
        %v1436 = vsel %vm656, %v1433, 0
        %v1439 = vsel %vm656, %v1434, 0
        %1441 = vmatprep.subr.bf16.mxu0 0
        %1442 = vmatpush1.bf16.msra.mxu0 %v1419
        %1443 = vmatprep.subr.bf16.mxu0 0
        %1444 = vmatpush1.bf16.msra.mxu0 %v1420
        %1445 = vmatprep.subr.bf16.mxu0 0
        %1446 = vmatpush1.bf16.msra.mxu0 0
        %1447 = vmatprep.subr.bf16.mxu0 0
        %1448 = vmatpush1.bf16.msra.mxu0 0
        %1449 = vmatprep.subr.bf16.mxu0 0
        %1450 = vmatpush1.bf16.msra.mxu0 0
        %1451 = vmatprep.subr.bf16.mxu0 0
        %1452 = vmatpush1.bf16.msra.mxu0 0
        %1453 = vmatprep.subr.bf16.mxu0 0
        %1454 = vmatpush1.bf16.msra.mxu0 0
        %1455 = vmatprep.subr.bf16.mxu0 0
        %1456 = vmatpush1.bf16.msra.mxu0 0
        %1457 = vmatprep.subr.bf16.mxu0 0
        %1458 = vmatpush1.bf16.msra.mxu0 0
        %1459 = vmatprep.subr.bf16.mxu0 0
        %1460 = vmatpush1.bf16.msra.mxu0 0
        %1461 = vmatprep.subr.bf16.mxu0 0
        %1462 = vmatpush1.bf16.msra.mxu0 0
        %1463 = vmatprep.subr.bf16.mxu0 0
        %1464 = vmatpush1.bf16.msra.mxu0 0
        %1465 = vmatprep.subr.bf16.mxu0 0
        %1466 = vmatpush1.bf16.msra.mxu0 0
        %1467 = vmatprep.subr.bf16.mxu0 0
        %1468 = vmatpush1.bf16.msra.mxu0 0
        %1469 = vmatprep.subr.bf16.mxu0 0
        %1470 = vmatpush1.bf16.msra.mxu0 0
        %1471 = vmatprep.subr.bf16.mxu0 0
        %1472 = vmatpush1.bf16.msra.mxu0 0
        %1473 = vmatprep.mubr.bf16.mxu0 0
        %1474 = vmatmul.mubr.bf16.gmra.mrb[0].mxu0 %v1436
        %v1475 = vpop.f32.mrb[0].mxu0
        %v1476 = vadd.f32 0.0, %v1475
        %v1477 = vpop.f32.mrb[0].mxu0
        %v1478 = vpop.f32.mrb[0].mxu0
        %v1479 = vadd.f32 0.0, %v1478
        %v1480 = vpop.f32.mrb[0].mxu0
        %1481 = vmatprep.mubr.bf16.mxu0 0
        %1482 = vmatmul.mubr.bf16.gmra.mrb[0].mxu0 %v1439
        %v1483 = vpop.f32.mrb[0].mxu0
        %v1484 = vadd.f32 0.0, %v1483
        %v1485 = vpop.f32.mrb[0].mxu0
        %v1486 = vpop.f32.mrb[0].mxu0
        %v1487 = vadd.f32 0.0, %v1486
        %v1488 = vpop.f32.mrb[0].mxu0
        %1489 = vdwg.mxu0
        %v1490 = vadd.f32 %v1222, %v1476
        %v1491 = vadd.f32 %v1223, %v1479
        %v1492 = vadd.f32 %v1224, %v1484
        %v1493 = vadd.f32 %v1225, %v1487
        %s1494 = scalar_lea.vmem %s5, 16
        %v1495 = vld [vmem:[%s1494] sm:$0xf]
        %v1496 = vld [vmem:[%s1494 + $0x4] sm:$0xf]
        %v1497 = vld [vmem:[%s1494 + $0x8] sm:$0xf]
        %v1498 = vld [vmem:[%s1494 + $0xc] sm:$0xf]
        %1500 = vset.pattern.permute.xlu0 0
        %1501 = vperm.xlu0 %1500, %v584
        %v1502 = vpop.permute.xlu0 %1501
        %1505 = vset.pattern.permute.xlu0 0
        %1506 = vperm.xlu0 %1505, %v585
        %v1507 = vpop.permute.xlu0 %1506
        %1510 = vset.pattern.permute.xlu0 0
        %1511 = vperm.xlu0 %1510, %v586
        %v1512 = vpop.permute.xlu0 %1511
        %1515 = vset.pattern.permute.xlu0 0
        %1516 = vperm.xlu0 %1515, %v587
        %v1517 = vpop.permute.xlu0 %1516
        %v1523 = vunpack.c.l.b16 %v1495
        %v1524 = vunpack.c.l.b16 %v1496
        %v1525 = vunpack.c.l.b16 %v1497
        %v1526 = vunpack.c.l.b16 %v1498
        %v1527 = vpack.c.b16 %v1524, %v1523
        %v1528 = vpack.c.b16 %v1526, %v1525
        %v1530 = vsel %vm656, %v1527, 0
        %v1533 = vsel %vm656, %v1528, 0
        %1535 = vmatprep.subr.bf16.mxu0 0
        %1536 = vmatpush1.bf16.msra.mxu0 %v1220
        %1537 = vmatprep.subr.bf16.mxu0 0
        %1538 = vmatpush1.bf16.msra.mxu0 %v1221
        %1539 = vmatprep.subr.bf16.mxu0 0
        %1540 = vmatpush1.bf16.msra.mxu0 0
        %1541 = vmatprep.subr.bf16.mxu0 0
        %1542 = vmatpush1.bf16.msra.mxu0 0
        %1543 = vmatprep.subr.bf16.mxu0 0
        %1544 = vmatpush1.bf16.msra.mxu0 0
        %1545 = vmatprep.subr.bf16.mxu0 0
        %1546 = vmatpush1.bf16.msra.mxu0 0
        %1547 = vmatprep.subr.bf16.mxu0 0
        %1548 = vmatpush1.bf16.msra.mxu0 0
        %1549 = vmatprep.subr.bf16.mxu0 0
        %1550 = vmatpush1.bf16.msra.mxu0 0
        %1551 = vmatprep.subr.bf16.mxu0 0
        %1552 = vmatpush1.bf16.msra.mxu0 0
        %1553 = vmatprep.subr.bf16.mxu0 0
        %1554 = vmatpush1.bf16.msra.mxu0 0
        %1555 = vmatprep.subr.bf16.mxu0 0
        %1556 = vmatpush1.bf16.msra.mxu0 0
        %1557 = vmatprep.subr.bf16.mxu0 0
        %1558 = vmatpush1.bf16.msra.mxu0 0
        %1559 = vmatprep.subr.bf16.mxu0 0
        %1560 = vmatpush1.bf16.msra.mxu0 0
        %1561 = vmatprep.subr.bf16.mxu0 0
        %1562 = vmatpush1.bf16.msra.mxu0 0
        %1563 = vmatprep.subr.bf16.mxu0 0
        %1564 = vmatpush1.bf16.msra.mxu0 0
        %1565 = vmatprep.subr.bf16.mxu0 0
        %1566 = vmatpush1.bf16.msra.mxu0 0
        %1567 = vmatprep.mubr.bf16.mxu0 0
        %1568 = vmatmul.mubr.bf16.gmra.mrb[0].mxu0 %v1530
        %v1569 = vpop.f32.mrb[0].mxu0
        %v1570 = vadd.f32 %v1502, %v1569
        %v1571 = vpop.f32.mrb[0].mxu0
        %v1572 = vpop.f32.mrb[0].mxu0
        %v1573 = vadd.f32 %v1507, %v1572
        %v1574 = vpop.f32.mrb[0].mxu0
        %1575 = vmatprep.mubr.bf16.mxu0 0
        %1576 = vmatmul.mubr.bf16.gmra.mrb[0].mxu0 %v1533
        %v1577 = vpop.f32.mrb[0].mxu0
        %v1578 = vadd.f32 %v1512, %v1577
        %v1579 = vpop.f32.mrb[0].mxu0
        %v1580 = vpop.f32.mrb[0].mxu0
        %v1581 = vadd.f32 %v1517, %v1580
        %v1582 = vpop.f32.mrb[0].mxu0
        %1583 = vdwg.mxu0
        %v1584 = vmul.f32 %v1570, 0.5
        %v1585 = vmul.f32 %v1573, 0.5
        %v1586 = vmul.f32 %v1578, 0.5
        %v1587 = vmul.f32 %v1581, 0.5
        %v1588 = vmul.f32 %v1570, 0.70710677
        %v1589 = vmul.f32 %v1573, 0.70710677
        %v1590 = vmul.f32 %v1578, 0.70710677
        %v1591 = vmul.f32 %v1581, 0.70710677
        %v1592 = vand.u32 2147483647, %v1588
        %v1593 = vand.u32 2147483647, %v1589
        %v1594 = vand.u32 2147483647, %v1590
        %v1595 = vand.u32 2147483647, %v1591
        %v1596 = vmul.f32 %v1592, 0.3275911
        %v1597 = vmul.f32 %v1593, 0.3275911
        %v1598 = vmul.f32 %v1594, 0.3275911
        %v1599 = vmul.f32 %v1595, 0.3275911
        %v1600 = vadd.f32 %v1596, 1.0
        %v1601 = vadd.f32 %v1597, 1.0
        %v1602 = vadd.f32 %v1598, 1.0
        %v1603 = vadd.f32 %v1599, 1.0
        %v1604 = vrcp.pop %v1600
        %v1605 = vrcp.pop %v1601
        %v1606 = vrcp.pop %v1602
        %v1607 = vrcp.pop %v1603
        %v1608 = vmul.f32 %v1604, 1.0614054
        %v1609 = vmul.f32 %v1605, 1.0614054
        %v1610 = vmul.f32 %v1606, 1.0614054
        %v1611 = vmul.f32 %v1607, 1.0614054
        %v1612 = vadd.f32 %v1608, -1.4531521
        %v1613 = vadd.f32 %v1609, -1.4531521
        %v1614 = vadd.f32 %v1610, -1.4531521
        %v1615 = vadd.f32 %v1611, -1.4531521
        %v1616 = vmul.f32 %v1604, %v1612
        %v1617 = vmul.f32 %v1605, %v1613
        %v1618 = vmul.f32 %v1606, %v1614
        %v1619 = vmul.f32 %v1607, %v1615
        %v1620 = vadd.f32 %v1616, 1.4214138
        %v1621 = vadd.f32 %v1617, 1.4214138
        %v1622 = vadd.f32 %v1618, 1.4214138
        %v1623 = vadd.f32 %v1619, 1.4214138
        %v1624 = vmul.f32 %v1604, %v1620
        %v1625 = vmul.f32 %v1605, %v1621
        %v1626 = vmul.f32 %v1606, %v1622
        %v1627 = vmul.f32 %v1607, %v1623
        %v1628 = vadd.f32 %v1624, -0.28449672
        %v1629 = vadd.f32 %v1625, -0.28449672
        %v1630 = vadd.f32 %v1626, -0.28449672
        %v1631 = vadd.f32 %v1627, -0.28449672
        %v1632 = vmul.f32 %v1604, %v1628
        %v1633 = vmul.f32 %v1605, %v1629
        %v1634 = vmul.f32 %v1606, %v1630
        %v1635 = vmul.f32 %v1607, %v1631
        %v1636 = vadd.f32 %v1632, 0.2548296
        %v1637 = vadd.f32 %v1633, 0.2548296
        %v1638 = vadd.f32 %v1634, 0.2548296
        %v1639 = vadd.f32 %v1635, 0.2548296
        %v1640 = vmul.f32 %v1604, %v1636
        %v1641 = vmul.f32 %v1605, %v1637
        %v1642 = vmul.f32 %v1606, %v1638
        %v1643 = vmul.f32 %v1607, %v1639
        %v1644 = vsub.f32 0.0, %v1592
        %v1645 = vsub.f32 0.0, %v1593
        %v1646 = vsub.f32 0.0, %v1594
        %v1647 = vsub.f32 0.0, %v1595
        %v1648 = vmul.f32 %v1644, %v1592
        %v1649 = vmul.f32 %v1645, %v1593
        %v1650 = vmul.f32 %v1646, %v1594
        %v1651 = vmul.f32 %v1647, %v1595
        %v1652 = vmul.f32 %v1648, 1.442695
        %v1653 = vpow.pop %v1652
        %v1654 = vmul.f32 %v1649, 1.442695
        %v1655 = vpow.pop %v1654
        %v1656 = vmul.f32 %v1650, 1.442695
        %v1657 = vpow.pop %v1656
        %v1658 = vmul.f32 %v1651, 1.442695
        %v1659 = vpow.pop %v1658
        %v1660 = vmul.f32 %v1640, %v1653
        %v1661 = vmul.f32 %v1641, %v1655
        %v1662 = vmul.f32 %v1642, %v1657
        %v1663 = vmul.f32 %v1643, %v1659
        %v1664 = vsub.f32 1.0, %v1660
        %v1665 = vsub.f32 1.0, %v1661
        %v1666 = vsub.f32 1.0, %v1662
        %v1667 = vsub.f32 1.0, %v1663
        %vm1668 = vcmp.ge.f32.partialorder %v1588, 0.0
        %vm1669 = vcmp.ge.f32.partialorder %v1589, 0.0
        %vm1670 = vcmp.ge.f32.partialorder %v1590, 0.0
        %vm1671 = vcmp.ge.f32.partialorder %v1591, 0.0
        %v1672 = vsub.f32 0.0, %v1664
        %v1673 = vsub.f32 0.0, %v1665
        %v1674 = vsub.f32 0.0, %v1666
        %v1675 = vsub.f32 0.0, %v1667
        %v1676 = vsel %vm1668, %v1664, %v1672
        %v1677 = vsel %vm1669, %v1665, %v1673
        %v1678 = vsel %vm1670, %v1666, %v1674
        %v1679 = vsel %vm1671, %v1667, %v1675
        %v1680 = vadd.f32 %v1676, 1.0
        %v1681 = vadd.f32 %v1677, 1.0
        %v1682 = vadd.f32 %v1678, 1.0
        %v1683 = vadd.f32 %v1679, 1.0
        %v1684 = vmul.f32 %v1584, %v1680
        %v1685 = vmul.f32 %v1585, %v1681
        %v1686 = vmul.f32 %v1586, %v1682
        %v1687 = vmul.f32 %v1587, %v1683
        %v1688 = vpack.c.bf16 %v1685, %v1684
        %v1689 = vpack.c.bf16 %v1687, %v1686
        %s1690 = scalar_lea.vmem %s7, 16
        %v1691 = vld [vmem:[%s1690] sm:$0xf]
        %v1692 = vld [vmem:[%s1690 + $0x4] sm:$0xf]
        %v1693 = vld [vmem:[%s1690 + $0x8] sm:$0xf]
        %v1694 = vld [vmem:[%s1690 + $0xc] sm:$0xf]
        %v1699 = vunpack.c.l.b16 %v1691
        %v1700 = vunpack.c.l.b16 %v1692
        %v1701 = vunpack.c.l.b16 %v1693
        %v1702 = vunpack.c.l.b16 %v1694
        %v1703 = vpack.c.b16 %v1700, %v1699
        %v1704 = vpack.c.b16 %v1702, %v1701
        %v1706 = vsel %vm656, %v1703, 0
        %v1709 = vsel %vm656, %v1704, 0
        %1711 = vmatprep.subr.bf16.mxu0 0
        %1712 = vmatpush1.bf16.msra.mxu0 %v1688
        %1713 = vmatprep.subr.bf16.mxu0 0
        %1714 = vmatpush1.bf16.msra.mxu0 %v1689
        %1715 = vmatprep.subr.bf16.mxu0 0
        %1716 = vmatpush1.bf16.msra.mxu0 0
        %1717 = vmatprep.subr.bf16.mxu0 0
        %1718 = vmatpush1.bf16.msra.mxu0 0
        %1719 = vmatprep.subr.bf16.mxu0 0
        %1720 = vmatpush1.bf16.msra.mxu0 0
        %1721 = vmatprep.subr.bf16.mxu0 0
        %1722 = vmatpush1.bf16.msra.mxu0 0
        %1723 = vmatprep.subr.bf16.mxu0 0
        %1724 = vmatpush1.bf16.msra.mxu0 0
        %1725 = vmatprep.subr.bf16.mxu0 0
        %1726 = vmatpush1.bf16.msra.mxu0 0
        %1727 = vmatprep.subr.bf16.mxu0 0
        %1728 = vmatpush1.bf16.msra.mxu0 0
        %1729 = vmatprep.subr.bf16.mxu0 0
        %1730 = vmatpush1.bf16.msra.mxu0 0
        %1731 = vmatprep.subr.bf16.mxu0 0
        %1732 = vmatpush1.bf16.msra.mxu0 0
        %1733 = vmatprep.subr.bf16.mxu0 0
        %1734 = vmatpush1.bf16.msra.mxu0 0
        %1735 = vmatprep.subr.bf16.mxu0 0
        %1736 = vmatpush1.bf16.msra.mxu0 0
        %1737 = vmatprep.subr.bf16.mxu0 0
        %1738 = vmatpush1.bf16.msra.mxu0 0
        %1739 = vmatprep.subr.bf16.mxu0 0
        %1740 = vmatpush1.bf16.msra.mxu0 0
        %1741 = vmatprep.subr.bf16.mxu0 0
        %1742 = vmatpush1.bf16.msra.mxu0 0
        %1743 = vmatprep.mubr.bf16.mxu0 0
        %1744 = vmatmul.mubr.bf16.gmra.mrb[0].mxu0 %v1706
        %v1745 = vpop.f32.mrb[0].mxu0
        %v1746 = vadd.f32 0.0, %v1745
        %v1747 = vpop.f32.mrb[0].mxu0
        %v1748 = vpop.f32.mrb[0].mxu0
        %v1749 = vadd.f32 0.0, %v1748
        %v1750 = vpop.f32.mrb[0].mxu0
        %1751 = vmatprep.mubr.bf16.mxu0 0
        %1752 = vmatmul.mubr.bf16.gmra.mrb[0].mxu0 %v1709
        %v1753 = vpop.f32.mrb[0].mxu0
        %v1754 = vadd.f32 0.0, %v1753
        %v1755 = vpop.f32.mrb[0].mxu0
        %v1756 = vpop.f32.mrb[0].mxu0
        %v1757 = vadd.f32 0.0, %v1756
        %v1758 = vpop.f32.mrb[0].mxu0
        %1759 = vdwg.mxu0
        %v1760 = vadd.f32 %v1490, %v1746
        %v1761 = vadd.f32 %v1491, %v1749
        %v1762 = vadd.f32 %v1492, %v1754
        %v1763 = vadd.f32 %v1493, %v1757
        %s1764 = scalar_lea.vmem %s5, 32
        %v1765 = vld [vmem:[%s1764] sm:$0xf]
        %v1766 = vld [vmem:[%s1764 + $0x4] sm:$0xf]
        %v1767 = vld [vmem:[%s1764 + $0x8] sm:$0xf]
        %v1768 = vld [vmem:[%s1764 + $0xc] sm:$0xf]
        %1770 = vset.pattern.permute.xlu0 0
        %1771 = vperm.xlu0 %1770, %v588
        %v1772 = vpop.permute.xlu0 %1771
        %1775 = vset.pattern.permute.xlu0 0
        %1776 = vperm.xlu0 %1775, %v589
        %v1777 = vpop.permute.xlu0 %1776
        %1780 = vset.pattern.permute.xlu0 0
        %1781 = vperm.xlu0 %1780, %v590
        %v1782 = vpop.permute.xlu0 %1781
        %1785 = vset.pattern.permute.xlu0 0
        %1786 = vperm.xlu0 %1785, %v591
        %v1787 = vpop.permute.xlu0 %1786
        %v1793 = vunpack.c.l.b16 %v1765
        %v1794 = vunpack.c.l.b16 %v1766
        %v1795 = vunpack.c.l.b16 %v1767
        %v1796 = vunpack.c.l.b16 %v1768
        %v1797 = vpack.c.b16 %v1794, %v1793
        %v1798 = vpack.c.b16 %v1796, %v1795
        %v1800 = vsel %vm656, %v1797, 0
        %v1803 = vsel %vm656, %v1798, 0
        %1805 = vmatprep.subr.bf16.mxu0 0
        %1806 = vmatpush1.bf16.msra.mxu0 %v1220
        %1807 = vmatprep.subr.bf16.mxu0 0
        %1808 = vmatpush1.bf16.msra.mxu0 %v1221
        %1809 = vmatprep.subr.bf16.mxu0 0
        %1810 = vmatpush1.bf16.msra.mxu0 0
        %1811 = vmatprep.subr.bf16.mxu0 0
        %1812 = vmatpush1.bf16.msra.mxu0 0
        %1813 = vmatprep.subr.bf16.mxu0 0
        %1814 = vmatpush1.bf16.msra.mxu0 0
        %1815 = vmatprep.subr.bf16.mxu0 0
        %1816 = vmatpush1.bf16.msra.mxu0 0
        %1817 = vmatprep.subr.bf16.mxu0 0
        %1818 = vmatpush1.bf16.msra.mxu0 0
        %1819 = vmatprep.subr.bf16.mxu0 0
        %1820 = vmatpush1.bf16.msra.mxu0 0
        %1821 = vmatprep.subr.bf16.mxu0 0
        %1822 = vmatpush1.bf16.msra.mxu0 0
        %1823 = vmatprep.subr.bf16.mxu0 0
        %1824 = vmatpush1.bf16.msra.mxu0 0
        %1825 = vmatprep.subr.bf16.mxu0 0
        %1826 = vmatpush1.bf16.msra.mxu0 0
        %1827 = vmatprep.subr.bf16.mxu0 0
        %1828 = vmatpush1.bf16.msra.mxu0 0
        %1829 = vmatprep.subr.bf16.mxu0 0
        %1830 = vmatpush1.bf16.msra.mxu0 0
        %1831 = vmatprep.subr.bf16.mxu0 0
        %1832 = vmatpush1.bf16.msra.mxu0 0
        %1833 = vmatprep.subr.bf16.mxu0 0
        %1834 = vmatpush1.bf16.msra.mxu0 0
        %1835 = vmatprep.subr.bf16.mxu0 0
        %1836 = vmatpush1.bf16.msra.mxu0 0
        %1837 = vmatprep.mubr.bf16.mxu0 0
        %1838 = vmatmul.mubr.bf16.gmra.mrb[0].mxu0 %v1800
        %v1839 = vpop.f32.mrb[0].mxu0
        %v1840 = vadd.f32 %v1772, %v1839
        %v1841 = vpop.f32.mrb[0].mxu0
        %v1842 = vpop.f32.mrb[0].mxu0
        %v1843 = vadd.f32 %v1777, %v1842
        %v1844 = vpop.f32.mrb[0].mxu0
        %1845 = vmatprep.mubr.bf16.mxu0 0
        %1846 = vmatmul.mubr.bf16.gmra.mrb[0].mxu0 %v1803
        %v1847 = vpop.f32.mrb[0].mxu0
        %v1848 = vadd.f32 %v1782, %v1847
        %v1849 = vpop.f32.mrb[0].mxu0
        %v1850 = vpop.f32.mrb[0].mxu0
        %v1851 = vadd.f32 %v1787, %v1850
        %v1852 = vpop.f32.mrb[0].mxu0
        %1853 = vdwg.mxu0
        %v1854 = vmul.f32 %v1840, 0.5
        %v1855 = vmul.f32 %v1843, 0.5
        %v1856 = vmul.f32 %v1848, 0.5
        %v1857 = vmul.f32 %v1851, 0.5
        %v1858 = vmul.f32 %v1840, 0.70710677
        %v1859 = vmul.f32 %v1843, 0.70710677
        %v1860 = vmul.f32 %v1848, 0.70710677
        %v1861 = vmul.f32 %v1851, 0.70710677
        %v1862 = vand.u32 2147483647, %v1858
        %v1863 = vand.u32 2147483647, %v1859
        %v1864 = vand.u32 2147483647, %v1860
        %v1865 = vand.u32 2147483647, %v1861
        %v1866 = vmul.f32 %v1862, 0.3275911
        %v1867 = vmul.f32 %v1863, 0.3275911
        %v1868 = vmul.f32 %v1864, 0.3275911
        %v1869 = vmul.f32 %v1865, 0.3275911
        %v1870 = vadd.f32 %v1866, 1.0
        %v1871 = vadd.f32 %v1867, 1.0
        %v1872 = vadd.f32 %v1868, 1.0
        %v1873 = vadd.f32 %v1869, 1.0
        %v1874 = vrcp.pop %v1870
        %v1875 = vrcp.pop %v1871
        %v1876 = vrcp.pop %v1872
        %v1877 = vrcp.pop %v1873
        %v1878 = vmul.f32 %v1874, 1.0614054
        %v1879 = vmul.f32 %v1875, 1.0614054
        %v1880 = vmul.f32 %v1876, 1.0614054
        %v1881 = vmul.f32 %v1877, 1.0614054
        %v1882 = vadd.f32 %v1878, -1.4531521
        %v1883 = vadd.f32 %v1879, -1.4531521
        %v1884 = vadd.f32 %v1880, -1.4531521
        %v1885 = vadd.f32 %v1881, -1.4531521
        %v1886 = vmul.f32 %v1874, %v1882
        %v1887 = vmul.f32 %v1875, %v1883
        %v1888 = vmul.f32 %v1876, %v1884
        %v1889 = vmul.f32 %v1877, %v1885
        %v1890 = vadd.f32 %v1886, 1.4214138
        %v1891 = vadd.f32 %v1887, 1.4214138
        %v1892 = vadd.f32 %v1888, 1.4214138
        %v1893 = vadd.f32 %v1889, 1.4214138
        %v1894 = vmul.f32 %v1874, %v1890
        %v1895 = vmul.f32 %v1875, %v1891
        %v1896 = vmul.f32 %v1876, %v1892
        %v1897 = vmul.f32 %v1877, %v1893
        %v1898 = vadd.f32 %v1894, -0.28449672
        %v1899 = vadd.f32 %v1895, -0.28449672
        %v1900 = vadd.f32 %v1896, -0.28449672
        %v1901 = vadd.f32 %v1897, -0.28449672
        %v1902 = vmul.f32 %v1874, %v1898
        %v1903 = vmul.f32 %v1875, %v1899
        %v1904 = vmul.f32 %v1876, %v1900
        %v1905 = vmul.f32 %v1877, %v1901
        %v1906 = vadd.f32 %v1902, 0.2548296
        %v1907 = vadd.f32 %v1903, 0.2548296
        %v1908 = vadd.f32 %v1904, 0.2548296
        %v1909 = vadd.f32 %v1905, 0.2548296
        %v1910 = vmul.f32 %v1874, %v1906
        %v1911 = vmul.f32 %v1875, %v1907
        %v1912 = vmul.f32 %v1876, %v1908
        %v1913 = vmul.f32 %v1877, %v1909
        %v1914 = vsub.f32 0.0, %v1862
        %v1915 = vsub.f32 0.0, %v1863
        %v1916 = vsub.f32 0.0, %v1864
        %v1917 = vsub.f32 0.0, %v1865
        %v1918 = vmul.f32 %v1914, %v1862
        %v1919 = vmul.f32 %v1915, %v1863
        %v1920 = vmul.f32 %v1916, %v1864
        %v1921 = vmul.f32 %v1917, %v1865
        %v1922 = vmul.f32 %v1918, 1.442695
        %v1923 = vpow.pop %v1922
        %v1924 = vmul.f32 %v1919, 1.442695
        %v1925 = vpow.pop %v1924
        %v1926 = vmul.f32 %v1920, 1.442695
        %v1927 = vpow.pop %v1926
        %v1928 = vmul.f32 %v1921, 1.442695
        %v1929 = vpow.pop %v1928
        %v1930 = vmul.f32 %v1910, %v1923
        %v1931 = vmul.f32 %v1911, %v1925
        %v1932 = vmul.f32 %v1912, %v1927
        %v1933 = vmul.f32 %v1913, %v1929
        %v1934 = vsub.f32 1.0, %v1930
        %v1935 = vsub.f32 1.0, %v1931
        %v1936 = vsub.f32 1.0, %v1932
        %v1937 = vsub.f32 1.0, %v1933
        %vm1938 = vcmp.ge.f32.partialorder %v1858, 0.0
        %vm1939 = vcmp.ge.f32.partialorder %v1859, 0.0
        %vm1940 = vcmp.ge.f32.partialorder %v1860, 0.0
        %vm1941 = vcmp.ge.f32.partialorder %v1861, 0.0
        %v1942 = vsub.f32 0.0, %v1934
        %v1943 = vsub.f32 0.0, %v1935
        %v1944 = vsub.f32 0.0, %v1936
        %v1945 = vsub.f32 0.0, %v1937
        %v1946 = vsel %vm1938, %v1934, %v1942
        %v1947 = vsel %vm1939, %v1935, %v1943
        %v1948 = vsel %vm1940, %v1936, %v1944
        %v1949 = vsel %vm1941, %v1937, %v1945
        %v1950 = vadd.f32 %v1946, 1.0
        %v1951 = vadd.f32 %v1947, 1.0
        %v1952 = vadd.f32 %v1948, 1.0
        %v1953 = vadd.f32 %v1949, 1.0
        %v1954 = vmul.f32 %v1854, %v1950
        %v1955 = vmul.f32 %v1855, %v1951
        %v1956 = vmul.f32 %v1856, %v1952
        %v1957 = vmul.f32 %v1857, %v1953
        %v1958 = vpack.c.bf16 %v1955, %v1954
        %v1959 = vpack.c.bf16 %v1957, %v1956
        %s1960 = scalar_lea.vmem %s7, 32
        %v1961 = vld [vmem:[%s1960] sm:$0xf]
        %v1962 = vld [vmem:[%s1960 + $0x4] sm:$0xf]
        %v1963 = vld [vmem:[%s1960 + $0x8] sm:$0xf]
        %v1964 = vld [vmem:[%s1960 + $0xc] sm:$0xf]
        %v1969 = vunpack.c.l.b16 %v1961
        %v1970 = vunpack.c.l.b16 %v1962
        %v1971 = vunpack.c.l.b16 %v1963
        %v1972 = vunpack.c.l.b16 %v1964
        %v1973 = vpack.c.b16 %v1970, %v1969
        %v1974 = vpack.c.b16 %v1972, %v1971
        %v1976 = vsel %vm656, %v1973, 0
        %v1979 = vsel %vm656, %v1974, 0
        %1981 = vmatprep.subr.bf16.mxu0 0
        %1982 = vmatpush1.bf16.msra.mxu0 %v1958
        %1983 = vmatprep.subr.bf16.mxu0 0
        %1984 = vmatpush1.bf16.msra.mxu0 %v1959
        %1985 = vmatprep.subr.bf16.mxu0 0
        %1986 = vmatpush1.bf16.msra.mxu0 0
        %1987 = vmatprep.subr.bf16.mxu0 0
        %1988 = vmatpush1.bf16.msra.mxu0 0
        %1989 = vmatprep.subr.bf16.mxu0 0
        %1990 = vmatpush1.bf16.msra.mxu0 0
        %1991 = vmatprep.subr.bf16.mxu0 0
        %1992 = vmatpush1.bf16.msra.mxu0 0
        %1993 = vmatprep.subr.bf16.mxu0 0
        %1994 = vmatpush1.bf16.msra.mxu0 0
        %1995 = vmatprep.subr.bf16.mxu0 0
        %1996 = vmatpush1.bf16.msra.mxu0 0
        %1997 = vmatprep.subr.bf16.mxu0 0
        %1998 = vmatpush1.bf16.msra.mxu0 0
        %1999 = vmatprep.subr.bf16.mxu0 0
        %2000 = vmatpush1.bf16.msra.mxu0 0
        %2001 = vmatprep.subr.bf16.mxu0 0
        %2002 = vmatpush1.bf16.msra.mxu0 0
        %2003 = vmatprep.subr.bf16.mxu0 0
        %2004 = vmatpush1.bf16.msra.mxu0 0
        %2005 = vmatprep.subr.bf16.mxu0 0
        %2006 = vmatpush1.bf16.msra.mxu0 0
        %2007 = vmatprep.subr.bf16.mxu0 0
        %2008 = vmatpush1.bf16.msra.mxu0 0
        %2009 = vmatprep.subr.bf16.mxu0 0
        %2010 = vmatpush1.bf16.msra.mxu0 0
        %2011 = vmatprep.subr.bf16.mxu0 0
        %2012 = vmatpush1.bf16.msra.mxu0 0
        %2013 = vmatprep.mubr.bf16.mxu0 0
        %2014 = vmatmul.mubr.bf16.gmra.mrb[0].mxu0 %v1976
        %v2015 = vpop.f32.mrb[0].mxu0
        %v2016 = vadd.f32 0.0, %v2015
        %v2017 = vpop.f32.mrb[0].mxu0
        %v2018 = vpop.f32.mrb[0].mxu0
        %v2019 = vadd.f32 0.0, %v2018
        %v2020 = vpop.f32.mrb[0].mxu0
        %2021 = vmatprep.mubr.bf16.mxu0 0
        %2022 = vmatmul.mubr.bf16.gmra.mrb[0].mxu0 %v1979
        %v2023 = vpop.f32.mrb[0].mxu0
        %v2024 = vadd.f32 0.0, %v2023
        %v2025 = vpop.f32.mrb[0].mxu0
        %v2026 = vpop.f32.mrb[0].mxu0
        %v2027 = vadd.f32 0.0, %v2026
        %v2028 = vpop.f32.mrb[0].mxu0
        %2029 = vdwg.mxu0
        %v2030 = vadd.f32 %v1760, %v2016
        %v2031 = vadd.f32 %v1761, %v2019
        %v2032 = vadd.f32 %v1762, %v2024
        %v2033 = vadd.f32 %v1763, %v2027
        %s2034 = scalar_lea.vmem %s5, 48
        %v2035 = vld [vmem:[%s2034] sm:$0xf]
        %v2036 = vld [vmem:[%s2034 + $0x4] sm:$0xf]
        %v2037 = vld [vmem:[%s2034 + $0x8] sm:$0xf]
        %v2038 = vld [vmem:[%s2034 + $0xc] sm:$0xf]
        %2040 = vset.pattern.permute.xlu0 0
        %2041 = vperm.xlu0 %2040, %v592
        %v2042 = vpop.permute.xlu0 %2041
        %2045 = vset.pattern.permute.xlu0 0
        %2046 = vperm.xlu0 %2045, %v593
        %v2047 = vpop.permute.xlu0 %2046
        %2050 = vset.pattern.permute.xlu0 0
        %2051 = vperm.xlu0 %2050, %v594
        %v2052 = vpop.permute.xlu0 %2051
        %2055 = vset.pattern.permute.xlu0 0
        %2056 = vperm.xlu0 %2055, %v595
        %v2057 = vpop.permute.xlu0 %2056
        %v2063 = vunpack.c.l.b16 %v2035
        %v2064 = vunpack.c.l.b16 %v2036
        %v2065 = vunpack.c.l.b16 %v2037
        %v2066 = vunpack.c.l.b16 %v2038
        %v2067 = vpack.c.b16 %v2064, %v2063
        %v2068 = vpack.c.b16 %v2066, %v2065
        %v2070 = vsel %vm656, %v2067, 0
        %v2073 = vsel %vm656, %v2068, 0
        %2075 = vmatprep.subr.bf16.mxu0 0
        %2076 = vmatpush1.bf16.msra.mxu0 %v1220
        %2077 = vmatprep.subr.bf16.mxu0 0
        %2078 = vmatpush1.bf16.msra.mxu0 %v1221
        %2079 = vmatprep.subr.bf16.mxu0 0
        %2080 = vmatpush1.bf16.msra.mxu0 0
        %2081 = vmatprep.subr.bf16.mxu0 0
        %2082 = vmatpush1.bf16.msra.mxu0 0
        %2083 = vmatprep.subr.bf16.mxu0 0
        %2084 = vmatpush1.bf16.msra.mxu0 0
        %2085 = vmatprep.subr.bf16.mxu0 0
        %2086 = vmatpush1.bf16.msra.mxu0 0
        %2087 = vmatprep.subr.bf16.mxu0 0
        %2088 = vmatpush1.bf16.msra.mxu0 0
        %2089 = vmatprep.subr.bf16.mxu0 0
        %2090 = vmatpush1.bf16.msra.mxu0 0
        %2091 = vmatprep.subr.bf16.mxu0 0
        %2092 = vmatpush1.bf16.msra.mxu0 0
        %2093 = vmatprep.subr.bf16.mxu0 0
        %2094 = vmatpush1.bf16.msra.mxu0 0
        %2095 = vmatprep.subr.bf16.mxu0 0
        %2096 = vmatpush1.bf16.msra.mxu0 0
        %2097 = vmatprep.subr.bf16.mxu0 0
        %2098 = vmatpush1.bf16.msra.mxu0 0
        %2099 = vmatprep.subr.bf16.mxu0 0
        %2100 = vmatpush1.bf16.msra.mxu0 0
        %2101 = vmatprep.subr.bf16.mxu0 0
        %2102 = vmatpush1.bf16.msra.mxu0 0
        %2103 = vmatprep.subr.bf16.mxu0 0
        %2104 = vmatpush1.bf16.msra.mxu0 0
        %2105 = vmatprep.subr.bf16.mxu0 0
        %2106 = vmatpush1.bf16.msra.mxu0 0
        %2107 = vmatprep.mubr.bf16.mxu0 0
        %2108 = vmatmul.mubr.bf16.gmra.mrb[0].mxu0 %v2070
        %v2109 = vpop.f32.mrb[0].mxu0
        %v2110 = vadd.f32 %v2042, %v2109
        %v2111 = vpop.f32.mrb[0].mxu0
        %v2112 = vpop.f32.mrb[0].mxu0
        %v2113 = vadd.f32 %v2047, %v2112
        %v2114 = vpop.f32.mrb[0].mxu0
        %2115 = vmatprep.mubr.bf16.mxu0 0
        %2116 = vmatmul.mubr.bf16.gmra.mrb[0].mxu0 %v2073
        %v2117 = vpop.f32.mrb[0].mxu0
        %v2118 = vadd.f32 %v2052, %v2117
        %v2119 = vpop.f32.mrb[0].mxu0
        %v2120 = vpop.f32.mrb[0].mxu0
        %v2121 = vadd.f32 %v2057, %v2120
        %v2122 = vpop.f32.mrb[0].mxu0
        %2123 = vdwg.mxu0
        %v2124 = vmul.f32 %v2110, 0.5
        %v2125 = vmul.f32 %v2113, 0.5
        %v2126 = vmul.f32 %v2118, 0.5
        %v2127 = vmul.f32 %v2121, 0.5
        %v2128 = vmul.f32 %v2110, 0.70710677
        %v2129 = vmul.f32 %v2113, 0.70710677
        %v2130 = vmul.f32 %v2118, 0.70710677
        %v2131 = vmul.f32 %v2121, 0.70710677
        %v2132 = vand.u32 2147483647, %v2128
        %v2133 = vand.u32 2147483647, %v2129
        %v2134 = vand.u32 2147483647, %v2130
        %v2135 = vand.u32 2147483647, %v2131
        %v2136 = vmul.f32 %v2132, 0.3275911
        %v2137 = vmul.f32 %v2133, 0.3275911
        %v2138 = vmul.f32 %v2134, 0.3275911
        %v2139 = vmul.f32 %v2135, 0.3275911
        %v2140 = vadd.f32 %v2136, 1.0
        %v2141 = vadd.f32 %v2137, 1.0
        %v2142 = vadd.f32 %v2138, 1.0
        %v2143 = vadd.f32 %v2139, 1.0
        %v2144 = vrcp.pop %v2140
        %v2145 = vrcp.pop %v2141
        %v2146 = vrcp.pop %v2142
        %v2147 = vrcp.pop %v2143
        %v2148 = vmul.f32 %v2144, 1.0614054
        %v2149 = vmul.f32 %v2145, 1.0614054
        %v2150 = vmul.f32 %v2146, 1.0614054
        %v2151 = vmul.f32 %v2147, 1.0614054
        %v2152 = vadd.f32 %v2148, -1.4531521
        %v2153 = vadd.f32 %v2149, -1.4531521
        %v2154 = vadd.f32 %v2150, -1.4531521
        %v2155 = vadd.f32 %v2151, -1.4531521
        %v2156 = vmul.f32 %v2144, %v2152
        %v2157 = vmul.f32 %v2145, %v2153
        %v2158 = vmul.f32 %v2146, %v2154
        %v2159 = vmul.f32 %v2147, %v2155
        %v2160 = vadd.f32 %v2156, 1.4214138
        %v2161 = vadd.f32 %v2157, 1.4214138
        %v2162 = vadd.f32 %v2158, 1.4214138
        %v2163 = vadd.f32 %v2159, 1.4214138
        %v2164 = vmul.f32 %v2144, %v2160
        %v2165 = vmul.f32 %v2145, %v2161
        %v2166 = vmul.f32 %v2146, %v2162
        %v2167 = vmul.f32 %v2147, %v2163
        %v2168 = vadd.f32 %v2164, -0.28449672
        %v2169 = vadd.f32 %v2165, -0.28449672
        %v2170 = vadd.f32 %v2166, -0.28449672
        %v2171 = vadd.f32 %v2167, -0.28449672
        %v2172 = vmul.f32 %v2144, %v2168
        %v2173 = vmul.f32 %v2145, %v2169
        %v2174 = vmul.f32 %v2146, %v2170
        %v2175 = vmul.f32 %v2147, %v2171
        %v2176 = vadd.f32 %v2172, 0.2548296
        %v2177 = vadd.f32 %v2173, 0.2548296
        %v2178 = vadd.f32 %v2174, 0.2548296
        %v2179 = vadd.f32 %v2175, 0.2548296
        %v2180 = vmul.f32 %v2144, %v2176
        %v2181 = vmul.f32 %v2145, %v2177
        %v2182 = vmul.f32 %v2146, %v2178
        %v2183 = vmul.f32 %v2147, %v2179
        %v2184 = vsub.f32 0.0, %v2132
        %v2185 = vsub.f32 0.0, %v2133
        %v2186 = vsub.f32 0.0, %v2134
        %v2187 = vsub.f32 0.0, %v2135
        %v2188 = vmul.f32 %v2184, %v2132
        %v2189 = vmul.f32 %v2185, %v2133
        %v2190 = vmul.f32 %v2186, %v2134
        %v2191 = vmul.f32 %v2187, %v2135
        %v2192 = vmul.f32 %v2188, 1.442695
        %v2193 = vpow.pop %v2192
        %v2194 = vmul.f32 %v2189, 1.442695
        %v2195 = vpow.pop %v2194
        %v2196 = vmul.f32 %v2190, 1.442695
        %v2197 = vpow.pop %v2196
        %v2198 = vmul.f32 %v2191, 1.442695
        %v2199 = vpow.pop %v2198
        %v2200 = vmul.f32 %v2180, %v2193
        %v2201 = vmul.f32 %v2181, %v2195
        %v2202 = vmul.f32 %v2182, %v2197
        %v2203 = vmul.f32 %v2183, %v2199
        %v2204 = vsub.f32 1.0, %v2200
        %v2205 = vsub.f32 1.0, %v2201
        %v2206 = vsub.f32 1.0, %v2202
        %v2207 = vsub.f32 1.0, %v2203
        %vm2208 = vcmp.ge.f32.partialorder %v2128, 0.0
        %vm2209 = vcmp.ge.f32.partialorder %v2129, 0.0
        %vm2210 = vcmp.ge.f32.partialorder %v2130, 0.0
        %vm2211 = vcmp.ge.f32.partialorder %v2131, 0.0
        %v2212 = vsub.f32 0.0, %v2204
        %v2213 = vsub.f32 0.0, %v2205
        %v2214 = vsub.f32 0.0, %v2206
        %v2215 = vsub.f32 0.0, %v2207
        %v2216 = vsel %vm2208, %v2204, %v2212
        %v2217 = vsel %vm2209, %v2205, %v2213
        %v2218 = vsel %vm2210, %v2206, %v2214
        %v2219 = vsel %vm2211, %v2207, %v2215
        %v2220 = vadd.f32 %v2216, 1.0
        %v2221 = vadd.f32 %v2217, 1.0
        %v2222 = vadd.f32 %v2218, 1.0
        %v2223 = vadd.f32 %v2219, 1.0
        %v2224 = vmul.f32 %v2124, %v2220
        %v2225 = vmul.f32 %v2125, %v2221
        %v2226 = vmul.f32 %v2126, %v2222
        %v2227 = vmul.f32 %v2127, %v2223
        %v2228 = vpack.c.bf16 %v2225, %v2224
        %v2229 = vpack.c.bf16 %v2227, %v2226
        %s2230 = scalar_lea.vmem %s7, 48
        %v2231 = vld [vmem:[%s2230] sm:$0xf]
        %v2232 = vld [vmem:[%s2230 + $0x4] sm:$0xf]
        %v2233 = vld [vmem:[%s2230 + $0x8] sm:$0xf]
        %v2234 = vld [vmem:[%s2230 + $0xc] sm:$0xf]
        %v2239 = vunpack.c.l.b16 %v2231
        %v2240 = vunpack.c.l.b16 %v2232
        %v2241 = vunpack.c.l.b16 %v2233
        %v2242 = vunpack.c.l.b16 %v2234
        %v2243 = vpack.c.b16 %v2240, %v2239
        %v2244 = vpack.c.b16 %v2242, %v2241
        %v2246 = vsel %vm656, %v2243, 0
        %v2249 = vsel %vm656, %v2244, 0
        %2251 = vmatprep.subr.bf16.mxu0 0
        %2252 = vmatpush1.bf16.msra.mxu0 %v2228
        %2253 = vmatprep.subr.bf16.mxu0 0
        %2254 = vmatpush1.bf16.msra.mxu0 %v2229
        %2255 = vmatprep.subr.bf16.mxu0 0
        %2256 = vmatpush1.bf16.msra.mxu0 0
        %2257 = vmatprep.subr.bf16.mxu0 0
        %2258 = vmatpush1.bf16.msra.mxu0 0
        %2259 = vmatprep.subr.bf16.mxu0 0
        %2260 = vmatpush1.bf16.msra.mxu0 0
        %2261 = vmatprep.subr.bf16.mxu0 0
        %2262 = vmatpush1.bf16.msra.mxu0 0
        %2263 = vmatprep.subr.bf16.mxu0 0
        %2264 = vmatpush1.bf16.msra.mxu0 0
        %2265 = vmatprep.subr.bf16.mxu0 0
        %2266 = vmatpush1.bf16.msra.mxu0 0
        %2267 = vmatprep.subr.bf16.mxu0 0
        %2268 = vmatpush1.bf16.msra.mxu0 0
        %2269 = vmatprep.subr.bf16.mxu0 0
        %2270 = vmatpush1.bf16.msra.mxu0 0
        %2271 = vmatprep.subr.bf16.mxu0 0
        %2272 = vmatpush1.bf16.msra.mxu0 0
        %2273 = vmatprep.subr.bf16.mxu0 0
        %2274 = vmatpush1.bf16.msra.mxu0 0
        %2275 = vmatprep.subr.bf16.mxu0 0
        %2276 = vmatpush1.bf16.msra.mxu0 0
        %2277 = vmatprep.subr.bf16.mxu0 0
        %2278 = vmatpush1.bf16.msra.mxu0 0
        %2279 = vmatprep.subr.bf16.mxu0 0
        %2280 = vmatpush1.bf16.msra.mxu0 0
        %2281 = vmatprep.subr.bf16.mxu0 0
        %2282 = vmatpush1.bf16.msra.mxu0 0
        %2283 = vmatprep.mubr.bf16.mxu0 0
        %2284 = vmatmul.mubr.bf16.gmra.mrb[0].mxu0 %v2246
        %v2285 = vpop.f32.mrb[0].mxu0
        %v2286 = vadd.f32 0.0, %v2285
        %v2287 = vpop.f32.mrb[0].mxu0
        %v2288 = vpop.f32.mrb[0].mxu0
        %v2289 = vadd.f32 0.0, %v2288
        %v2290 = vpop.f32.mrb[0].mxu0
        %2291 = vmatprep.mubr.bf16.mxu0 0
        %2292 = vmatmul.mubr.bf16.gmra.mrb[0].mxu0 %v2249
        %v2293 = vpop.f32.mrb[0].mxu0
        %v2294 = vadd.f32 0.0, %v2293
        %v2295 = vpop.f32.mrb[0].mxu0
        %v2296 = vpop.f32.mrb[0].mxu0
        %v2297 = vadd.f32 0.0, %v2296
        %v2298 = vpop.f32.mrb[0].mxu0
        %2299 = vdwg.mxu0
        %v2300 = vadd.f32 %v2030, %v2286
        %v2301 = vadd.f32 %v2031, %v2289
        %v2302 = vadd.f32 %v2032, %v2294
        %v2303 = vadd.f32 %v2033, %v2297
        %2304 = vst [vmem:[%s461] sm:$0xff] %v2300
        %2305 = vst [vmem:[%s461 + $0x8] sm:$0xff] %v2301
        %2306 = vst [vmem:[%s461 + $0x10] sm:$0xff] %v2302
        %2307 = vst [vmem:[%s461 + $0x18] sm:$0xff] %v2303
        %v2308 = vld [vmem:[%s864] sm:$0xff]
        %v2309 = vld [vmem:[%s864 + $0x8] sm:$0xff]
        %v2310 = vld [vmem:[%s864 + $0x10] sm:$0xff]
        %v2311 = vld [vmem:[%s864 + $0x18] sm:$0xff]
        %v2312 = vld [vmem:[#allocation3] sm:$0xff]
        %v2313 = vld [vmem:[#allocation3 + $0x8] sm:$0xff]
        %v2314 = vunpack.c.l.bf16 %v2312
        %v2315 = vunpack.c.h.bf16 %v2312
        %v2316 = vunpack.c.l.bf16 %v2313
        %v2317 = vunpack.c.h.bf16 %v2313
        %v2318 = vmul.f32 %v2308, %v2314
        %v2319 = vmul.f32 %v2309, %v2315
        %v2320 = vmul.f32 %v2310, %v2316
        %v2321 = vmul.f32 %v2311, %v2317
        %v2322 = vpack.c.bf16 %v2319, %v2318
        %v2323 = vpack.c.bf16 %v2321, %v2320
        %2324 = vmatprep.subr.bf16.mxu0 0
        %2325 = vmatpush1.bf16.msra.mxu0 %v2322
        %2326 = vmatprep.subr.bf16.mxu0 0
        %2327 = vmatpush1.bf16.msra.mxu0 %v2323
        %2328 = vmatprep.subr.bf16.mxu0 0
        %2329 = vmatpush1.bf16.msra.mxu0 0
        %2330 = vmatprep.subr.bf16.mxu0 0
        %2331 = vmatpush1.bf16.msra.mxu0 0
        %2332 = vmatprep.subr.bf16.mxu0 0
        %2333 = vmatpush1.bf16.msra.mxu0 0
        %2334 = vmatprep.subr.bf16.mxu0 0
        %2335 = vmatpush1.bf16.msra.mxu0 0
        %2336 = vmatprep.subr.bf16.mxu0 0
        %2337 = vmatpush1.bf16.msra.mxu0 0
        %2338 = vmatprep.subr.bf16.mxu0 0
        %2339 = vmatpush1.bf16.msra.mxu0 0
        %2340 = vmatprep.subr.bf16.mxu0 0
        %2341 = vmatpush1.bf16.msra.mxu0 0
        %2342 = vmatprep.subr.bf16.mxu0 0
        %2343 = vmatpush1.bf16.msra.mxu0 0
        %2344 = vmatprep.subr.bf16.mxu0 0
        %2345 = vmatpush1.bf16.msra.mxu0 0
        %2346 = vmatprep.subr.bf16.mxu0 0
        %2347 = vmatpush1.bf16.msra.mxu0 0
        %2348 = vmatprep.subr.bf16.mxu0 0
        %2349 = vmatpush1.bf16.msra.mxu0 0
        %2350 = vmatprep.subr.bf16.mxu0 0
        %2351 = vmatpush1.bf16.msra.mxu0 0
        %2352 = vmatprep.subr.bf16.mxu0 0
        %2353 = vmatpush1.bf16.msra.mxu0 0
        %2354 = vmatprep.subr.bf16.mxu0 0
        %2355 = vmatpush1.bf16.msra.mxu0 0
        %2356 = vmatprep.mubr.bf16.mxu0 0
        %2357 = vmatmul.mubr.bf16.gmra.mrb[0].mxu0 %v896
        %v2358 = vpop.f32.mrb[0].mxu0
        %v2359 = vadd.f32 0.0, %v2358
        %v2360 = vpop.f32.mrb[0].mxu0
        %v2361 = vpop.f32.mrb[0].mxu0
        %v2362 = vpop.f32.mrb[0].mxu0
        %2363 = vdwg.mxu0
        %v2364 = vld [vmem:[%s871] sm:$0xff]
        %v2365 = vld [vmem:[%s871 + $0x8] sm:$0xff]
        %v2366 = vunpack.c.l.bf16 %v2364
        %v2367 = vunpack.c.h.bf16 %v2364
        %v2368 = vunpack.c.l.bf16 %v2365
        %v2369 = vunpack.c.h.bf16 %v2365
        %v2370 = vmul.f32 %v2308, %v2366
        %v2371 = vmul.f32 %v2309, %v2367
        %v2372 = vmul.f32 %v2310, %v2368
        %v2373 = vmul.f32 %v2311, %v2369
        %v2374 = vpack.c.bf16 %v2371, %v2370
        %v2375 = vpack.c.bf16 %v2373, %v2372
        %2376 = vmatprep.subr.bf16.mxu0 0
        %2377 = vmatpush1.bf16.msra.mxu0 %v2374
        %2378 = vmatprep.subr.bf16.mxu0 0
        %2379 = vmatpush1.bf16.msra.mxu0 %v2375
        %2380 = vmatprep.subr.bf16.mxu0 0
        %2381 = vmatpush1.bf16.msra.mxu0 0
        %2382 = vmatprep.subr.bf16.mxu0 0
        %2383 = vmatpush1.bf16.msra.mxu0 0
        %2384 = vmatprep.subr.bf16.mxu0 0
        %2385 = vmatpush1.bf16.msra.mxu0 0
        %2386 = vmatprep.subr.bf16.mxu0 0
        %2387 = vmatpush1.bf16.msra.mxu0 0
        %2388 = vmatprep.subr.bf16.mxu0 0
        %2389 = vmatpush1.bf16.msra.mxu0 0
        %2390 = vmatprep.subr.bf16.mxu0 0
        %2391 = vmatpush1.bf16.msra.mxu0 0
        %2392 = vmatprep.subr.bf16.mxu0 0
        %2393 = vmatpush1.bf16.msra.mxu0 0
        %2394 = vmatprep.subr.bf16.mxu0 0
        %2395 = vmatpush1.bf16.msra.mxu0 0
        %2396 = vmatprep.subr.bf16.mxu0 0
        %2397 = vmatpush1.bf16.msra.mxu0 0
        %2398 = vmatprep.subr.bf16.mxu0 0
        %2399 = vmatpush1.bf16.msra.mxu0 0
        %2400 = vmatprep.subr.bf16.mxu0 0
        %2401 = vmatpush1.bf16.msra.mxu0 0
        %2402 = vmatprep.subr.bf16.mxu0 0
        %2403 = vmatpush1.bf16.msra.mxu0 0
        %2404 = vmatprep.subr.bf16.mxu0 0
        %2405 = vmatpush1.bf16.msra.mxu0 0
        %2406 = vmatprep.subr.bf16.mxu0 0
        %2407 = vmatpush1.bf16.msra.mxu0 0
        %2408 = vmatprep.mubr.bf16.mxu0 0
        %2409 = vmatmul.mubr.bf16.gmra.mrb[0].mxu0 %v896
        %v2410 = vpop.f32.mrb[0].mxu0
        %v2411 = vadd.f32 0.0, %v2410
        %v2412 = vpop.f32.mrb[0].mxu0
        %v2413 = vpop.f32.mrb[0].mxu0
        %v2414 = vpop.f32.mrb[0].mxu0
        %2415 = vdwg.mxu0
        %v2416 = vmax.f32 %v2359, %v2411
        %v2417 = vsub.f32 %v2359, %v2416
        %v2418 = vmul.f32 %v2417, 1.442695
        %v2419 = vpow.pop %v2418
        %v2420 = vsub.f32 %v2411, %v2416
        %v2421 = vmul.f32 %v2420, 1.442695
        %v2422 = vpow.pop %v2421
        %v2423 = vadd.f32 %v2419, %v2422
        %v2424 = vrcp.pop %v2423
        %v2425 = vmul.f32 %v2419, %v2424
        %v2426 = vpack.c.bf16 %v2425, %v2425
        %v2428 = vsel %vm1018, %v2426, 0
        %2430 = vmatprep.subr.bf16.mxu0 0
        %2431 = vmatpush1.bf16.msra.mxu0 %v2428
        %2432 = vmatprep.subr.bf16.mxu0 0
        %2433 = vmatpush1.bf16.msra.mxu0 0
        %2434 = vmatprep.subr.bf16.mxu0 0
        %2435 = vmatpush1.bf16.msra.mxu0 0
        %2436 = vmatprep.subr.bf16.mxu0 0
        %2437 = vmatpush1.bf16.msra.mxu0 0
        %2438 = vmatprep.subr.bf16.mxu0 0
        %2439 = vmatpush1.bf16.msra.mxu0 0
        %2440 = vmatprep.subr.bf16.mxu0 0
        %2441 = vmatpush1.bf16.msra.mxu0 0
        %2442 = vmatprep.subr.bf16.mxu0 0
        %2443 = vmatpush1.bf16.msra.mxu0 0
        %2444 = vmatprep.subr.bf16.mxu0 0
        %2445 = vmatpush1.bf16.msra.mxu0 0
        %2446 = vmatprep.subr.bf16.mxu0 0
        %2447 = vmatpush1.bf16.msra.mxu0 0
        %2448 = vmatprep.subr.bf16.mxu0 0
        %2449 = vmatpush1.bf16.msra.mxu0 0
        %2450 = vmatprep.subr.bf16.mxu0 0
        %2451 = vmatpush1.bf16.msra.mxu0 0
        %2452 = vmatprep.subr.bf16.mxu0 0
        %2453 = vmatpush1.bf16.msra.mxu0 0
        %2454 = vmatprep.subr.bf16.mxu0 0
        %2455 = vmatpush1.bf16.msra.mxu0 0
        %2456 = vmatprep.subr.bf16.mxu0 0
        %2457 = vmatpush1.bf16.msra.mxu0 0
        %2458 = vmatprep.subr.bf16.mxu0 0
        %2459 = vmatpush1.bf16.msra.mxu0 0
        %2460 = vmatprep.subr.bf16.mxu0 0
        %2461 = vmatpush1.bf16.msra.mxu0 0
        %2462 = vmatprep.mubr.bf16.mxu0 0
        %2463 = vmatmul.mubr.bf16.gmra.mrb[0].mxu0 %v1013
        %v2464 = vpop.f32.mrb[0].mxu0
        %v2465 = vadd.f32 0.0, %v2464
        %v2466 = vpop.f32.mrb[0].mxu0
        %v2467 = vpop.f32.mrb[0].mxu0
        %v2468 = vadd.f32 0.0, %v2467
        %v2469 = vpop.f32.mrb[0].mxu0
        %2470 = vmatprep.mubr.bf16.mxu0 0
        %2471 = vmatmul.mubr.bf16.gmra.mrb[0].mxu0 %v1016
        %v2472 = vpop.f32.mrb[0].mxu0
        %v2473 = vadd.f32 0.0, %v2472
        %v2474 = vpop.f32.mrb[0].mxu0
        %v2475 = vpop.f32.mrb[0].mxu0
        %v2476 = vadd.f32 0.0, %v2475
        %v2477 = vpop.f32.mrb[0].mxu0
        %2478 = vdwg.mxu0
        %v2479 = vld [vmem:[#allocation4] sm:$0xff]
        %v2480 = vld [vmem:[#allocation4 + $0x8] sm:$0xff]
        %v2481 = vld [vmem:[#allocation4 + $0x10] sm:$0xff]
        %v2482 = vld [vmem:[#allocation4 + $0x18] sm:$0xff]
        %v2483 = vmul.f32 %v2465, %v2479
        %v2484 = vmul.f32 %v2468, %v2480
        %v2485 = vmul.f32 %v2473, %v2481
        %v2486 = vmul.f32 %v2476, %v2482
        %v2487 = vmul.f32 %v2422, %v2424
        %v2488 = vpack.c.bf16 %v2487, %v2487
        %v2490 = vsel %vm1018, %v2488, 0
        %2492 = vmatprep.subr.bf16.mxu0 0
        %2493 = vmatpush1.bf16.msra.mxu0 %v2490
        %2494 = vmatprep.subr.bf16.mxu0 0
        %2495 = vmatpush1.bf16.msra.mxu0 0
        %2496 = vmatprep.subr.bf16.mxu0 0
        %2497 = vmatpush1.bf16.msra.mxu0 0
        %2498 = vmatprep.subr.bf16.mxu0 0
        %2499 = vmatpush1.bf16.msra.mxu0 0
        %2500 = vmatprep.subr.bf16.mxu0 0
        %2501 = vmatpush1.bf16.msra.mxu0 0
        %2502 = vmatprep.subr.bf16.mxu0 0
        %2503 = vmatpush1.bf16.msra.mxu0 0
        %2504 = vmatprep.subr.bf16.mxu0 0
        %2505 = vmatpush1.bf16.msra.mxu0 0
        %2506 = vmatprep.subr.bf16.mxu0 0
        %2507 = vmatpush1.bf16.msra.mxu0 0
        %2508 = vmatprep.subr.bf16.mxu0 0
        %2509 = vmatpush1.bf16.msra.mxu0 0
        %2510 = vmatprep.subr.bf16.mxu0 0
        %2511 = vmatpush1.bf16.msra.mxu0 0
        %2512 = vmatprep.subr.bf16.mxu0 0
        %2513 = vmatpush1.bf16.msra.mxu0 0
        %2514 = vmatprep.subr.bf16.mxu0 0
        %2515 = vmatpush1.bf16.msra.mxu0 0
        %2516 = vmatprep.subr.bf16.mxu0 0
        %2517 = vmatpush1.bf16.msra.mxu0 0
        %2518 = vmatprep.subr.bf16.mxu0 0
        %2519 = vmatpush1.bf16.msra.mxu0 0
        %2520 = vmatprep.subr.bf16.mxu0 0
        %2521 = vmatpush1.bf16.msra.mxu0 0
        %2522 = vmatprep.subr.bf16.mxu0 0
        %2523 = vmatpush1.bf16.msra.mxu0 0
        %2524 = vmatprep.mubr.bf16.mxu0 0
        %2525 = vmatmul.mubr.bf16.gmra.mrb[0].mxu0 %v1013
        %v2526 = vpop.f32.mrb[0].mxu0
        %v2527 = vadd.f32 0.0, %v2526
        %v2528 = vpop.f32.mrb[0].mxu0
        %v2529 = vpop.f32.mrb[0].mxu0
        %v2530 = vadd.f32 0.0, %v2529
        %v2531 = vpop.f32.mrb[0].mxu0
        %2532 = vmatprep.mubr.bf16.mxu0 0
        %2533 = vmatmul.mubr.bf16.gmra.mrb[0].mxu0 %v1016
        %v2534 = vpop.f32.mrb[0].mxu0
        %v2535 = vadd.f32 0.0, %v2534
        %v2536 = vpop.f32.mrb[0].mxu0
        %v2537 = vpop.f32.mrb[0].mxu0
        %v2538 = vadd.f32 0.0, %v2537
        %v2539 = vpop.f32.mrb[0].mxu0
        %2540 = vdwg.mxu0
        %v2541 = vld [vmem:[%s874] sm:$0xff]
        %v2542 = vld [vmem:[%s874 + $0x8] sm:$0xff]
        %v2543 = vld [vmem:[%s874 + $0x10] sm:$0xff]
        %v2544 = vld [vmem:[%s874 + $0x18] sm:$0xff]
        %v2545 = vmul.f32 %v2527, %v2541
        %v2546 = vmul.f32 %v2530, %v2542
        %v2547 = vmul.f32 %v2535, %v2543
        %v2548 = vmul.f32 %v2538, %v2544
        %v2549 = vadd.f32 %v2483, %v2545
        %v2550 = vadd.f32 %v2484, %v2546
        %v2551 = vadd.f32 %v2485, %v2547
        %v2552 = vadd.f32 %v2486, %v2548
        %v2553 = vpack.c.bf16 %v2550, %v2549
        %v2554 = vpack.c.bf16 %v2552, %v2551
        %2555 = vmatprep.subr.bf16.mxu0 0
        %2556 = vmatpush1.bf16.msra.mxu0 %v2553
        %2557 = vmatprep.subr.bf16.mxu0 0
        %2558 = vmatpush1.bf16.msra.mxu0 %v2554
        %2559 = vmatprep.subr.bf16.mxu0 0
        %2560 = vmatpush1.bf16.msra.mxu0 0
        %2561 = vmatprep.subr.bf16.mxu0 0
        %2562 = vmatpush1.bf16.msra.mxu0 0
        %2563 = vmatprep.subr.bf16.mxu0 0
        %2564 = vmatpush1.bf16.msra.mxu0 0
        %2565 = vmatprep.subr.bf16.mxu0 0
        %2566 = vmatpush1.bf16.msra.mxu0 0
        %2567 = vmatprep.subr.bf16.mxu0 0
        %2568 = vmatpush1.bf16.msra.mxu0 0
        %2569 = vmatprep.subr.bf16.mxu0 0
        %2570 = vmatpush1.bf16.msra.mxu0 0
        %2571 = vmatprep.subr.bf16.mxu0 0
        %2572 = vmatpush1.bf16.msra.mxu0 0
        %2573 = vmatprep.subr.bf16.mxu0 0
        %2574 = vmatpush1.bf16.msra.mxu0 0
        %2575 = vmatprep.subr.bf16.mxu0 0
        %2576 = vmatpush1.bf16.msra.mxu0 0
        %2577 = vmatprep.subr.bf16.mxu0 0
        %2578 = vmatpush1.bf16.msra.mxu0 0
        %2579 = vmatprep.subr.bf16.mxu0 0
        %2580 = vmatpush1.bf16.msra.mxu0 0
        %2581 = vmatprep.subr.bf16.mxu0 0
        %2582 = vmatpush1.bf16.msra.mxu0 0
        %2583 = vmatprep.subr.bf16.mxu0 0
        %2584 = vmatpush1.bf16.msra.mxu0 0
        %2585 = vmatprep.subr.bf16.mxu0 0
        %2586 = vmatpush1.bf16.msra.mxu0 0
        %2587 = vmatprep.mubr.bf16.mxu0 0
        %2588 = vmatmul.mubr.bf16.gmra.mrb[0].mxu0 %v1158
        %v2589 = vpop.f32.mrb[0].mxu0
        %v2590 = vadd.f32 %v563, %v2589
        %v2591 = vpop.f32.mrb[0].mxu0
        %v2592 = vpop.f32.mrb[0].mxu0
        %v2593 = vadd.f32 %v568, %v2592
        %v2594 = vpop.f32.mrb[0].mxu0
        %2595 = vmatprep.mubr.bf16.mxu0 0
        %2596 = vmatmul.mubr.bf16.gmra.mrb[0].mxu0 %v1161
        %v2597 = vpop.f32.mrb[0].mxu0
        %v2598 = vadd.f32 %v573, %v2597
        %v2599 = vpop.f32.mrb[0].mxu0
        %v2600 = vpop.f32.mrb[0].mxu0
        %v2601 = vadd.f32 %v578, %v2600
        %v2602 = vpop.f32.mrb[0].mxu0
        %2603 = vdwg.mxu0
        %v2604 = vld [vmem:[%s772] sm:$0xff]
        %v2605 = vld [vmem:[%s772 + $0x8] sm:$0xff]
        %v2606 = vld [vmem:[%s772 + $0x10] sm:$0xff]
        %v2607 = vld [vmem:[%s772 + $0x18] sm:$0xff]
        %v2608 = vadd.f32 %v2604, %v2590
        %v2609 = vadd.f32 %v2605, %v2593
        %v2610 = vadd.f32 %v2606, %v2598
        %v2611 = vadd.f32 %v2607, %v2601
        %v2612 = vpack.c.bf16 %v2609, %v2608
        %v2613 = vpack.c.bf16 %v2611, %v2610
        %v2614 = vadd.f32 %v2608, %v603
        %v2615 = vadd.f32 %v2609, %v608
        %v2616 = vadd.f32 %v2610, %v613
        %v2617 = vadd.f32 %v2611, %v618
        %v2618 = vld [vmem:[%s5] sm:$0xf]
        %v2619 = vld [vmem:[%s5 + $0x4] sm:$0xf]
        %v2620 = vld [vmem:[%s5 + $0x8] sm:$0xf]
        %v2621 = vld [vmem:[%s5 + $0xc] sm:$0xf]
        %v2626 = vunpack.c.l.b16 %v2618
        %v2627 = vunpack.c.l.b16 %v2619
        %v2628 = vunpack.c.l.b16 %v2620
        %v2629 = vunpack.c.l.b16 %v2621
        %v2630 = vpack.c.b16 %v2627, %v2626
        %v2631 = vpack.c.b16 %v2629, %v2628
        %v2633 = vsel %vm656, %v2630, 0
        %v2636 = vsel %vm656, %v2631, 0
        %2638 = vmatprep.subr.bf16.mxu0 0
        %2639 = vmatpush1.bf16.msra.mxu0 %v2612
        %2640 = vmatprep.subr.bf16.mxu0 0
        %2641 = vmatpush1.bf16.msra.mxu0 %v2613
        %2642 = vmatprep.subr.bf16.mxu0 0
        %2643 = vmatpush1.bf16.msra.mxu0 0
        %2644 = vmatprep.subr.bf16.mxu0 0
        %2645 = vmatpush1.bf16.msra.mxu0 0
        %2646 = vmatprep.subr.bf16.mxu0 0
        %2647 = vmatpush1.bf16.msra.mxu0 0
        %2648 = vmatprep.subr.bf16.mxu0 0
        %2649 = vmatpush1.bf16.msra.mxu0 0
        %2650 = vmatprep.subr.bf16.mxu0 0
        %2651 = vmatpush1.bf16.msra.mxu0 0
        %2652 = vmatprep.subr.bf16.mxu0 0
        %2653 = vmatpush1.bf16.msra.mxu0 0
        %2654 = vmatprep.subr.bf16.mxu0 0
        %2655 = vmatpush1.bf16.msra.mxu0 0
        %2656 = vmatprep.subr.bf16.mxu0 0
        %2657 = vmatpush1.bf16.msra.mxu0 0
        %2658 = vmatprep.subr.bf16.mxu0 0
        %2659 = vmatpush1.bf16.msra.mxu0 0
        %2660 = vmatprep.subr.bf16.mxu0 0
        %2661 = vmatpush1.bf16.msra.mxu0 0
        %2662 = vmatprep.subr.bf16.mxu0 0
        %2663 = vmatpush1.bf16.msra.mxu0 0
        %2664 = vmatprep.subr.bf16.mxu0 0
        %2665 = vmatpush1.bf16.msra.mxu0 0
        %2666 = vmatprep.subr.bf16.mxu0 0
        %2667 = vmatpush1.bf16.msra.mxu0 0
        %2668 = vmatprep.subr.bf16.mxu0 0
        %2669 = vmatpush1.bf16.msra.mxu0 0
        %2670 = vmatprep.mubr.bf16.mxu0 0
        %2671 = vmatmul.mubr.bf16.gmra.mrb[0].mxu0 %v2633
        %v2672 = vpop.f32.mrb[0].mxu0
        %v2673 = vadd.f32 %v1233, %v2672
        %v2674 = vpop.f32.mrb[0].mxu0
        %v2675 = vpop.f32.mrb[0].mxu0
        %v2676 = vadd.f32 %v1238, %v2675
        %v2677 = vpop.f32.mrb[0].mxu0
        %2678 = vmatprep.mubr.bf16.mxu0 0
        %2679 = vmatmul.mubr.bf16.gmra.mrb[0].mxu0 %v2636
        %v2680 = vpop.f32.mrb[0].mxu0
        %v2681 = vadd.f32 %v1243, %v2680
        %v2682 = vpop.f32.mrb[0].mxu0
        %v2683 = vpop.f32.mrb[0].mxu0
        %v2684 = vadd.f32 %v1248, %v2683
        %v2685 = vpop.f32.mrb[0].mxu0
        %2686 = vdwg.mxu0
        %v2687 = vmul.f32 %v2673, 0.5
        %v2688 = vmul.f32 %v2676, 0.5
        %v2689 = vmul.f32 %v2681, 0.5
        %v2690 = vmul.f32 %v2684, 0.5
        %v2691 = vmul.f32 %v2673, 0.70710677
        %v2692 = vmul.f32 %v2676, 0.70710677
        %v2693 = vmul.f32 %v2681, 0.70710677
        %v2694 = vmul.f32 %v2684, 0.70710677
        %v2695 = vand.u32 2147483647, %v2691
        %v2696 = vand.u32 2147483647, %v2692
        %v2697 = vand.u32 2147483647, %v2693
        %v2698 = vand.u32 2147483647, %v2694
        %v2699 = vmul.f32 %v2695, 0.3275911
        %v2700 = vmul.f32 %v2696, 0.3275911
        %v2701 = vmul.f32 %v2697, 0.3275911
        %v2702 = vmul.f32 %v2698, 0.3275911
        %v2703 = vadd.f32 %v2699, 1.0
        %v2704 = vadd.f32 %v2700, 1.0
        %v2705 = vadd.f32 %v2701, 1.0
        %v2706 = vadd.f32 %v2702, 1.0
        %v2707 = vrcp.pop %v2703
        %v2708 = vrcp.pop %v2704
        %v2709 = vrcp.pop %v2705
        %v2710 = vrcp.pop %v2706
        %v2711 = vmul.f32 %v2707, 1.0614054
        %v2712 = vmul.f32 %v2708, 1.0614054
        %v2713 = vmul.f32 %v2709, 1.0614054
        %v2714 = vmul.f32 %v2710, 1.0614054
        %v2715 = vadd.f32 %v2711, -1.4531521
        %v2716 = vadd.f32 %v2712, -1.4531521
        %v2717 = vadd.f32 %v2713, -1.4531521
        %v2718 = vadd.f32 %v2714, -1.4531521
        %v2719 = vmul.f32 %v2707, %v2715
        %v2720 = vmul.f32 %v2708, %v2716
        %v2721 = vmul.f32 %v2709, %v2717
        %v2722 = vmul.f32 %v2710, %v2718
        %v2723 = vadd.f32 %v2719, 1.4214138
        %v2724 = vadd.f32 %v2720, 1.4214138
        %v2725 = vadd.f32 %v2721, 1.4214138
        %v2726 = vadd.f32 %v2722, 1.4214138
        %v2727 = vmul.f32 %v2707, %v2723
        %v2728 = vmul.f32 %v2708, %v2724
        %v2729 = vmul.f32 %v2709, %v2725
        %v2730 = vmul.f32 %v2710, %v2726
        %v2731 = vadd.f32 %v2727, -0.28449672
        %v2732 = vadd.f32 %v2728, -0.28449672
        %v2733 = vadd.f32 %v2729, -0.28449672
        %v2734 = vadd.f32 %v2730, -0.28449672
        %v2735 = vmul.f32 %v2707, %v2731
        %v2736 = vmul.f32 %v2708, %v2732
        %v2737 = vmul.f32 %v2709, %v2733
        %v2738 = vmul.f32 %v2710, %v2734
        %v2739 = vadd.f32 %v2735, 0.2548296
        %v2740 = vadd.f32 %v2736, 0.2548296
        %v2741 = vadd.f32 %v2737, 0.2548296
        %v2742 = vadd.f32 %v2738, 0.2548296
        %v2743 = vmul.f32 %v2707, %v2739
        %v2744 = vmul.f32 %v2708, %v2740
        %v2745 = vmul.f32 %v2709, %v2741
        %v2746 = vmul.f32 %v2710, %v2742
        %v2747 = vsub.f32 0.0, %v2695
        %v2748 = vsub.f32 0.0, %v2696
        %v2749 = vsub.f32 0.0, %v2697
        %v2750 = vsub.f32 0.0, %v2698
        %v2751 = vmul.f32 %v2747, %v2695
        %v2752 = vmul.f32 %v2748, %v2696
        %v2753 = vmul.f32 %v2749, %v2697
        %v2754 = vmul.f32 %v2750, %v2698
        %v2755 = vmul.f32 %v2751, 1.442695
        %v2756 = vpow.pop %v2755
        %v2757 = vmul.f32 %v2752, 1.442695
        %v2758 = vpow.pop %v2757
        %v2759 = vmul.f32 %v2753, 1.442695
        %v2760 = vpow.pop %v2759
        %v2761 = vmul.f32 %v2754, 1.442695
        %v2762 = vpow.pop %v2761
        %v2763 = vmul.f32 %v2743, %v2756
        %v2764 = vmul.f32 %v2744, %v2758
        %v2765 = vmul.f32 %v2745, %v2760
        %v2766 = vmul.f32 %v2746, %v2762
        %v2767 = vsub.f32 1.0, %v2763
        %v2768 = vsub.f32 1.0, %v2764
        %v2769 = vsub.f32 1.0, %v2765
        %v2770 = vsub.f32 1.0, %v2766
        %vm2771 = vcmp.ge.f32.partialorder %v2691, 0.0
        %vm2772 = vcmp.ge.f32.partialorder %v2692, 0.0
        %vm2773 = vcmp.ge.f32.partialorder %v2693, 0.0
        %vm2774 = vcmp.ge.f32.partialorder %v2694, 0.0
        %v2775 = vsub.f32 0.0, %v2767
        %v2776 = vsub.f32 0.0, %v2768
        %v2777 = vsub.f32 0.0, %v2769
        %v2778 = vsub.f32 0.0, %v2770
        %v2779 = vsel %vm2771, %v2767, %v2775
        %v2780 = vsel %vm2772, %v2768, %v2776
        %v2781 = vsel %vm2773, %v2769, %v2777
        %v2782 = vsel %vm2774, %v2770, %v2778
        %v2783 = vadd.f32 %v2779, 1.0
        %v2784 = vadd.f32 %v2780, 1.0
        %v2785 = vadd.f32 %v2781, 1.0
        %v2786 = vadd.f32 %v2782, 1.0
        %v2787 = vmul.f32 %v2687, %v2783
        %v2788 = vmul.f32 %v2688, %v2784
        %v2789 = vmul.f32 %v2689, %v2785
        %v2790 = vmul.f32 %v2690, %v2786
        %v2791 = vpack.c.bf16 %v2788, %v2787
        %v2792 = vpack.c.bf16 %v2790, %v2789
        %v2793 = vld [vmem:[%s7] sm:$0xf]
        %v2794 = vld [vmem:[%s7 + $0x4] sm:$0xf]
        %v2795 = vld [vmem:[%s7 + $0x8] sm:$0xf]
        %v2796 = vld [vmem:[%s7 + $0xc] sm:$0xf]
        %v2801 = vunpack.c.l.b16 %v2793
        %v2802 = vunpack.c.l.b16 %v2794
        %v2803 = vunpack.c.l.b16 %v2795
        %v2804 = vunpack.c.l.b16 %v2796
        %v2805 = vpack.c.b16 %v2802, %v2801
        %v2806 = vpack.c.b16 %v2804, %v2803
        %v2808 = vsel %vm656, %v2805, 0
        %v2811 = vsel %vm656, %v2806, 0
        %2813 = vmatprep.subr.bf16.mxu0 0
        %2814 = vmatpush1.bf16.msra.mxu0 %v2791
        %2815 = vmatprep.subr.bf16.mxu0 0
        %2816 = vmatpush1.bf16.msra.mxu0 %v2792
        %2817 = vmatprep.subr.bf16.mxu0 0
        %2818 = vmatpush1.bf16.msra.mxu0 0
        %2819 = vmatprep.subr.bf16.mxu0 0
        %2820 = vmatpush1.bf16.msra.mxu0 0
        %2821 = vmatprep.subr.bf16.mxu0 0
        %2822 = vmatpush1.bf16.msra.mxu0 0
        %2823 = vmatprep.subr.bf16.mxu0 0
        %2824 = vmatpush1.bf16.msra.mxu0 0
        %2825 = vmatprep.subr.bf16.mxu0 0
        %2826 = vmatpush1.bf16.msra.mxu0 0
        %2827 = vmatprep.subr.bf16.mxu0 0
        %2828 = vmatpush1.bf16.msra.mxu0 0
        %2829 = vmatprep.subr.bf16.mxu0 0
        %2830 = vmatpush1.bf16.msra.mxu0 0
        %2831 = vmatprep.subr.bf16.mxu0 0
        %2832 = vmatpush1.bf16.msra.mxu0 0
        %2833 = vmatprep.subr.bf16.mxu0 0
        %2834 = vmatpush1.bf16.msra.mxu0 0
        %2835 = vmatprep.subr.bf16.mxu0 0
        %2836 = vmatpush1.bf16.msra.mxu0 0
        %2837 = vmatprep.subr.bf16.mxu0 0
        %2838 = vmatpush1.bf16.msra.mxu0 0
        %2839 = vmatprep.subr.bf16.mxu0 0
        %2840 = vmatpush1.bf16.msra.mxu0 0
        %2841 = vmatprep.subr.bf16.mxu0 0
        %2842 = vmatpush1.bf16.msra.mxu0 0
        %2843 = vmatprep.subr.bf16.mxu0 0
        %2844 = vmatpush1.bf16.msra.mxu0 0
        %2845 = vmatprep.mubr.bf16.mxu0 0
        %2846 = vmatmul.mubr.bf16.gmra.mrb[0].mxu0 %v2808
        %v2847 = vpop.f32.mrb[0].mxu0
        %v2848 = vadd.f32 0.0, %v2847
        %v2849 = vpop.f32.mrb[0].mxu0
        %v2850 = vpop.f32.mrb[0].mxu0
        %v2851 = vadd.f32 0.0, %v2850
        %v2852 = vpop.f32.mrb[0].mxu0
        %2853 = vmatprep.mubr.bf16.mxu0 0
        %2854 = vmatmul.mubr.bf16.gmra.mrb[0].mxu0 %v2811
        %v2855 = vpop.f32.mrb[0].mxu0
        %v2856 = vadd.f32 0.0, %v2855
        %v2857 = vpop.f32.mrb[0].mxu0
        %v2858 = vpop.f32.mrb[0].mxu0
        %v2859 = vadd.f32 0.0, %v2858
        %v2860 = vpop.f32.mrb[0].mxu0
        %2861 = vdwg.mxu0
        %v2862 = vadd.f32 %v2614, %v2848
        %v2863 = vadd.f32 %v2615, %v2851
        %v2864 = vadd.f32 %v2616, %v2856
        %v2865 = vadd.f32 %v2617, %v2859
        %v2866 = vld [vmem:[%s1494] sm:$0xf]
        %v2867 = vld [vmem:[%s1494 + $0x4] sm:$0xf]
        %v2868 = vld [vmem:[%s1494 + $0x8] sm:$0xf]
        %v2869 = vld [vmem:[%s1494 + $0xc] sm:$0xf]
        %v2874 = vunpack.c.l.b16 %v2866
        %v2875 = vunpack.c.l.b16 %v2867
        %v2876 = vunpack.c.l.b16 %v2868
        %v2877 = vunpack.c.l.b16 %v2869
        %v2878 = vpack.c.b16 %v2875, %v2874
        %v2879 = vpack.c.b16 %v2877, %v2876
        %v2881 = vsel %vm656, %v2878, 0
        %v2884 = vsel %vm656, %v2879, 0
        %2886 = vmatprep.subr.bf16.mxu0 0
        %2887 = vmatpush1.bf16.msra.mxu0 %v2612
        %2888 = vmatprep.subr.bf16.mxu0 0
        %2889 = vmatpush1.bf16.msra.mxu0 %v2613
        %2890 = vmatprep.subr.bf16.mxu0 0
        %2891 = vmatpush1.bf16.msra.mxu0 0
        %2892 = vmatprep.subr.bf16.mxu0 0
        %2893 = vmatpush1.bf16.msra.mxu0 0
        %2894 = vmatprep.subr.bf16.mxu0 0
        %2895 = vmatpush1.bf16.msra.mxu0 0
        %2896 = vmatprep.subr.bf16.mxu0 0
        %2897 = vmatpush1.bf16.msra.mxu0 0
        %2898 = vmatprep.subr.bf16.mxu0 0
        %2899 = vmatpush1.bf16.msra.mxu0 0
        %2900 = vmatprep.subr.bf16.mxu0 0
        %2901 = vmatpush1.bf16.msra.mxu0 0
        %2902 = vmatprep.subr.bf16.mxu0 0
        %2903 = vmatpush1.bf16.msra.mxu0 0
        %2904 = vmatprep.subr.bf16.mxu0 0
        %2905 = vmatpush1.bf16.msra.mxu0 0
        %2906 = vmatprep.subr.bf16.mxu0 0
        %2907 = vmatpush1.bf16.msra.mxu0 0
        %2908 = vmatprep.subr.bf16.mxu0 0
        %2909 = vmatpush1.bf16.msra.mxu0 0
        %2910 = vmatprep.subr.bf16.mxu0 0
        %2911 = vmatpush1.bf16.msra.mxu0 0
        %2912 = vmatprep.subr.bf16.mxu0 0
        %2913 = vmatpush1.bf16.msra.mxu0 0
        %2914 = vmatprep.subr.bf16.mxu0 0
        %2915 = vmatpush1.bf16.msra.mxu0 0
        %2916 = vmatprep.subr.bf16.mxu0 0
        %2917 = vmatpush1.bf16.msra.mxu0 0
        %2918 = vmatprep.mubr.bf16.mxu0 0
        %2919 = vmatmul.mubr.bf16.gmra.mrb[0].mxu0 %v2881
        %v2920 = vpop.f32.mrb[0].mxu0
        %v2921 = vadd.f32 %v1502, %v2920
        %v2922 = vpop.f32.mrb[0].mxu0
        %v2923 = vpop.f32.mrb[0].mxu0
        %v2924 = vadd.f32 %v1507, %v2923
        %v2925 = vpop.f32.mrb[0].mxu0
        %2926 = vmatprep.mubr.bf16.mxu0 0
        %2927 = vmatmul.mubr.bf16.gmra.mrb[0].mxu0 %v2884
        %v2928 = vpop.f32.mrb[0].mxu0
        %v2929 = vadd.f32 %v1512, %v2928
        %v2930 = vpop.f32.mrb[0].mxu0
        %v2931 = vpop.f32.mrb[0].mxu0
        %v2932 = vadd.f32 %v1517, %v2931
        %v2933 = vpop.f32.mrb[0].mxu0
        %2934 = vdwg.mxu0
        %v2935 = vmul.f32 %v2921, 0.5
        %v2936 = vmul.f32 %v2924, 0.5
        %v2937 = vmul.f32 %v2929, 0.5
        %v2938 = vmul.f32 %v2932, 0.5
        %v2939 = vmul.f32 %v2921, 0.70710677
        %v2940 = vmul.f32 %v2924, 0.70710677
        %v2941 = vmul.f32 %v2929, 0.70710677
        %v2942 = vmul.f32 %v2932, 0.70710677
        %v2943 = vand.u32 2147483647, %v2939
        %v2944 = vand.u32 2147483647, %v2940
        %v2945 = vand.u32 2147483647, %v2941
        %v2946 = vand.u32 2147483647, %v2942
        %v2947 = vmul.f32 %v2943, 0.3275911
        %v2948 = vmul.f32 %v2944, 0.3275911
        %v2949 = vmul.f32 %v2945, 0.3275911
        %v2950 = vmul.f32 %v2946, 0.3275911
        %v2951 = vadd.f32 %v2947, 1.0
        %v2952 = vadd.f32 %v2948, 1.0
        %v2953 = vadd.f32 %v2949, 1.0
        %v2954 = vadd.f32 %v2950, 1.0
        %v2955 = vrcp.pop %v2951
        %v2956 = vrcp.pop %v2952
        %v2957 = vrcp.pop %v2953
        %v2958 = vrcp.pop %v2954
        %v2959 = vmul.f32 %v2955, 1.0614054
        %v2960 = vmul.f32 %v2956, 1.0614054
        %v2961 = vmul.f32 %v2957, 1.0614054
        %v2962 = vmul.f32 %v2958, 1.0614054
        %v2963 = vadd.f32 %v2959, -1.4531521
        %v2964 = vadd.f32 %v2960, -1.4531521
        %v2965 = vadd.f32 %v2961, -1.4531521
        %v2966 = vadd.f32 %v2962, -1.4531521
        %v2967 = vmul.f32 %v2955, %v2963
        %v2968 = vmul.f32 %v2956, %v2964
        %v2969 = vmul.f32 %v2957, %v2965
        %v2970 = vmul.f32 %v2958, %v2966
        %v2971 = vadd.f32 %v2967, 1.4214138
        %v2972 = vadd.f32 %v2968, 1.4214138
        %v2973 = vadd.f32 %v2969, 1.4214138
        %v2974 = vadd.f32 %v2970, 1.4214138
        %v2975 = vmul.f32 %v2955, %v2971
        %v2976 = vmul.f32 %v2956, %v2972
        %v2977 = vmul.f32 %v2957, %v2973
        %v2978 = vmul.f32 %v2958, %v2974
        %v2979 = vadd.f32 %v2975, -0.28449672
        %v2980 = vadd.f32 %v2976, -0.28449672
        %v2981 = vadd.f32 %v2977, -0.28449672
        %v2982 = vadd.f32 %v2978, -0.28449672
        %v2983 = vmul.f32 %v2955, %v2979
        %v2984 = vmul.f32 %v2956, %v2980
        %v2985 = vmul.f32 %v2957, %v2981
        %v2986 = vmul.f32 %v2958, %v2982
        %v2987 = vadd.f32 %v2983, 0.2548296
        %v2988 = vadd.f32 %v2984, 0.2548296
        %v2989 = vadd.f32 %v2985, 0.2548296
        %v2990 = vadd.f32 %v2986, 0.2548296
        %v2991 = vmul.f32 %v2955, %v2987
        %v2992 = vmul.f32 %v2956, %v2988
        %v2993 = vmul.f32 %v2957, %v2989
        %v2994 = vmul.f32 %v2958, %v2990
        %v2995 = vsub.f32 0.0, %v2943
        %v2996 = vsub.f32 0.0, %v2944
        %v2997 = vsub.f32 0.0, %v2945
        %v2998 = vsub.f32 0.0, %v2946
        %v2999 = vmul.f32 %v2995, %v2943
        %v3000 = vmul.f32 %v2996, %v2944
        %v3001 = vmul.f32 %v2997, %v2945
        %v3002 = vmul.f32 %v2998, %v2946
        %v3003 = vmul.f32 %v2999, 1.442695
        %v3004 = vpow.pop %v3003
        %v3005 = vmul.f32 %v3000, 1.442695
        %v3006 = vpow.pop %v3005
        %v3007 = vmul.f32 %v3001, 1.442695
        %v3008 = vpow.pop %v3007
        %v3009 = vmul.f32 %v3002, 1.442695
        %v3010 = vpow.pop %v3009
        %v3011 = vmul.f32 %v2991, %v3004
        %v3012 = vmul.f32 %v2992, %v3006
        %v3013 = vmul.f32 %v2993, %v3008
        %v3014 = vmul.f32 %v2994, %v3010
        %v3015 = vsub.f32 1.0, %v3011
        %v3016 = vsub.f32 1.0, %v3012
        %v3017 = vsub.f32 1.0, %v3013
        %v3018 = vsub.f32 1.0, %v3014
        %vm3019 = vcmp.ge.f32.partialorder %v2939, 0.0
        %vm3020 = vcmp.ge.f32.partialorder %v2940, 0.0
        %vm3021 = vcmp.ge.f32.partialorder %v2941, 0.0
        %vm3022 = vcmp.ge.f32.partialorder %v2942, 0.0
        %v3023 = vsub.f32 0.0, %v3015
        %v3024 = vsub.f32 0.0, %v3016
        %v3025 = vsub.f32 0.0, %v3017
        %v3026 = vsub.f32 0.0, %v3018
        %v3027 = vsel %vm3019, %v3015, %v3023
        %v3028 = vsel %vm3020, %v3016, %v3024
        %v3029 = vsel %vm3021, %v3017, %v3025
        %v3030 = vsel %vm3022, %v3018, %v3026
        %v3031 = vadd.f32 %v3027, 1.0
        %v3032 = vadd.f32 %v3028, 1.0
        %v3033 = vadd.f32 %v3029, 1.0
        %v3034 = vadd.f32 %v3030, 1.0
        %v3035 = vmul.f32 %v2935, %v3031
        %v3036 = vmul.f32 %v2936, %v3032
        %v3037 = vmul.f32 %v2937, %v3033
        %v3038 = vmul.f32 %v2938, %v3034
        %v3039 = vpack.c.bf16 %v3036, %v3035
        %v3040 = vpack.c.bf16 %v3038, %v3037
        %v3041 = vld [vmem:[%s1690] sm:$0xf]
        %v3042 = vld [vmem:[%s1690 + $0x4] sm:$0xf]
        %v3043 = vld [vmem:[%s1690 + $0x8] sm:$0xf]
        %v3044 = vld [vmem:[%s1690 + $0xc] sm:$0xf]
        %v3049 = vunpack.c.l.b16 %v3041
        %v3050 = vunpack.c.l.b16 %v3042
        %v3051 = vunpack.c.l.b16 %v3043
        %v3052 = vunpack.c.l.b16 %v3044
        %v3053 = vpack.c.b16 %v3050, %v3049
        %v3054 = vpack.c.b16 %v3052, %v3051
        %v3056 = vsel %vm656, %v3053, 0
        %v3059 = vsel %vm656, %v3054, 0
        %3061 = vmatprep.subr.bf16.mxu0 0
        %3062 = vmatpush1.bf16.msra.mxu0 %v3039
        %3063 = vmatprep.subr.bf16.mxu0 0
        %3064 = vmatpush1.bf16.msra.mxu0 %v3040
        %3065 = vmatprep.subr.bf16.mxu0 0
        %3066 = vmatpush1.bf16.msra.mxu0 0
        %3067 = vmatprep.subr.bf16.mxu0 0
        %3068 = vmatpush1.bf16.msra.mxu0 0
        %3069 = vmatprep.subr.bf16.mxu0 0
        %3070 = vmatpush1.bf16.msra.mxu0 0
        %3071 = vmatprep.subr.bf16.mxu0 0
        %3072 = vmatpush1.bf16.msra.mxu0 0
        %3073 = vmatprep.subr.bf16.mxu0 0
        %3074 = vmatpush1.bf16.msra.mxu0 0
        %3075 = vmatprep.subr.bf16.mxu0 0
        %3076 = vmatpush1.bf16.msra.mxu0 0
        %3077 = vmatprep.subr.bf16.mxu0 0
        %3078 = vmatpush1.bf16.msra.mxu0 0
        %3079 = vmatprep.subr.bf16.mxu0 0
        %3080 = vmatpush1.bf16.msra.mxu0 0
        %3081 = vmatprep.subr.bf16.mxu0 0
        %3082 = vmatpush1.bf16.msra.mxu0 0
        %3083 = vmatprep.subr.bf16.mxu0 0
        %3084 = vmatpush1.bf16.msra.mxu0 0
        %3085 = vmatprep.subr.bf16.mxu0 0
        %3086 = vmatpush1.bf16.msra.mxu0 0
        %3087 = vmatprep.subr.bf16.mxu0 0
        %3088 = vmatpush1.bf16.msra.mxu0 0
        %3089 = vmatprep.subr.bf16.mxu0 0
        %3090 = vmatpush1.bf16.msra.mxu0 0
        %3091 = vmatprep.subr.bf16.mxu0 0
        %3092 = vmatpush1.bf16.msra.mxu0 0
        %3093 = vmatprep.mubr.bf16.mxu0 0
        %3094 = vmatmul.mubr.bf16.gmra.mrb[0].mxu0 %v3056
        %v3095 = vpop.f32.mrb[0].mxu0
        %v3096 = vadd.f32 0.0, %v3095
        %v3097 = vpop.f32.mrb[0].mxu0
        %v3098 = vpop.f32.mrb[0].mxu0
        %v3099 = vadd.f32 0.0, %v3098
        %v3100 = vpop.f32.mrb[0].mxu0
        %3101 = vmatprep.mubr.bf16.mxu0 0
        %3102 = vmatmul.mubr.bf16.gmra.mrb[0].mxu0 %v3059
        %v3103 = vpop.f32.mrb[0].mxu0
        %v3104 = vadd.f32 0.0, %v3103
        %v3105 = vpop.f32.mrb[0].mxu0
        %v3106 = vpop.f32.mrb[0].mxu0
        %v3107 = vadd.f32 0.0, %v3106
        %v3108 = vpop.f32.mrb[0].mxu0
        %3109 = vdwg.mxu0
        %v3110 = vadd.f32 %v2862, %v3096
        %v3111 = vadd.f32 %v2863, %v3099
        %v3112 = vadd.f32 %v2864, %v3104
        %v3113 = vadd.f32 %v2865, %v3107
        %v3114 = vld [vmem:[%s1764] sm:$0xf]
        %v3115 = vld [vmem:[%s1764 + $0x4] sm:$0xf]
        %v3116 = vld [vmem:[%s1764 + $0x8] sm:$0xf]
        %v3117 = vld [vmem:[%s1764 + $0xc] sm:$0xf]
        %v3122 = vunpack.c.l.b16 %v3114
        %v3123 = vunpack.c.l.b16 %v3115
        %v3124 = vunpack.c.l.b16 %v3116
        %v3125 = vunpack.c.l.b16 %v3117
        %v3126 = vpack.c.b16 %v3123, %v3122
        %v3127 = vpack.c.b16 %v3125, %v3124
        %v3129 = vsel %vm656, %v3126, 0
        %v3132 = vsel %vm656, %v3127, 0
        %3134 = vmatprep.subr.bf16.mxu0 0
        %3135 = vmatpush1.bf16.msra.mxu0 %v2612
        %3136 = vmatprep.subr.bf16.mxu0 0
        %3137 = vmatpush1.bf16.msra.mxu0 %v2613
        %3138 = vmatprep.subr.bf16.mxu0 0
        %3139 = vmatpush1.bf16.msra.mxu0 0
        %3140 = vmatprep.subr.bf16.mxu0 0
        %3141 = vmatpush1.bf16.msra.mxu0 0
        %3142 = vmatprep.subr.bf16.mxu0 0
        %3143 = vmatpush1.bf16.msra.mxu0 0
        %3144 = vmatprep.subr.bf16.mxu0 0
        %3145 = vmatpush1.bf16.msra.mxu0 0
        %3146 = vmatprep.subr.bf16.mxu0 0
        %3147 = vmatpush1.bf16.msra.mxu0 0
        %3148 = vmatprep.subr.bf16.mxu0 0
        %3149 = vmatpush1.bf16.msra.mxu0 0
        %3150 = vmatprep.subr.bf16.mxu0 0
        %3151 = vmatpush1.bf16.msra.mxu0 0
        %3152 = vmatprep.subr.bf16.mxu0 0
        %3153 = vmatpush1.bf16.msra.mxu0 0
        %3154 = vmatprep.subr.bf16.mxu0 0
        %3155 = vmatpush1.bf16.msra.mxu0 0
        %3156 = vmatprep.subr.bf16.mxu0 0
        %3157 = vmatpush1.bf16.msra.mxu0 0
        %3158 = vmatprep.subr.bf16.mxu0 0
        %3159 = vmatpush1.bf16.msra.mxu0 0
        %3160 = vmatprep.subr.bf16.mxu0 0
        %3161 = vmatpush1.bf16.msra.mxu0 0
        %3162 = vmatprep.subr.bf16.mxu0 0
        %3163 = vmatpush1.bf16.msra.mxu0 0
        %3164 = vmatprep.subr.bf16.mxu0 0
        %3165 = vmatpush1.bf16.msra.mxu0 0
        %3166 = vmatprep.mubr.bf16.mxu0 0
        %3167 = vmatmul.mubr.bf16.gmra.mrb[0].mxu0 %v3129
        %v3168 = vpop.f32.mrb[0].mxu0
        %v3169 = vadd.f32 %v1772, %v3168
        %v3170 = vpop.f32.mrb[0].mxu0
        %v3171 = vpop.f32.mrb[0].mxu0
        %v3172 = vadd.f32 %v1777, %v3171
        %v3173 = vpop.f32.mrb[0].mxu0
        %3174 = vmatprep.mubr.bf16.mxu0 0
        %3175 = vmatmul.mubr.bf16.gmra.mrb[0].mxu0 %v3132
        %v3176 = vpop.f32.mrb[0].mxu0
        %v3177 = vadd.f32 %v1782, %v3176
        %v3178 = vpop.f32.mrb[0].mxu0
        %v3179 = vpop.f32.mrb[0].mxu0
        %v3180 = vadd.f32 %v1787, %v3179
        %v3181 = vpop.f32.mrb[0].mxu0
        %3182 = vdwg.mxu0
        %v3183 = vmul.f32 %v3169, 0.5
        %v3184 = vmul.f32 %v3172, 0.5
        %v3185 = vmul.f32 %v3177, 0.5
        %v3186 = vmul.f32 %v3180, 0.5
        %v3187 = vmul.f32 %v3169, 0.70710677
        %v3188 = vmul.f32 %v3172, 0.70710677
        %v3189 = vmul.f32 %v3177, 0.70710677
        %v3190 = vmul.f32 %v3180, 0.70710677
        %v3191 = vand.u32 2147483647, %v3187
        %v3192 = vand.u32 2147483647, %v3188
        %v3193 = vand.u32 2147483647, %v3189
        %v3194 = vand.u32 2147483647, %v3190
        %v3195 = vmul.f32 %v3191, 0.3275911
        %v3196 = vmul.f32 %v3192, 0.3275911
        %v3197 = vmul.f32 %v3193, 0.3275911
        %v3198 = vmul.f32 %v3194, 0.3275911
        %v3199 = vadd.f32 %v3195, 1.0
        %v3200 = vadd.f32 %v3196, 1.0
        %v3201 = vadd.f32 %v3197, 1.0
        %v3202 = vadd.f32 %v3198, 1.0
        %v3203 = vrcp.pop %v3199
        %v3204 = vrcp.pop %v3200
        %v3205 = vrcp.pop %v3201
        %v3206 = vrcp.pop %v3202
        %v3207 = vmul.f32 %v3203, 1.0614054
        %v3208 = vmul.f32 %v3204, 1.0614054
        %v3209 = vmul.f32 %v3205, 1.0614054
        %v3210 = vmul.f32 %v3206, 1.0614054
        %v3211 = vadd.f32 %v3207, -1.4531521
        %v3212 = vadd.f32 %v3208, -1.4531521
        %v3213 = vadd.f32 %v3209, -1.4531521
        %v3214 = vadd.f32 %v3210, -1.4531521
        %v3215 = vmul.f32 %v3203, %v3211
        %v3216 = vmul.f32 %v3204, %v3212
        %v3217 = vmul.f32 %v3205, %v3213
        %v3218 = vmul.f32 %v3206, %v3214
        %v3219 = vadd.f32 %v3215, 1.4214138
        %v3220 = vadd.f32 %v3216, 1.4214138
        %v3221 = vadd.f32 %v3217, 1.4214138
        %v3222 = vadd.f32 %v3218, 1.4214138
        %v3223 = vmul.f32 %v3203, %v3219
        %v3224 = vmul.f32 %v3204, %v3220
        %v3225 = vmul.f32 %v3205, %v3221
        %v3226 = vmul.f32 %v3206, %v3222
        %v3227 = vadd.f32 %v3223, -0.28449672
        %v3228 = vadd.f32 %v3224, -0.28449672
        %v3229 = vadd.f32 %v3225, -0.28449672
        %v3230 = vadd.f32 %v3226, -0.28449672
        %v3231 = vmul.f32 %v3203, %v3227
        %v3232 = vmul.f32 %v3204, %v3228
        %v3233 = vmul.f32 %v3205, %v3229
        %v3234 = vmul.f32 %v3206, %v3230
        %v3235 = vadd.f32 %v3231, 0.2548296
        %v3236 = vadd.f32 %v3232, 0.2548296
        %v3237 = vadd.f32 %v3233, 0.2548296
        %v3238 = vadd.f32 %v3234, 0.2548296
        %v3239 = vmul.f32 %v3203, %v3235
        %v3240 = vmul.f32 %v3204, %v3236
        %v3241 = vmul.f32 %v3205, %v3237
        %v3242 = vmul.f32 %v3206, %v3238
        %v3243 = vsub.f32 0.0, %v3191
        %v3244 = vsub.f32 0.0, %v3192
        %v3245 = vsub.f32 0.0, %v3193
        %v3246 = vsub.f32 0.0, %v3194
        %v3247 = vmul.f32 %v3243, %v3191
        %v3248 = vmul.f32 %v3244, %v3192
        %v3249 = vmul.f32 %v3245, %v3193
        %v3250 = vmul.f32 %v3246, %v3194
        %v3251 = vmul.f32 %v3247, 1.442695
        %v3252 = vpow.pop %v3251
        %v3253 = vmul.f32 %v3248, 1.442695
        %v3254 = vpow.pop %v3253
        %v3255 = vmul.f32 %v3249, 1.442695
        %v3256 = vpow.pop %v3255
        %v3257 = vmul.f32 %v3250, 1.442695
        %v3258 = vpow.pop %v3257
        %v3259 = vmul.f32 %v3239, %v3252
        %v3260 = vmul.f32 %v3240, %v3254
        %v3261 = vmul.f32 %v3241, %v3256
        %v3262 = vmul.f32 %v3242, %v3258
        %v3263 = vsub.f32 1.0, %v3259
        %v3264 = vsub.f32 1.0, %v3260
        %v3265 = vsub.f32 1.0, %v3261
        %v3266 = vsub.f32 1.0, %v3262
        %vm3267 = vcmp.ge.f32.partialorder %v3187, 0.0
        %vm3268 = vcmp.ge.f32.partialorder %v3188, 0.0
        %vm3269 = vcmp.ge.f32.partialorder %v3189, 0.0
        %vm3270 = vcmp.ge.f32.partialorder %v3190, 0.0
        %v3271 = vsub.f32 0.0, %v3263
        %v3272 = vsub.f32 0.0, %v3264
        %v3273 = vsub.f32 0.0, %v3265
        %v3274 = vsub.f32 0.0, %v3266
        %v3275 = vsel %vm3267, %v3263, %v3271
        %v3276 = vsel %vm3268, %v3264, %v3272
        %v3277 = vsel %vm3269, %v3265, %v3273
        %v3278 = vsel %vm3270, %v3266, %v3274
        %v3279 = vadd.f32 %v3275, 1.0
        %v3280 = vadd.f32 %v3276, 1.0
        %v3281 = vadd.f32 %v3277, 1.0
        %v3282 = vadd.f32 %v3278, 1.0
        %v3283 = vmul.f32 %v3183, %v3279
        %v3284 = vmul.f32 %v3184, %v3280
        %v3285 = vmul.f32 %v3185, %v3281
        %v3286 = vmul.f32 %v3186, %v3282
        %v3287 = vpack.c.bf16 %v3284, %v3283
        %v3288 = vpack.c.bf16 %v3286, %v3285
        %v3289 = vld [vmem:[%s1960] sm:$0xf]
        %v3290 = vld [vmem:[%s1960 + $0x4] sm:$0xf]
        %v3291 = vld [vmem:[%s1960 + $0x8] sm:$0xf]
        %v3292 = vld [vmem:[%s1960 + $0xc] sm:$0xf]
        %v3297 = vunpack.c.l.b16 %v3289
        %v3298 = vunpack.c.l.b16 %v3290
        %v3299 = vunpack.c.l.b16 %v3291
        %v3300 = vunpack.c.l.b16 %v3292
        %v3301 = vpack.c.b16 %v3298, %v3297
        %v3302 = vpack.c.b16 %v3300, %v3299
        %v3304 = vsel %vm656, %v3301, 0
        %v3307 = vsel %vm656, %v3302, 0
        %3309 = vmatprep.subr.bf16.mxu0 0
        %3310 = vmatpush1.bf16.msra.mxu0 %v3287
        %3311 = vmatprep.subr.bf16.mxu0 0
        %3312 = vmatpush1.bf16.msra.mxu0 %v3288
        %3313 = vmatprep.subr.bf16.mxu0 0
        %3314 = vmatpush1.bf16.msra.mxu0 0
        %3315 = vmatprep.subr.bf16.mxu0 0
        %3316 = vmatpush1.bf16.msra.mxu0 0
        %3317 = vmatprep.subr.bf16.mxu0 0
        %3318 = vmatpush1.bf16.msra.mxu0 0
        %3319 = vmatprep.subr.bf16.mxu0 0
        %3320 = vmatpush1.bf16.msra.mxu0 0
        %3321 = vmatprep.subr.bf16.mxu0 0
        %3322 = vmatpush1.bf16.msra.mxu0 0
        %3323 = vmatprep.subr.bf16.mxu0 0
        %3324 = vmatpush1.bf16.msra.mxu0 0
        %3325 = vmatprep.subr.bf16.mxu0 0
        %3326 = vmatpush1.bf16.msra.mxu0 0
        %3327 = vmatprep.subr.bf16.mxu0 0
        %3328 = vmatpush1.bf16.msra.mxu0 0
        %3329 = vmatprep.subr.bf16.mxu0 0
        %3330 = vmatpush1.bf16.msra.mxu0 0
        %3331 = vmatprep.subr.bf16.mxu0 0
        %3332 = vmatpush1.bf16.msra.mxu0 0
        %3333 = vmatprep.subr.bf16.mxu0 0
        %3334 = vmatpush1.bf16.msra.mxu0 0
        %3335 = vmatprep.subr.bf16.mxu0 0
        %3336 = vmatpush1.bf16.msra.mxu0 0
        %3337 = vmatprep.subr.bf16.mxu0 0
        %3338 = vmatpush1.bf16.msra.mxu0 0
        %3339 = vmatprep.subr.bf16.mxu0 0
        %3340 = vmatpush1.bf16.msra.mxu0 0
        %3341 = vmatprep.mubr.bf16.mxu0 0
        %3342 = vmatmul.mubr.bf16.gmra.mrb[0].mxu0 %v3304
        %v3343 = vpop.f32.mrb[0].mxu0
        %v3344 = vadd.f32 0.0, %v3343
        %v3345 = vpop.f32.mrb[0].mxu0
        %v3346 = vpop.f32.mrb[0].mxu0
        %v3347 = vadd.f32 0.0, %v3346
        %v3348 = vpop.f32.mrb[0].mxu0
        %3349 = vmatprep.mubr.bf16.mxu0 0
        %3350 = vmatmul.mubr.bf16.gmra.mrb[0].mxu0 %v3307
        %v3351 = vpop.f32.mrb[0].mxu0
        %v3352 = vadd.f32 0.0, %v3351
        %v3353 = vpop.f32.mrb[0].mxu0
        %v3354 = vpop.f32.mrb[0].mxu0
        %v3355 = vadd.f32 0.0, %v3354
        %v3356 = vpop.f32.mrb[0].mxu0
        %3357 = vdwg.mxu0
        %v3358 = vadd.f32 %v3110, %v3344
        %v3359 = vadd.f32 %v3111, %v3347
        %v3360 = vadd.f32 %v3112, %v3352
        %v3361 = vadd.f32 %v3113, %v3355
        %v3362 = vld [vmem:[%s2034] sm:$0xf]
        %v3363 = vld [vmem:[%s2034 + $0x4] sm:$0xf]
        %v3364 = vld [vmem:[%s2034 + $0x8] sm:$0xf]
        %v3365 = vld [vmem:[%s2034 + $0xc] sm:$0xf]
        %v3370 = vunpack.c.l.b16 %v3362
        %v3371 = vunpack.c.l.b16 %v3363
        %v3372 = vunpack.c.l.b16 %v3364
        %v3373 = vunpack.c.l.b16 %v3365
        %v3374 = vpack.c.b16 %v3371, %v3370
        %v3375 = vpack.c.b16 %v3373, %v3372
        %v3377 = vsel %vm656, %v3374, 0
        %v3380 = vsel %vm656, %v3375, 0
        %3382 = vmatprep.subr.bf16.mxu0 0
        %3383 = vmatpush1.bf16.msra.mxu0 %v2612
        %3384 = vmatprep.subr.bf16.mxu0 0
        %3385 = vmatpush1.bf16.msra.mxu0 %v2613
        %3386 = vmatprep.subr.bf16.mxu0 0
        %3387 = vmatpush1.bf16.msra.mxu0 0
        %3388 = vmatprep.subr.bf16.mxu0 0
        %3389 = vmatpush1.bf16.msra.mxu0 0
        %3390 = vmatprep.subr.bf16.mxu0 0
        %3391 = vmatpush1.bf16.msra.mxu0 0
        %3392 = vmatprep.subr.bf16.mxu0 0
        %3393 = vmatpush1.bf16.msra.mxu0 0
        %3394 = vmatprep.subr.bf16.mxu0 0
        %3395 = vmatpush1.bf16.msra.mxu0 0
        %3396 = vmatprep.subr.bf16.mxu0 0
        %3397 = vmatpush1.bf16.msra.mxu0 0
        %3398 = vmatprep.subr.bf16.mxu0 0
        %3399 = vmatpush1.bf16.msra.mxu0 0
        %3400 = vmatprep.subr.bf16.mxu0 0
        %3401 = vmatpush1.bf16.msra.mxu0 0
        %3402 = vmatprep.subr.bf16.mxu0 0
        %3403 = vmatpush1.bf16.msra.mxu0 0
        %3404 = vmatprep.subr.bf16.mxu0 0
        %3405 = vmatpush1.bf16.msra.mxu0 0
        %3406 = vmatprep.subr.bf16.mxu0 0
        %3407 = vmatpush1.bf16.msra.mxu0 0
        %3408 = vmatprep.subr.bf16.mxu0 0
        %3409 = vmatpush1.bf16.msra.mxu0 0
        %3410 = vmatprep.subr.bf16.mxu0 0
        %3411 = vmatpush1.bf16.msra.mxu0 0
        %3412 = vmatprep.subr.bf16.mxu0 0
        %3413 = vmatpush1.bf16.msra.mxu0 0
        %3414 = vmatprep.mubr.bf16.mxu0 0
        %3415 = vmatmul.mubr.bf16.gmra.mrb[0].mxu0 %v3377
        %v3416 = vpop.f32.mrb[0].mxu0
        %v3417 = vadd.f32 %v2042, %v3416
        %v3418 = vpop.f32.mrb[0].mxu0
        %v3419 = vpop.f32.mrb[0].mxu0
        %v3420 = vadd.f32 %v2047, %v3419
        %v3421 = vpop.f32.mrb[0].mxu0
        %3422 = vmatprep.mubr.bf16.mxu0 0
        %3423 = vmatmul.mubr.bf16.gmra.mrb[0].mxu0 %v3380
        %v3424 = vpop.f32.mrb[0].mxu0
        %v3425 = vadd.f32 %v2052, %v3424
        %v3426 = vpop.f32.mrb[0].mxu0
        %v3427 = vpop.f32.mrb[0].mxu0
        %v3428 = vadd.f32 %v2057, %v3427
        %v3429 = vpop.f32.mrb[0].mxu0
        %3430 = vdwg.mxu0
        %v3431 = vmul.f32 %v3417, 0.5
        %v3432 = vmul.f32 %v3420, 0.5
        %v3433 = vmul.f32 %v3425, 0.5
        %v3434 = vmul.f32 %v3428, 0.5
        %v3435 = vmul.f32 %v3417, 0.70710677
        %v3436 = vmul.f32 %v3420, 0.70710677
        %v3437 = vmul.f32 %v3425, 0.70710677
        %v3438 = vmul.f32 %v3428, 0.70710677
        %v3439 = vand.u32 2147483647, %v3435
        %v3440 = vand.u32 2147483647, %v3436
        %v3441 = vand.u32 2147483647, %v3437
        %v3442 = vand.u32 2147483647, %v3438
        %v3443 = vmul.f32 %v3439, 0.3275911
        %v3444 = vmul.f32 %v3440, 0.3275911
        %v3445 = vmul.f32 %v3441, 0.3275911
        %v3446 = vmul.f32 %v3442, 0.3275911
        %v3447 = vadd.f32 %v3443, 1.0
        %v3448 = vadd.f32 %v3444, 1.0
        %v3449 = vadd.f32 %v3445, 1.0
        %v3450 = vadd.f32 %v3446, 1.0
        %v3451 = vrcp.pop %v3447
        %v3452 = vrcp.pop %v3448
        %v3453 = vrcp.pop %v3449
        %v3454 = vrcp.pop %v3450
        %v3455 = vmul.f32 %v3451, 1.0614054
        %v3456 = vmul.f32 %v3452, 1.0614054
        %v3457 = vmul.f32 %v3453, 1.0614054
        %v3458 = vmul.f32 %v3454, 1.0614054
        %v3459 = vadd.f32 %v3455, -1.4531521
        %v3460 = vadd.f32 %v3456, -1.4531521
        %v3461 = vadd.f32 %v3457, -1.4531521
        %v3462 = vadd.f32 %v3458, -1.4531521
        %v3463 = vmul.f32 %v3451, %v3459
        %v3464 = vmul.f32 %v3452, %v3460
        %v3465 = vmul.f32 %v3453, %v3461
        %v3466 = vmul.f32 %v3454, %v3462
        %v3467 = vadd.f32 %v3463, 1.4214138
        %v3468 = vadd.f32 %v3464, 1.4214138
        %v3469 = vadd.f32 %v3465, 1.4214138
        %v3470 = vadd.f32 %v3466, 1.4214138
        %v3471 = vmul.f32 %v3451, %v3467
        %v3472 = vmul.f32 %v3452, %v3468
        %v3473 = vmul.f32 %v3453, %v3469
        %v3474 = vmul.f32 %v3454, %v3470
        %v3475 = vadd.f32 %v3471, -0.28449672
        %v3476 = vadd.f32 %v3472, -0.28449672
        %v3477 = vadd.f32 %v3473, -0.28449672
        %v3478 = vadd.f32 %v3474, -0.28449672
        %v3479 = vmul.f32 %v3451, %v3475
        %v3480 = vmul.f32 %v3452, %v3476
        %v3481 = vmul.f32 %v3453, %v3477
        %v3482 = vmul.f32 %v3454, %v3478
        %v3483 = vadd.f32 %v3479, 0.2548296
        %v3484 = vadd.f32 %v3480, 0.2548296
        %v3485 = vadd.f32 %v3481, 0.2548296
        %v3486 = vadd.f32 %v3482, 0.2548296
        %v3487 = vmul.f32 %v3451, %v3483
        %v3488 = vmul.f32 %v3452, %v3484
        %v3489 = vmul.f32 %v3453, %v3485
        %v3490 = vmul.f32 %v3454, %v3486
        %v3491 = vsub.f32 0.0, %v3439
        %v3492 = vsub.f32 0.0, %v3440
        %v3493 = vsub.f32 0.0, %v3441
        %v3494 = vsub.f32 0.0, %v3442
        %v3495 = vmul.f32 %v3491, %v3439
        %v3496 = vmul.f32 %v3492, %v3440
        %v3497 = vmul.f32 %v3493, %v3441
        %v3498 = vmul.f32 %v3494, %v3442
        %v3499 = vmul.f32 %v3495, 1.442695
        %v3500 = vpow.pop %v3499
        %v3501 = vmul.f32 %v3496, 1.442695
        %v3502 = vpow.pop %v3501
        %v3503 = vmul.f32 %v3497, 1.442695
        %v3504 = vpow.pop %v3503
        %v3505 = vmul.f32 %v3498, 1.442695
        %v3506 = vpow.pop %v3505
        %v3507 = vmul.f32 %v3487, %v3500
        %v3508 = vmul.f32 %v3488, %v3502
        %v3509 = vmul.f32 %v3489, %v3504
        %v3510 = vmul.f32 %v3490, %v3506
        %v3511 = vsub.f32 1.0, %v3507
        %v3512 = vsub.f32 1.0, %v3508
        %v3513 = vsub.f32 1.0, %v3509
        %v3514 = vsub.f32 1.0, %v3510
        %vm3515 = vcmp.ge.f32.partialorder %v3435, 0.0
        %vm3516 = vcmp.ge.f32.partialorder %v3436, 0.0
        %vm3517 = vcmp.ge.f32.partialorder %v3437, 0.0
        %vm3518 = vcmp.ge.f32.partialorder %v3438, 0.0
        %v3519 = vsub.f32 0.0, %v3511
        %v3520 = vsub.f32 0.0, %v3512
        %v3521 = vsub.f32 0.0, %v3513
        %v3522 = vsub.f32 0.0, %v3514
        %v3523 = vsel %vm3515, %v3511, %v3519
        %v3524 = vsel %vm3516, %v3512, %v3520
        %v3525 = vsel %vm3517, %v3513, %v3521
        %v3526 = vsel %vm3518, %v3514, %v3522
        %v3527 = vadd.f32 %v3523, 1.0
        %v3528 = vadd.f32 %v3524, 1.0
        %v3529 = vadd.f32 %v3525, 1.0
        %v3530 = vadd.f32 %v3526, 1.0
        %v3531 = vmul.f32 %v3431, %v3527
        %v3532 = vmul.f32 %v3432, %v3528
        %v3533 = vmul.f32 %v3433, %v3529
        %v3534 = vmul.f32 %v3434, %v3530
        %v3535 = vpack.c.bf16 %v3532, %v3531
        %v3536 = vpack.c.bf16 %v3534, %v3533
        %v3537 = vld [vmem:[%s2230] sm:$0xf]
        %v3538 = vld [vmem:[%s2230 + $0x4] sm:$0xf]
        %v3539 = vld [vmem:[%s2230 + $0x8] sm:$0xf]
        %v3540 = vld [vmem:[%s2230 + $0xc] sm:$0xf]
        %v3545 = vunpack.c.l.b16 %v3537
        %v3546 = vunpack.c.l.b16 %v3538
        %v3547 = vunpack.c.l.b16 %v3539
        %v3548 = vunpack.c.l.b16 %v3540
        %v3549 = vpack.c.b16 %v3546, %v3545
        %v3550 = vpack.c.b16 %v3548, %v3547
        %v3552 = vsel %vm656, %v3549, 0
        %v3555 = vsel %vm656, %v3550, 0
        %3557 = vmatprep.subr.bf16.mxu0 0
        %3558 = vmatpush1.bf16.msra.mxu0 %v3535
        %3559 = vmatprep.subr.bf16.mxu0 0
        %3560 = vmatpush1.bf16.msra.mxu0 %v3536
        %3561 = vmatprep.subr.bf16.mxu0 0
        %3562 = vmatpush1.bf16.msra.mxu0 0
        %3563 = vmatprep.subr.bf16.mxu0 0
        %3564 = vmatpush1.bf16.msra.mxu0 0
        %3565 = vmatprep.subr.bf16.mxu0 0
        %3566 = vmatpush1.bf16.msra.mxu0 0
        %3567 = vmatprep.subr.bf16.mxu0 0
        %3568 = vmatpush1.bf16.msra.mxu0 0
        %3569 = vmatprep.subr.bf16.mxu0 0
        %3570 = vmatpush1.bf16.msra.mxu0 0
        %3571 = vmatprep.subr.bf16.mxu0 0
        %3572 = vmatpush1.bf16.msra.mxu0 0
        %3573 = vmatprep.subr.bf16.mxu0 0
        %3574 = vmatpush1.bf16.msra.mxu0 0
        %3575 = vmatprep.subr.bf16.mxu0 0
        %3576 = vmatpush1.bf16.msra.mxu0 0
        %3577 = vmatprep.subr.bf16.mxu0 0
        %3578 = vmatpush1.bf16.msra.mxu0 0
        %3579 = vmatprep.subr.bf16.mxu0 0
        %3580 = vmatpush1.bf16.msra.mxu0 0
        %3581 = vmatprep.subr.bf16.mxu0 0
        %3582 = vmatpush1.bf16.msra.mxu0 0
        %3583 = vmatprep.subr.bf16.mxu0 0
        %3584 = vmatpush1.bf16.msra.mxu0 0
        %3585 = vmatprep.subr.bf16.mxu0 0
        %3586 = vmatpush1.bf16.msra.mxu0 0
        %3587 = vmatprep.subr.bf16.mxu0 0
        %3588 = vmatpush1.bf16.msra.mxu0 0
        %3589 = vmatprep.mubr.bf16.mxu0 0
        %3590 = vmatmul.mubr.bf16.gmra.mrb[0].mxu0 %v3552
        %v3591 = vpop.f32.mrb[0].mxu0
        %v3592 = vadd.f32 0.0, %v3591
        %v3593 = vpop.f32.mrb[0].mxu0
        %v3594 = vpop.f32.mrb[0].mxu0
        %v3595 = vadd.f32 0.0, %v3594
        %v3596 = vpop.f32.mrb[0].mxu0
        %3597 = vmatprep.mubr.bf16.mxu0 0
        %3598 = vmatmul.mubr.bf16.gmra.mrb[0].mxu0 %v3555
        %v3599 = vpop.f32.mrb[0].mxu0
        %v3600 = vadd.f32 0.0, %v3599
        %v3601 = vpop.f32.mrb[0].mxu0
        %v3602 = vpop.f32.mrb[0].mxu0
        %v3603 = vadd.f32 0.0, %v3602
        %v3604 = vpop.f32.mrb[0].mxu0
        %3605 = vdwg.mxu0
        %v3606 = vadd.f32 %v3358, %v3592
        %v3607 = vadd.f32 %v3359, %v3595
        %v3608 = vadd.f32 %v3360, %v3600
        %v3609 = vadd.f32 %v3361, %v3603
        %s3610 = scalar_lea.vmem %s461, 32 [#allocation9]
        %3611 = vst [vmem:[%s3610] sm:$0xff] %v3606
        %3612 = vst [vmem:[%s3610 + $0x8] sm:$0xff] %v3607
        %3613 = vst [vmem:[%s3610 + $0x10] sm:$0xff] %v3608
        %3614 = vst [vmem:[%s3610 + $0x18] sm:$0xff] %v3609
        %s3615 = sand.u32 %s270, 1
        %s3616 = scalar_lea.sflag [#allocation8], %s3615
        %s3617 = sand.u32 %s270, 1
        %s3618 = smul.addr %s3617, 64
        %s3619 = scalar_lea.vmem [#allocation9], %s3618
        // Predicated region
        $region107: #{tpu_custom_call.1} parent=97 // pred_check
          %p3620 = pneg %p280
        $region108: #{tpu_custom_call.1} parent=97 // pred_check_branch
          %3622 = sbr.rel (%p3620) target = $region110
        $region109: #{tpu_custom_call.1} parent=97 // pred_region
          %s3624 = ssub.s32 1024, 1024
          %3625 = vsyncadd %s3616, %s3624
          %s3626 = smul.addr %s26, 128
          %s3627 = scalar_lea.hbm %s11, %s3626
          %s3628 = sshll.u32 %s3619, 4
          %s3629 = int_to_ptr.vmem [resolvable:$true] %s3628
          %3634 = dma.vmem_to_hbm [thread:$0]  %s3629, 1024, %s3627, %s3616, 128, 512, 8
        $region110: #{tpu_custom_call.1} parent=97 // pred_fallthru
          _
      $region98: #{tpu_custom_call.1} parent=5 // pred_fallthru
        _
      %p3635 = scmp.le.s32.totalorder 2, %s21
      // Predicated region
      $region111: #{tpu_custom_call.1} parent=5 // pred_check
        %p3636 = pneg %p3635
      $region112: #{tpu_custom_call.1} parent=5 // pred_check_branch
        %3638 = sbr.rel (%p3636) target = $region114
      $region113: #{tpu_custom_call.1} parent=5 // pred_region
        %s3639 = ssub.s32 %s21, 2
        // Predicated region
        $region115: #{tpu_custom_call.1} parent=113 // pred_check
          %p3640 = pneg %p286
        $region116: #{tpu_custom_call.1} parent=113 // pred_check_branch
          %3642 = sbr.rel (%p3640) target = $region118
        $region117: #{tpu_custom_call.1} parent=113 // pred_region
          %s3643 = sand.u32 %s271, 1
          %s3644 = scalar_lea.sflag [#allocation8], %s3643
          %s3645 = sand.u32 %s271, 1
          %s3646 = smul.addr %s3645, 64
          %s3647 = scalar_lea.vmem [#allocation9], %s3646
          %3648 = dma.done %s3644, 1024
        $region118: #{tpu_custom_call.1} parent=113 // pred_fallthru
          _
      $region114: #{tpu_custom_call.1} parent=5 // pred_fallthru
        _
    $region6: #{tpu_custom_call.1} parent=1 // loop_footer
      %s25 = sadd.s32 1, %s21
    $region7: #{tpu_custom_call.1} parent=1 // loop_footer_branch
      %20 = sbr.rel target = $region3
    $region8: #{tpu_custom_call.1} parent=1 // loop_exit
      _
    %3649 = vsyncpa [#allocation7], 1
    %s3650 = scalar_lea.sflag [#allocation7], 1
    %3651 = vsyncpa %s3650, 1
    %3652 = vsyncpa [#allocation8], 1
    %s3653 = scalar_lea.sflag [#allocation8], 1
    %3654 = vsyncpa %s3653, 1

</llo_original>
